<compile_context>
chip_gen: v7x
topology: tpu7x:2x2x1
jax: 0.10.0
libtpu: 0.0.40
codegen_flags: <defaults>
</compile_context>

<pallas_src>
import functools

import jax
import jax.numpy as jnp
import numpy as np
from jax.experimental import pallas as pl
from jax.experimental.pallas import tpu as pltpu


# ----------------------------------------------------------------------------
# Fused Pallas kernel: cat([x2, x1]) -> conv3x3+BN+ReLU -> conv3x3+BN+ReLU
# ----------------------------------------------------------------------------
def _up_double_conv_kernel(x2_ref, x1_ref, w1_ref, s1_ref, b1_ref,
                           w2_ref, s2_ref, b2_ref, o_ref, xpad2_ref,
                           *, NB, S, PAD, H, W):
    # x2_ref : (C2, NB*S) bf16   skip connection, guard-banded flat layout
    # x1_ref : (C1, NB*S) bf16   upsampled+padded features, same layout
    # w1_ref : (9, Cmid, Cin) bf16   tap-major conv1 weights (k = ky*3+kx)
    # w2_ref : (9, Cout, Cmid) bf16  tap-major conv2 weights
    # s*/b*  : (C, 1) f32        folded BatchNorm scale / bias
    # o_ref  : (NB, Cout, HW) bf16
    # xpad2  : (Cmid, NB*S) bf16 VMEM staging buffer for the intermediate act.
    #
    # Layout: image n occupies lanes [n*S, (n+1)*S); its HW valid pixels sit at
    # [n*S+PAD, n*S+PAD+HW) with >= W+1 zero lanes on both sides, so a single
    # static lane shift per conv tap is valid for the whole batch at once.
    HW = H * W
    Lacc = (NB - 1) * S + HW          # accumulator lane width (covers all images)
    C2 = x2_ref.shape[0]
    Cmid = xpad2_ref.shape[0]

    # In-kernel horizontal-border masks (no extra DMAs). Output lane q sits at
    # offset (q % S) inside its image; column index = that offset % W.
    lane = jax.lax.broadcasted_iota(jnp.int32, (1, Lacc), 1)
    col = (lane % S) % W
    mask_l = (col != 0).astype(jnp.bfloat16)       # kills dx = -1 row wraparound
    mask_r = (col != W - 1).astype(jnp.bfloat16)   # kills dx = +1 row wraparound

    def conv3x3_acc(groups, w_ref):
        """3x3 'same' conv as 9 accumulating MXU matmuls from shifted views.

        groups: list of (src_ref, weight_channel_offset) — torch.cat along the
        channel dim is free: each input group uses its own slice of the tap
        weight tile, no concatenated activation is ever materialized.
        """
        Co = w_ref.shape[1]
        acc = jnp.zeros((Co, Lacc), jnp.float32)
        k = 0
        for dy in (-1, 0, 1):
            for dx in (-1, 0, 1):
                start = PAD + dy * W + dx             # static lane offset
                wk = w_ref[k]                         # (Co, Cin_total) bf16
                for src_ref, coff in groups:
                    c = src_ref.shape[0]
                    t = src_ref[:, start:start + Lacc]    # (c, Lacc) bf16
                    if dx == -1:
                        t = t * mask_l
                    elif dx == 1:
                        t = t * mask_r
                    acc = acc + jnp.dot(wk[:, coff:coff + c], t,
                                        preferred_element_type=jnp.float32)
                k += 1
        return acc

    # ---- layer 1: conv3x3(cat([x2, x1])) -> BN -> ReLU ----------------------
    y = conv3x3_acc([(x2_ref, 0), (x1_ref, C2)], w1_ref)        # (Cmid, Lacc) f32
    y = jnp.maximum(y * s1_ref[...] + b1_ref[...], 0.0).astype(jnp.bfloat16)

    # ---- stage intermediate in VMEM with per-image guard bands --------------
    # Only the pad/guard lanes are zeroed; the image centers are fully
    # overwritten with the valid slices of y (guard lanes of y hold conv
    # garbage and must never land in xpad2).
    xpad2_ref[:, 0:PAD] = jnp.zeros((Cmid, PAD), jnp.bfloat16)
    for n in range(NB):
        lo = n * S + PAD + HW
        hi = min((n + 1) * S + PAD, NB * S)
        xpad2_ref[:, lo:hi] = jnp.zeros((Cmid, hi - lo), jnp.bfloat16)
        xpad2_ref[:, n * S + PAD:n * S + PAD + HW] = y[:, n * S:n * S + HW]

    # ---- layer 2: conv3x3 -> BN -> ReLU (intermediate never leaves VMEM) ----
    z = conv3x3_acc([(xpad2_ref, 0)], w2_ref)                   # (Cout, Lacc) f32
    z = jnp.maximum(z * s2_ref[...] + b2_ref[...], 0.0)
    for n in range(NB):
        o_ref[n] = z[:, n * S:n * S + HW].astype(o_ref.dtype)   # lane-dense store


def _up_double_conv(x2g, x1g, w1r, s1, b1, w2r, s2, b2, *,
                    N, H, W, S, PAD, images_per_step=None):
    """x2g: (C2, N*S) bf16, x1g: (C1, N*S) bf16 (guard-banded flat layout).

    Returns (N, Cout, H*W) bf16.
    """
    HW = H * W
    C2 = x2g.shape[0]
    C1 = x1g.shape[0]
    Cin = w1r.shape[2]
    Cmid = w1r.shape[1]
    Cout = w2r.shape[1]
    assert Cin == C2 + C1

    NB = N if images_per_step is None else images_per_step
    assert N % NB == 0
    G = N // NB

    kernel = functools.partial(_up_double_conv_kernel,
                               NB=NB, S=S, PAD=PAD, H=H, W=W)
    return pl.pallas_call(
        kernel,
        out_shape=jax.ShapeDtypeStruct((N, Cout, HW), jnp.bfloat16),
        grid=(G,),
        in_specs=[
            pl.BlockSpec((C2, NB * S), lambda g: (0, g)),
            pl.BlockSpec((C1, NB * S), lambda g: (0, g)),
            pl.BlockSpec((9, Cmid, Cin), lambda g: (0, 0, 0)),
            pl.BlockSpec((Cmid, 1), lambda g: (0, 0)),
            pl.BlockSpec((Cmid, 1), lambda g: (0, 0)),
            pl.BlockSpec((9, Cout, Cmid), lambda g: (0, 0, 0)),
            pl.BlockSpec((Cout, 1), lambda g: (0, 0)),
            pl.BlockSpec((Cout, 1), lambda g: (0, 0)),
        ],
        out_specs=pl.BlockSpec((NB, Cout, HW), lambda g: (g, 0, 0)),
        scratch_shapes=[pltpu.VMEM((Cmid, NB * S), jnp.bfloat16)],
        compiler_params=pltpu.CompilerParams(
            dimension_semantics=("parallel",)),
    )(x2g, x1g, w1r, s1, b1, w2r, s2, b2)


# ----------------------------------------------------------------------------
# Glue: bilinear 2x upsample, align_corners=True (NCHW)
# ----------------------------------------------------------------------------
def _interp_matrix_align_corners(n_in, n_out):
    if n_in == 1:
        return jnp.ones((n_out, 1), jnp.float32)
    src = jnp.arange(n_out, dtype=jnp.float32) * ((n_in - 1) / (n_out - 1))
    lo = jnp.clip(jnp.floor(src).astype(jnp.int32), 0, n_in - 2)
    t = src - lo.astype(jnp.float32)
    j = jnp.arange(n_in, dtype=jnp.int32)
    A = (jnp.where(j[None, :] == lo[:, None], 1.0 - t[:, None], 0.0)
         + jnp.where(j[None, :] == lo[:, None] + 1, t[:, None], 0.0))
    return A                                               # (n_out, n_in)


def bilinear_upsample_2x_matmul_nchw(x):
    """Bilinear 2x upsample as two interpolation matmuls (MXU, no gathers)."""
    N, C, H, W = x.shape
    Ah = _interp_matrix_align_corners(H, 2 * H)
    Aw = _interp_matrix_align_corners(W, 2 * W)
    y = jnp.einsum('oh,nchw->ncow', Ah, x)
    y = jnp.einsum('pw,ncow->ncop', Aw, y)
    return y


def bilinear_upsample_2x_align_corners_nchw(x):
    """Gather-based reference implementation (used only for verification)."""
    N, C, H, W = x.shape
    Ho, Wo = 2 * H, 2 * W

    def coords(n_in, n_out):
        if n_in == 1:
            z = jnp.zeros((n_out,), jnp.int32)
            return z, z, jnp.zeros((n_out,), jnp.float32)
        src = jnp.arange(n_out, dtype=jnp.float32) * (n_in - 1) / (n_out - 1)
        lo = jnp.floor(src).astype(jnp.int32)
        hi = jnp.minimum(lo + 1, n_in - 1)
        t = src - lo.astype(jnp.float32)
        return lo, hi, t

    y0, y1, ty = coords(H, Ho)
    x0, x1, tx = coords(W, Wo)
    r0 = x[:, :, y0, :]
    r1 = x[:, :, y1, :]
    rows = r0 * (1.0 - ty)[None, None, :, None] + r1 * ty[None, None, :, None]
    c0 = rows[:, :, :, x0]
    c1 = rows[:, :, :, x1]
    return c0 * (1.0 - tx)[None, None, None, :] + c1 * tx[None, None, None, :]


def fold_bn(gamma, beta, mean, var, eps=1e-5):
    scale = gamma / jnp.sqrt(var + eps)
    bias = beta - mean * scale
    return scale, bias


# ----------------------------------------------------------------------------
# The `Up` forward pass (NCHW in / NCHW out, like PyTorch)
# ----------------------------------------------------------------------------
@jax.jit
def up_forward(x1_nchw, x2_nchw, params):
    x1 = x1_nchw.astype(jnp.float32)
    x2 = x2_nchw.astype(jnp.float32)

    # nn.Upsample(scale_factor=2, mode='bilinear', align_corners=True)
    x1 = bilinear_upsample_2x_matmul_nchw(x1)

    # F.pad(x1, [dx//2, dx - dx//2, dy//2, dy - dy//2])
    diff_y = x2.shape[2] - x1.shape[2]
    diff_x = x2.shape[3] - x1.shape[3]
    x1 = jnp.pad(x1, ((0, 0), (0, 0),
                      (diff_y // 2, diff_y - diff_y // 2),
                      (diff_x // 2, diff_x - diff_x // 2)))

    N, C2, H, W = x2.shape
    C1 = x1.shape[1]
    Cin = C2 + C1
    Cmid = params["w1"].shape[0]
    Cout = params["w2"].shape[0]
    HW = H * W

    # Guard-banded flat layout: per-image zero pad of PAD lanes on both sides
    # (PAD >= W+1, rounded to 128 so every in-kernel store is lane-aligned).
    PAD = ((W + 1 + 127) // 128) * 128
    S = HW + 2 * PAD

    def to_guarded(x):                     # (N, C, H, W) -> (C, N*S) bf16
        C = x.shape[1]
        xf = x.reshape(N, C, HW).astype(jnp.bfloat16)
        xf = jnp.pad(xf, ((0, 0), (0, 0), (PAD, PAD)))
        return jnp.transpose(xf, (1, 0, 2)).reshape(C, N * S)

    x2g = to_guarded(x2)
    x1g = to_guarded(x1)

    # Eval-mode BatchNorm folded into per-channel scale/bias.
    s1, b1 = fold_bn(params["bn1_gamma"], params["bn1_beta"],
                     params["bn1_mean"], params["bn1_var"])
    s2, b2 = fold_bn(params["bn2_gamma"], params["bn2_beta"],
                     params["bn2_mean"], params["bn2_var"])

    # OIHW -> (9, O, I): one (O, I) weight tile per tap, k = ky*3 + kx.
    w1r = jnp.transpose(params["w1"], (2, 3, 0, 1)).reshape(9, Cmid, Cin)
    w2r = jnp.transpose(params["w2"], (2, 3, 0, 1)).reshape(9, Cout, Cmid)

    y = _up_double_conv(x2g, x1g,
                        w1r.astype(jnp.bfloat16),
                        s1.reshape(Cmid, 1).astype(jnp.float32),
                        b1.reshape(Cmid, 1).astype(jnp.float32),
                        w2r.astype(jnp.bfloat16),
                        s2.reshape(Cout, 1).astype(jnp.float32),
                        b2.reshape(Cout, 1).astype(jnp.float32),
                        N=N, H=H, W=W, S=S, PAD=PAD)
    return y.reshape(N, Cout, H, W)


# ----------------------------------------------------------------------------
# Pure-JAX reference (mirrors the kernel's bf16-input / f32-accumulate numerics)
# ----------------------------------------------------------------------------
def double_conv_ref_nchw(x, w1, s1, b1, w2, s2, b2):
    def conv_bn_relu(h, w, s, b):
        y = jax.lax.conv_general_dilated(
            h.astype(jnp.bfloat16), w.astype(jnp.bfloat16),
            window_strides=(1, 1), padding="SAME",
            dimension_numbers=("NCHW", "OIHW", "NCHW"),
            preferred_element_type=jnp.float32)
        return jnp.maximum(y * s[None, :, None, None] + b[None, :, None, None], 0.0)

    h = conv_bn_relu(x, w1, s1, b1)
    return conv_bn_relu(h, w2, s2, b2)


if __name__ == "__main__":
    # Up(in_channels=8, out_channels=8, bilinear=True)
    #   x1: features from below  (N, in_ch//2, H/2, W/2)
    #   x2: skip connection      (N, in_ch//2, H,   W)
    N = 2
    in_channels = 8
    out_channels = 8
    mid_channels = in_channels // 2      # DoubleConv mid = in_channels // 2
    H, W = 16, 16

    key = jax.random.PRNGKey(0)
    ks = jax.random.split(key, 10)

    x1 = jax.random.normal(ks[0], (N, in_channels // 2, H // 2, W // 2), jnp.float32)
    x2 = jax.random.normal(ks[1], (N, in_channels // 2, H, W), jnp.float32)

    params = {
        # PyTorch conv weight layout: OIHW, bias=False.
        "w1": 0.1 * jax.random.normal(ks[2], (mid_channels, in_channels, 3, 3), jnp.float32),
        "w2": 0.1 * jax.random.normal(ks[3], (out_channels, mid_channels, 3, 3), jnp.float32),
        "bn1_gamma": 1.0 + 0.1 * jax.random.normal(ks[4], (mid_channels,), jnp.float32),
        "bn1_beta": 0.1 * jax.random.normal(ks[5], (mid_channels,), jnp.float32),
        "bn1_mean": 0.05 * jnp.arange(mid_channels, dtype=jnp.float32),
        "bn1_var": 0.5 + jax.random.uniform(ks[6], (mid_channels,), jnp.float32),
        "bn2_gamma": 1.0 + 0.1 * jax.random.normal(ks[7], (out_channels,), jnp.float32),
        "bn2_beta": 0.1 * jax.random.normal(ks[8], (out_channels,), jnp.float32),
        "bn2_mean": 0.05 * jnp.arange(out_channels, dtype=jnp.float32),
        "bn2_var": 0.5 + jax.random.uniform(ks[9], (out_channels,), jnp.float32),
    }

    out = jax.block_until_ready(up_forward(x1, x2, params))
    assert out.shape == (N, out_channels, H, W), out.shape

    # Reference: gather-based upsample + pad + concat in plain JAX, conv via lax.conv.
    x1u = bilinear_upsample_2x_align_corners_nchw(x1)
    dyy = x2.shape[2] - x1u.shape[2]
    dxx = x2.shape[3] - x1u.shape[3]
    x1u = jnp.pad(x1u, ((0, 0), (0, 0),
                        (dyy // 2, dyy - dyy // 2),
                        (dxx // 2, dxx - dxx // 2)))
    xcat = jnp.concatenate([x2, x1u], axis=1)
    s1, b1 = fold_bn(params["bn1_gamma"], params["bn1_beta"],
                     params["bn1_mean"], params["bn1_var"])
    s2, b2 = fold_bn(params["bn2_gamma"], params["bn2_beta"],
                     params["bn2_mean"], params["bn2_var"])
    ref = double_conv_ref_nchw(xcat, params["w1"], s1, b1, params["w2"], s2, b2)

    np.testing.assert_allclose(np.asarray(out.astype(jnp.float32)), np.asarray(ref),
                               rtol=2e-2, atol=2e-2)

    print("KERNEL_OK")
</pallas_src>

<mosaic_0001>
module attributes {stable_mosaic.version = 11 : i64} {
  func.func @_up_double_conv_kernel(%arg0: i32, %arg1: memref<4x1024xbf16, #tpu.memory_space<vmem>>, %arg2: memref<4x1024xbf16, #tpu.memory_space<vmem>>, %arg3: memref<9x4x8xbf16, #tpu.memory_space<vmem>>, %arg4: memref<4x1xf32, #tpu.memory_space<vmem>>, %arg5: memref<4x1xf32, #tpu.memory_space<vmem>>, %arg6: memref<9x8x4xbf16, #tpu.memory_space<vmem>>, %arg7: memref<8x1xf32, #tpu.memory_space<vmem>>, %arg8: memref<8x1xf32, #tpu.memory_space<vmem>>, %arg9: memref<2x8x256xbf16, #tpu.memory_space<vmem>>, %arg10: memref<4x1024xbf16, #tpu.memory_space<vmem>>) attributes {dimension_semantics = [#tpu.dimension_semantics<parallel>], iteration_bounds = array<i64: 1>, scalar_prefetch = 0 : i64, scratch_operands = 1 : i64, tpu.core_type = #tpu.core_type<tc>, window_params = [{transform_indices = @transform_0, window_bounds = array<i64: 4, 1024>}, {transform_indices = @transform_1, window_bounds = array<i64: 4, 1024>}, {pipeline_mode = #tpu.pipeline_mode<synchronous>, transform_indices = @transform_2, window_bounds = array<i64: 9, 4, 8>}, {pipeline_mode = #tpu.pipeline_mode<synchronous>, transform_indices = @transform_3, window_bounds = array<i64: 4, 1>}, {pipeline_mode = #tpu.pipeline_mode<synchronous>, transform_indices = @transform_4, window_bounds = array<i64: 4, 1>}, {pipeline_mode = #tpu.pipeline_mode<synchronous>, transform_indices = @transform_5, window_bounds = array<i64: 9, 8, 4>}, {pipeline_mode = #tpu.pipeline_mode<synchronous>, transform_indices = @transform_6, window_bounds = array<i64: 8, 1>}, {pipeline_mode = #tpu.pipeline_mode<synchronous>, transform_indices = @transform_7, window_bounds = array<i64: 8, 1>}, {transform_indices = @transform_8, window_bounds = array<i64: 2, 8, 256>}]} {
    %0 = tpu.iota {dimensions = array<i32: 1>} : vector<1x768xi32>
    %c512_i32 = arith.constant 512 : i32
    %c0_i32 = arith.constant 0 : i32
    %1 = arith.cmpi eq, %c512_i32, %c0_i32 : i32
    %c1_i32 = arith.constant 1 : i32
    %2 = arith.select %1, %c1_i32, %c512_i32 : i32
    %3 = vector.broadcast %2 : i32 to vector<1x768xi32>
    %4 = arith.remsi %0, %3 : vector<1x768xi32>
    %c0_i32_0 = arith.constant 0 : i32
    %5 = vector.broadcast %c0_i32_0 : i32 to vector<1x768xi32>
    %6 = arith.cmpi ne, %4, %5 : vector<1x768xi32>
    %c0_i32_1 = arith.constant 0 : i32
    %7 = vector.broadcast %c0_i32_1 : i32 to vector<1x768xi32>
    %8 = arith.cmpi slt, %4, %7 : vector<1x768xi32>
    %c0_i32_2 = arith.constant 0 : i32
    %9 = arith.cmpi slt, %2, %c0_i32_2 : i32
    %10 = vector.broadcast %9 : i1 to vector<1x768xi1>
    %11 = vector.broadcast %10 : vector<1x768xi1> to vector<1x768xi1>
    %12 = arith.xori %8, %11 : vector<1x768xi1>
    %13 = arith.andi %12, %6 : vector<1x768xi1>
    %14 = vector.broadcast %2 : i32 to vector<1x768xi32>
    %15 = arith.addi %4, %14 : vector<1x768xi32>
    %16 = arith.select %13, %15, %4 : vector<1x768xi1>, vector<1x768xi32>
    %c16_i32 = arith.constant 16 : i32
    %c0_i32_3 = arith.constant 0 : i32
    %17 = arith.cmpi eq, %c16_i32, %c0_i32_3 : i32
    %c1_i32_4 = arith.constant 1 : i32
    %18 = arith.select %17, %c1_i32_4, %c16_i32 : i32
    %19 = vector.broadcast %18 : i32 to vector<1x768xi32>
    %20 = arith.remsi %16, %19 : vector<1x768xi32>
    %c0_i32_5 = arith.constant 0 : i32
    %21 = vector.broadcast %c0_i32_5 : i32 to vector<1x768xi32>
    %22 = arith.cmpi ne, %20, %21 : vector<1x768xi32>
    %c0_i32_6 = arith.constant 0 : i32
    %23 = vector.broadcast %c0_i32_6 : i32 to vector<1x768xi32>
    %24 = arith.cmpi slt, %20, %23 : vector<1x768xi32>
    %c0_i32_7 = arith.constant 0 : i32
    %25 = arith.cmpi slt, %18, %c0_i32_7 : i32
    %26 = vector.broadcast %25 : i1 to vector<1x768xi1>
    %27 = vector.broadcast %26 : vector<1x768xi1> to vector<1x768xi1>
    %28 = arith.xori %24, %27 : vector<1x768xi1>
    %29 = arith.andi %28, %22 : vector<1x768xi1>
    %30 = vector.broadcast %18 : i32 to vector<1x768xi32>
    %31 = arith.addi %20, %30 : vector<1x768xi32>
    %32 = arith.select %29, %31, %20 : vector<1x768xi1>, vector<1x768xi32>
    %c0_i32_8 = arith.constant 0 : i32
    %33 = vector.broadcast %c0_i32_8 : i32 to vector<1x768xi32>
    %34 = arith.cmpi ne, %32, %33 : vector<1x768xi32>
    %35 = arith.extui %34 : vector<1x768xi1> to vector<1x768xi32>
    %36 = arith.sitofp %35 : vector<1x768xi32> to vector<1x768xf32>
    %37 = arith.truncf %36 : vector<1x768xf32> to vector<1x768xbf16>
    %c15_i32 = arith.constant 15 : i32
    %38 = vector.broadcast %c15_i32 : i32 to vector<1x768xi32>
    %39 = arith.cmpi ne, %32, %38 : vector<1x768xi32>
    %40 = arith.extui %39 : vector<1x768xi1> to vector<1x768xi32>
    %41 = arith.sitofp %40 : vector<1x768xi32> to vector<1x768xf32>
    %42 = arith.truncf %41 : vector<1x768xf32> to vector<1x768xbf16>
    %cst = arith.constant 0.000000e+00 : f32
    %43 = vector.broadcast %cst : f32 to vector<4x768xf32>
    %c0 = arith.constant 0 : index
    %c0_9 = arith.constant 0 : index
    %c0_10 = arith.constant 0 : index
    %44 = vector.load %arg3[%c0, %c0_9, %c0_10] : memref<9x4x8xbf16, #tpu.memory_space<vmem>>, vector<1x4x8xbf16>
    %45 = vector.shape_cast %44 : vector<1x4x8xbf16> to vector<4x8xbf16>
    %c0_11 = arith.constant 0 : index
    %c111 = arith.constant 111 : index
    %46 = vector.load %arg1[%c0_11, %c111] : memref<4x1024xbf16, #tpu.memory_space<vmem>>, vector<4x768xbf16>
    %47 = vector.broadcast %37 : vector<1x768xbf16> to vector<4x768xbf16>
    %48 = arith.mulf %46, %47 : vector<4x768xbf16>
    %49 = vector.extract_strided_slice %45 {offsets = [0, 0], sizes = [4, 4], strides = [1, 1]} : vector<4x8xbf16> to vector<4x4xbf16>
    %cst_12 = arith.constant dense<0.000000e+00> : vector<4x768xf32>
    %50 = tpu.matmul %49, %48, %cst_12 {dimension_numbers = #tpu.dot_dimension_numbers<[1], [0], [0], [1], [0, 0, 1, 1], [], []>} : vector<4x4xbf16>, vector<4x768xbf16>, vector<4x768xf32> -> vector<4x768xf32>
    %51 = arith.addf %43, %50 : vector<4x768xf32>
    %c0_13 = arith.constant 0 : index
    %c111_14 = arith.constant 111 : index
    %52 = vector.load %arg2[%c0_13, %c111_14] : memref<4x1024xbf16, #tpu.memory_space<vmem>>, vector<4x768xbf16>
    %53 = vector.broadcast %37 : vector<1x768xbf16> to vector<4x768xbf16>
    %54 = arith.mulf %52, %53 : vector<4x768xbf16>
    %55 = vector.extract_strided_slice %45 {offsets = [0, 4], sizes = [4, 4], strides = [1, 1]} : vector<4x8xbf16> to vector<4x4xbf16>
    %cst_15 = arith.constant dense<0.000000e+00> : vector<4x768xf32>
    %56 = tpu.matmul %55, %54, %cst_15 {dimension_numbers = #tpu.dot_dimension_numbers<[1], [0], [0], [1], [0, 0, 1, 1], [], []>} : vector<4x4xbf16>, vector<4x768xbf16>, vector<4x768xf32> -> vector<4x768xf32>
    %57 = arith.addf %51, %56 : vector<4x768xf32>
    %c1 = arith.constant 1 : index
    %c0_16 = arith.constant 0 : index
    %c0_17 = arith.constant 0 : index
    %58 = vector.load %arg3[%c1, %c0_16, %c0_17] : memref<9x4x8xbf16, #tpu.memory_space<vmem>>, vector<1x4x8xbf16>
    %59 = vector.shape_cast %58 : vector<1x4x8xbf16> to vector<4x8xbf16>
    %c0_18 = arith.constant 0 : index
    %c112 = arith.constant 112 : index
    %60 = vector.load %arg1[%c0_18, %c112] : memref<4x1024xbf16, #tpu.memory_space<vmem>>, vector<4x768xbf16>
    %61 = vector.extract_strided_slice %59 {offsets = [0, 0], sizes = [4, 4], strides = [1, 1]} : vector<4x8xbf16> to vector<4x4xbf16>
    %cst_19 = arith.constant dense<0.000000e+00> : vector<4x768xf32>
    %62 = tpu.matmul %61, %60, %cst_19 {dimension_numbers = #tpu.dot_dimension_numbers<[1], [0], [0], [1], [0, 0, 1, 1], [], []>} : vector<4x4xbf16>, vector<4x768xbf16>, vector<4x768xf32> -> vector<4x768xf32>
    %63 = arith.addf %57, %62 : vector<4x768xf32>
    %c0_20 = arith.constant 0 : index
    %c112_21 = arith.constant 112 : index
    %64 = vector.load %arg2[%c0_20, %c112_21] : memref<4x1024xbf16, #tpu.memory_space<vmem>>, vector<4x768xbf16>
    %65 = vector.extract_strided_slice %59 {offsets = [0, 4], sizes = [4, 4], strides = [1, 1]} : vector<4x8xbf16> to vector<4x4xbf16>
    %cst_22 = arith.constant dense<0.000000e+00> : vector<4x768xf32>
    %66 = tpu.matmul %65, %64, %cst_22 {dimension_numbers = #tpu.dot_dimension_numbers<[1], [0], [0], [1], [0, 0, 1, 1], [], []>} : vector<4x4xbf16>, vector<4x768xbf16>, vector<4x768xf32> -> vector<4x768xf32>
    %67 = arith.addf %63, %66 : vector<4x768xf32>
    %c2 = arith.constant 2 : index
    %c0_23 = arith.constant 0 : index
    %c0_24 = arith.constant 0 : index
    %68 = vector.load %arg3[%c2, %c0_23, %c0_24] : memref<9x4x8xbf16, #tpu.memory_space<vmem>>, vector<1x4x8xbf16>
    %69 = vector.shape_cast %68 : vector<1x4x8xbf16> to vector<4x8xbf16>
    %c0_25 = arith.constant 0 : index
    %c113 = arith.constant 113 : index
    %70 = vector.load %arg1[%c0_25, %c113] : memref<4x1024xbf16, #tpu.memory_space<vmem>>, vector<4x768xbf16>
    %71 = vector.broadcast %42 : vector<1x768xbf16> to vector<4x768xbf16>
    %72 = arith.mulf %70, %71 : vector<4x768xbf16>
    %73 = vector.extract_strided_slice %69 {offsets = [0, 0], sizes = [4, 4], strides = [1, 1]} : vector<4x8xbf16> to vector<4x4xbf16>
    %cst_26 = arith.constant dense<0.000000e+00> : vector<4x768xf32>
    %74 = tpu.matmul %73, %72, %cst_26 {dimension_numbers = #tpu.dot_dimension_numbers<[1], [0], [0], [1], [0, 0, 1, 1], [], []>} : vector<4x4xbf16>, vector<4x768xbf16>, vector<4x768xf32> -> vector<4x768xf32>
    %75 = arith.addf %67, %74 : vector<4x768xf32>
    %c0_27 = arith.constant 0 : index
    %c113_28 = arith.constant 113 : index
    %76 = vector.load %arg2[%c0_27, %c113_28] : memref<4x1024xbf16, #tpu.memory_space<vmem>>, vector<4x768xbf16>
    %77 = vector.broadcast %42 : vector<1x768xbf16> to vector<4x768xbf16>
    %78 = arith.mulf %76, %77 : vector<4x768xbf16>
    %79 = vector.extract_strided_slice %69 {offsets = [0, 4], sizes = [4, 4], strides = [1, 1]} : vector<4x8xbf16> to vector<4x4xbf16>
    %cst_29 = arith.constant dense<0.000000e+00> : vector<4x768xf32>
    %80 = tpu.matmul %79, %78, %cst_29 {dimension_numbers = #tpu.dot_dimension_numbers<[1], [0], [0], [1], [0, 0, 1, 1], [], []>} : vector<4x4xbf16>, vector<4x768xbf16>, vector<4x768xf32> -> vector<4x768xf32>
    %81 = arith.addf %75, %80 : vector<4x768xf32>
    %c3 = arith.constant 3 : index
    %c0_30 = arith.constant 0 : index
    %c0_31 = arith.constant 0 : index
    %82 = vector.load %arg3[%c3, %c0_30, %c0_31] : memref<9x4x8xbf16, #tpu.memory_space<vmem>>, vector<1x4x8xbf16>
    %83 = vector.shape_cast %82 : vector<1x4x8xbf16> to vector<4x8xbf16>
    %c0_32 = arith.constant 0 : index
    %c127 = arith.constant 127 : index
    %84 = vector.load %arg1[%c0_32, %c127] : memref<4x1024xbf16, #tpu.memory_space<vmem>>, vector<4x768xbf16>
    %85 = vector.broadcast %37 : vector<1x768xbf16> to vector<4x768xbf16>
    %86 = arith.mulf %84, %85 : vector<4x768xbf16>
    %87 = vector.extract_strided_slice %83 {offsets = [0, 0], sizes = [4, 4], strides = [1, 1]} : vector<4x8xbf16> to vector<4x4xbf16>
    %cst_33 = arith.constant dense<0.000000e+00> : vector<4x768xf32>
    %88 = tpu.matmul %87, %86, %cst_33 {dimension_numbers = #tpu.dot_dimension_numbers<[1], [0], [0], [1], [0, 0, 1, 1], [], []>} : vector<4x4xbf16>, vector<4x768xbf16>, vector<4x768xf32> -> vector<4x768xf32>
    %89 = arith.addf %81, %88 : vector<4x768xf32>
    %c0_34 = arith.constant 0 : index
    %c127_35 = arith.constant 127 : index
    %90 = vector.load %arg2[%c0_34, %c127_35] : memref<4x1024xbf16, #tpu.memory_space<vmem>>, vector<4x768xbf16>
    %91 = vector.broadcast %37 : vector<1x768xbf16> to vector<4x768xbf16>
    %92 = arith.mulf %90, %91 : vector<4x768xbf16>
    %93 = vector.extract_strided_slice %83 {offsets = [0, 4], sizes = [4, 4], strides = [1, 1]} : vector<4x8xbf16> to vector<4x4xbf16>
    %cst_36 = arith.constant dense<0.000000e+00> : vector<4x768xf32>
    %94 = tpu.matmul %93, %92, %cst_36 {dimension_numbers = #tpu.dot_dimension_numbers<[1], [0], [0], [1], [0, 0, 1, 1], [], []>} : vector<4x4xbf16>, vector<4x768xbf16>, vector<4x768xf32> -> vector<4x768xf32>
    %95 = arith.addf %89, %94 : vector<4x768xf32>
    %c4 = arith.constant 4 : index
    %c0_37 = arith.constant 0 : index
    %c0_38 = arith.constant 0 : index
    %96 = vector.load %arg3[%c4, %c0_37, %c0_38] : memref<9x4x8xbf16, #tpu.memory_space<vmem>>, vector<1x4x8xbf16>
    %97 = vector.shape_cast %96 : vector<1x4x8xbf16> to vector<4x8xbf16>
    %c0_39 = arith.constant 0 : index
    %c128 = arith.constant 128 : index
    %98 = vector.load %arg1[%c0_39, %c128] : memref<4x1024xbf16, #tpu.memory_space<vmem>>, vector<4x768xbf16>
    %99 = vector.extract_strided_slice %97 {offsets = [0, 0], sizes = [4, 4], strides = [1, 1]} : vector<4x8xbf16> to vector<4x4xbf16>
    %cst_40 = arith.constant dense<0.000000e+00> : vector<4x768xf32>
    %100 = tpu.matmul %99, %98, %cst_40 {dimension_numbers = #tpu.dot_dimension_numbers<[1], [0], [0], [1], [0, 0, 1, 1], [], []>} : vector<4x4xbf16>, vector<4x768xbf16>, vector<4x768xf32> -> vector<4x768xf32>
    %101 = arith.addf %95, %100 : vector<4x768xf32>
    %c0_41 = arith.constant 0 : index
    %c128_42 = arith.constant 128 : index
    %102 = vector.load %arg2[%c0_41, %c128_42] : memref<4x1024xbf16, #tpu.memory_space<vmem>>, vector<4x768xbf16>
    %103 = vector.extract_strided_slice %97 {offsets = [0, 4], sizes = [4, 4], strides = [1, 1]} : vector<4x8xbf16> to vector<4x4xbf16>
    %cst_43 = arith.constant dense<0.000000e+00> : vector<4x768xf32>
    %104 = tpu.matmul %103, %102, %cst_43 {dimension_numbers = #tpu.dot_dimension_numbers<[1], [0], [0], [1], [0, 0, 1, 1], [], []>} : vector<4x4xbf16>, vector<4x768xbf16>, vector<4x768xf32> -> vector<4x768xf32>
    %105 = arith.addf %101, %104 : vector<4x768xf32>
    %c5 = arith.constant 5 : index
    %c0_44 = arith.constant 0 : index
    %c0_45 = arith.constant 0 : index
    %106 = vector.load %arg3[%c5, %c0_44, %c0_45] : memref<9x4x8xbf16, #tpu.memory_space<vmem>>, vector<1x4x8xbf16>
    %107 = vector.shape_cast %106 : vector<1x4x8xbf16> to vector<4x8xbf16>
    %c0_46 = arith.constant 0 : index
    %c129 = arith.constant 129 : index
    %108 = vector.load %arg1[%c0_46, %c129] : memref<4x1024xbf16, #tpu.memory_space<vmem>>, vector<4x768xbf16>
    %109 = vector.broadcast %42 : vector<1x768xbf16> to vector<4x768xbf16>
    %110 = arith.mulf %108, %109 : vector<4x768xbf16>
    %111 = vector.extract_strided_slice %107 {offsets = [0, 0], sizes = [4, 4], strides = [1, 1]} : vector<4x8xbf16> to vector<4x4xbf16>
    %cst_47 = arith.constant dense<0.000000e+00> : vector<4x768xf32>
    %112 = tpu.matmul %111, %110, %cst_47 {dimension_numbers = #tpu.dot_dimension_numbers<[1], [0], [0], [1], [0, 0, 1, 1], [], []>} : vector<4x4xbf16>, vector<4x768xbf16>, vector<4x768xf32> -> vector<4x768xf32>
    %113 = arith.addf %105, %112 : vector<4x768xf32>
    %c0_48 = arith.constant 0 : index
    %c129_49 = arith.constant 129 : index
    %114 = vector.load %arg2[%c0_48, %c129_49] : memref<4x1024xbf16, #tpu.memory_space<vmem>>, vector<4x768xbf16>
    %115 = vector.broadcast %42 : vector<1x768xbf16> to vector<4x768xbf16>
    %116 = arith.mulf %114, %115 : vector<4x768xbf16>
    %117 = vector.extract_strided_slice %107 {offsets = [0, 4], sizes = [4, 4], strides = [1, 1]} : vector<4x8xbf16> to vector<4x4xbf16>
    %cst_50 = arith.constant dense<0.000000e+00> : vector<4x768xf32>
    %118 = tpu.matmul %117, %116, %cst_50 {dimension_numbers = #tpu.dot_dimension_numbers<[1], [0], [0], [1], [0, 0, 1, 1], [], []>} : vector<4x4xbf16>, vector<4x768xbf16>, vector<4x768xf32> -> vector<4x768xf32>
    %119 = arith.addf %113, %118 : vector<4x768xf32>
    %c6 = arith.constant 6 : index
    %c0_51 = arith.constant 0 : index
    %c0_52 = arith.constant 0 : index
    %120 = vector.load %arg3[%c6, %c0_51, %c0_52] : memref<9x4x8xbf16, #tpu.memory_space<vmem>>, vector<1x4x8xbf16>
    %121 = vector.shape_cast %120 : vector<1x4x8xbf16> to vector<4x8xbf16>
    %c0_53 = arith.constant 0 : index
    %c143 = arith.constant 143 : index
    %122 = vector.load %arg1[%c0_53, %c143] : memref<4x1024xbf16, #tpu.memory_space<vmem>>, vector<4x768xbf16>
    %123 = vector.broadcast %37 : vector<1x768xbf16> to vector<4x768xbf16>
    %124 = arith.mulf %122, %123 : vector<4x768xbf16>
    %125 = vector.extract_strided_slice %121 {offsets = [0, 0], sizes = [4, 4], strides = [1, 1]} : vector<4x8xbf16> to vector<4x4xbf16>
    %cst_54 = arith.constant dense<0.000000e+00> : vector<4x768xf32>
    %126 = tpu.matmul %125, %124, %cst_54 {dimension_numbers = #tpu.dot_dimension_numbers<[1], [0], [0], [1], [0, 0, 1, 1], [], []>} : vector<4x4xbf16>, vector<4x768xbf16>, vector<4x768xf32> -> vector<4x768xf32>
    %127 = arith.addf %119, %126 : vector<4x768xf32>
    %c0_55 = arith.constant 0 : index
    %c143_56 = arith.constant 143 : index
    %128 = vector.load %arg2[%c0_55, %c143_56] : memref<4x1024xbf16, #tpu.memory_space<vmem>>, vector<4x768xbf16>
    %129 = vector.broadcast %37 : vector<1x768xbf16> to vector<4x768xbf16>
    %130 = arith.mulf %128, %129 : vector<4x768xbf16>
    %131 = vector.extract_strided_slice %121 {offsets = [0, 4], sizes = [4, 4], strides = [1, 1]} : vector<4x8xbf16> to vector<4x4xbf16>
    %cst_57 = arith.constant dense<0.000000e+00> : vector<4x768xf32>
    %132 = tpu.matmul %131, %130, %cst_57 {dimension_numbers = #tpu.dot_dimension_numbers<[1], [0], [0], [1], [0, 0, 1, 1], [], []>} : vector<4x4xbf16>, vector<4x768xbf16>, vector<4x768xf32> -> vector<4x768xf32>
    %133 = arith.addf %127, %132 : vector<4x768xf32>
    %c7 = arith.constant 7 : index
    %c0_58 = arith.constant 0 : index
    %c0_59 = arith.constant 0 : index
    %134 = vector.load %arg3[%c7, %c0_58, %c0_59] : memref<9x4x8xbf16, #tpu.memory_space<vmem>>, vector<1x4x8xbf16>
    %135 = vector.shape_cast %134 : vector<1x4x8xbf16> to vector<4x8xbf16>
    %c0_60 = arith.constant 0 : index
    %c144 = arith.constant 144 : index
    %136 = vector.load %arg1[%c0_60, %c144] : memref<4x1024xbf16, #tpu.memory_space<vmem>>, vector<4x768xbf16>
    %137 = vector.extract_strided_slice %135 {offsets = [0, 0], sizes = [4, 4], strides = [1, 1]} : vector<4x8xbf16> to vector<4x4xbf16>
    %cst_61 = arith.constant dense<0.000000e+00> : vector<4x768xf32>
    %138 = tpu.matmul %137, %136, %cst_61 {dimension_numbers = #tpu.dot_dimension_numbers<[1], [0], [0], [1], [0, 0, 1, 1], [], []>} : vector<4x4xbf16>, vector<4x768xbf16>, vector<4x768xf32> -> vector<4x768xf32>
    %139 = arith.addf %133, %138 : vector<4x768xf32>
    %c0_62 = arith.constant 0 : index
    %c144_63 = arith.constant 144 : index
    %140 = vector.load %arg2[%c0_62, %c144_63] : memref<4x1024xbf16, #tpu.memory_space<vmem>>, vector<4x768xbf16>
    %141 = vector.extract_strided_slice %135 {offsets = [0, 4], sizes = [4, 4], strides = [1, 1]} : vector<4x8xbf16> to vector<4x4xbf16>
    %cst_64 = arith.constant dense<0.000000e+00> : vector<4x768xf32>
    %142 = tpu.matmul %141, %140, %cst_64 {dimension_numbers = #tpu.dot_dimension_numbers<[1], [0], [0], [1], [0, 0, 1, 1], [], []>} : vector<4x4xbf16>, vector<4x768xbf16>, vector<4x768xf32> -> vector<4x768xf32>
    %143 = arith.addf %139, %142 : vector<4x768xf32>
    %c8 = arith.constant 8 : index
    %c0_65 = arith.constant 0 : index
    %c0_66 = arith.constant 0 : index
    %144 = vector.load %arg3[%c8, %c0_65, %c0_66] : memref<9x4x8xbf16, #tpu.memory_space<vmem>>, vector<1x4x8xbf16>
    %145 = vector.shape_cast %144 : vector<1x4x8xbf16> to vector<4x8xbf16>
    %c0_67 = arith.constant 0 : index
    %c145 = arith.constant 145 : index
    %146 = vector.load %arg1[%c0_67, %c145] : memref<4x1024xbf16, #tpu.memory_space<vmem>>, vector<4x768xbf16>
    %147 = vector.broadcast %42 : vector<1x768xbf16> to vector<4x768xbf16>
    %148 = arith.mulf %146, %147 : vector<4x768xbf16>
    %149 = vector.extract_strided_slice %145 {offsets = [0, 0], sizes = [4, 4], strides = [1, 1]} : vector<4x8xbf16> to vector<4x4xbf16>
    %cst_68 = arith.constant dense<0.000000e+00> : vector<4x768xf32>
    %150 = tpu.matmul %149, %148, %cst_68 {dimension_numbers = #tpu.dot_dimension_numbers<[1], [0], [0], [1], [0, 0, 1, 1], [], []>} : vector<4x4xbf16>, vector<4x768xbf16>, vector<4x768xf32> -> vector<4x768xf32>
    %151 = arith.addf %143, %150 : vector<4x768xf32>
    %c0_69 = arith.constant 0 : index
    %c145_70 = arith.constant 145 : index
    %152 = vector.load %arg2[%c0_69, %c145_70] : memref<4x1024xbf16, #tpu.memory_space<vmem>>, vector<4x768xbf16>
    %153 = vector.broadcast %42 : vector<1x768xbf16> to vector<4x768xbf16>
    %154 = arith.mulf %152, %153 : vector<4x768xbf16>
    %155 = vector.extract_strided_slice %145 {offsets = [0, 4], sizes = [4, 4], strides = [1, 1]} : vector<4x8xbf16> to vector<4x4xbf16>
    %cst_71 = arith.constant dense<0.000000e+00> : vector<4x768xf32>
    %156 = tpu.matmul %155, %154, %cst_71 {dimension_numbers = #tpu.dot_dimension_numbers<[1], [0], [0], [1], [0, 0, 1, 1], [], []>} : vector<4x4xbf16>, vector<4x768xbf16>, vector<4x768xf32> -> vector<4x768xf32>
    %157 = arith.addf %151, %156 : vector<4x768xf32>
    %c0_72 = arith.constant 0 : index
    %c0_73 = arith.constant 0 : index
    %158 = vector.load %arg4[%c0_72, %c0_73] : memref<4x1xf32, #tpu.memory_space<vmem>>, vector<4x1xf32>
    %159 = vector.broadcast %158 : vector<4x1xf32> to vector<4x768xf32>
    %160 = arith.mulf %157, %159 : vector<4x768xf32>
    %c0_74 = arith.constant 0 : index
    %c0_75 = arith.constant 0 : index
    %161 = vector.load %arg5[%c0_74, %c0_75] : memref<4x1xf32, #tpu.memory_space<vmem>>, vector<4x1xf32>
    %162 = vector.broadcast %161 : vector<4x1xf32> to vector<4x768xf32>
    %163 = arith.addf %160, %162 : vector<4x768xf32>
    %cst_76 = arith.constant 0.000000e+00 : f32
    %164 = vector.broadcast %cst_76 : f32 to vector<4x768xf32>
    %165 = arith.maximumf %163, %164 : vector<4x768xf32>
    %166 = arith.truncf %165 : vector<4x768xf32> to vector<4x768xbf16>
    %cst_77 = arith.constant 0.000000e+00 : bf16
    %167 = vector.broadcast %cst_77 : bf16 to vector<4x128xbf16>
    %c0_78 = arith.constant 0 : index
    %c0_79 = arith.constant 0 : index
    %168 = vector.load %arg10[%c0_78, %c0_79] : memref<4x1024xbf16, #tpu.memory_space<vmem>>, vector<4x128xbf16>
    tpu.vector_store %arg10[%c0_78, %c0_79], %167 {strides = array<i32>} : memref<4x1024xbf16, #tpu.memory_space<vmem>>, vector<4x128xbf16>,
    %cst_80 = arith.constant 0.000000e+00 : bf16
    %169 = vector.broadcast %cst_80 : bf16 to vector<4x256xbf16>
    %c0_81 = arith.constant 0 : index
    %c384 = arith.constant 384 : index
    %170 = vector.load %arg10[%c0_81, %c384] : memref<4x1024xbf16, #tpu.memory_space<vmem>>, vector<4x256xbf16>
    tpu.vector_store %arg10[%c0_81, %c384], %169 {strides = array<i32>} : memref<4x1024xbf16, #tpu.memory_space<vmem>>, vector<4x256xbf16>,
    %171 = vector.extract_strided_slice %166 {offsets = [0, 0], sizes = [4, 256], strides = [1, 1]} : vector<4x768xbf16> to vector<4x256xbf16>
    %c0_82 = arith.constant 0 : index
    %c128_83 = arith.constant 128 : index
    %172 = vector.load %arg10[%c0_82, %c128_83] : memref<4x1024xbf16, #tpu.memory_space<vmem>>, vector<4x256xbf16>
    tpu.vector_store %arg10[%c0_82, %c128_83], %171 {strides = array<i32>} : memref<4x1024xbf16, #tpu.memory_space<vmem>>, vector<4x256xbf16>,
    %cst_84 = arith.constant 0.000000e+00 : bf16
    %173 = vector.broadcast %cst_84 : bf16 to vector<4x128xbf16>
    %c0_85 = arith.constant 0 : index
    %c896 = arith.constant 896 : index
    %174 = vector.load %arg10[%c0_85, %c896] : memref<4x1024xbf16, #tpu.memory_space<vmem>>, vector<4x128xbf16>
    tpu.vector_store %arg10[%c0_85, %c896], %173 {strides = array<i32>} : memref<4x1024xbf16, #tpu.memory_space<vmem>>, vector<4x128xbf16>,
    %175 = vector.extract_strided_slice %166 {offsets = [0, 512], sizes = [4, 256], strides = [1, 1]} : vector<4x768xbf16> to vector<4x256xbf16>
    %c0_86 = arith.constant 0 : index
    %c640 = arith.constant 640 : index
    %176 = vector.load %arg10[%c0_86, %c640] : memref<4x1024xbf16, #tpu.memory_space<vmem>>, vector<4x256xbf16>
    tpu.vector_store %arg10[%c0_86, %c640], %175 {strides = array<i32>} : memref<4x1024xbf16, #tpu.memory_space<vmem>>, vector<4x256xbf16>,
    %cst_87 = arith.constant 0.000000e+00 : f32
    %177 = vector.broadcast %cst_87 : f32 to vector<8x768xf32>
    %c0_88 = arith.constant 0 : index
    %c0_89 = arith.constant 0 : index
    %c0_90 = arith.constant 0 : index
    %178 = vector.load %arg6[%c0_88, %c0_89, %c0_90] : memref<9x8x4xbf16, #tpu.memory_space<vmem>>, vector<1x8x4xbf16>
    %179 = vector.shape_cast %178 : vector<1x8x4xbf16> to vector<8x4xbf16>
    %c0_91 = arith.constant 0 : index
    %c111_92 = arith.constant 111 : index
    %180 = vector.load %arg10[%c0_91, %c111_92] : memref<4x1024xbf16, #tpu.memory_space<vmem>>, vector<4x768xbf16>
    %181 = vector.broadcast %37 : vector<1x768xbf16> to vector<4x768xbf16>
    %182 = arith.mulf %180, %181 : vector<4x768xbf16>
    %cst_93 = arith.constant dense<0.000000e+00> : vector<8x768xf32>
    %183 = tpu.matmul %179, %182, %cst_93 {dimension_numbers = #tpu.dot_dimension_numbers<[1], [0], [0], [1], [0, 0, 1, 1], [], []>} : vector<8x4xbf16>, vector<4x768xbf16>, vector<8x768xf32> -> vector<8x768xf32>
    %184 = arith.addf %177, %183 : vector<8x768xf32>
    %c1_94 = arith.constant 1 : index
    %c0_95 = arith.constant 0 : index
    %c0_96 = arith.constant 0 : index
    %185 = vector.load %arg6[%c1_94, %c0_95, %c0_96] : memref<9x8x4xbf16, #tpu.memory_space<vmem>>, vector<1x8x4xbf16>
    %186 = vector.shape_cast %185 : vector<1x8x4xbf16> to vector<8x4xbf16>
    %c0_97 = arith.constant 0 : index
    %c112_98 = arith.constant 112 : index
    %187 = vector.load %arg10[%c0_97, %c112_98] : memref<4x1024xbf16, #tpu.memory_space<vmem>>, vector<4x768xbf16>
    %cst_99 = arith.constant dense<0.000000e+00> : vector<8x768xf32>
    %188 = tpu.matmul %186, %187, %cst_99 {dimension_numbers = #tpu.dot_dimension_numbers<[1], [0], [0], [1], [0, 0, 1, 1], [], []>} : vector<8x4xbf16>, vector<4x768xbf16>, vector<8x768xf32> -> vector<8x768xf32>
    %189 = arith.addf %184, %188 : vector<8x768xf32>
    %c2_100 = arith.constant 2 : index
    %c0_101 = arith.constant 0 : index
    %c0_102 = arith.constant 0 : index
    %190 = vector.load %arg6[%c2_100, %c0_101, %c0_102] : memref<9x8x4xbf16, #tpu.memory_space<vmem>>, vector<1x8x4xbf16>
    %191 = vector.shape_cast %190 : vector<1x8x4xbf16> to vector<8x4xbf16>
    %c0_103 = arith.constant 0 : index
    %c113_104 = arith.constant 113 : index
    %192 = vector.load %arg10[%c0_103, %c113_104] : memref<4x1024xbf16, #tpu.memory_space<vmem>>, vector<4x768xbf16>
    %193 = vector.broadcast %42 : vector<1x768xbf16> to vector<4x768xbf16>
    %194 = arith.mulf %192, %193 : vector<4x768xbf16>
    %cst_105 = arith.constant dense<0.000000e+00> : vector<8x768xf32>
    %195 = tpu.matmul %191, %194, %cst_105 {dimension_numbers = #tpu.dot_dimension_numbers<[1], [0], [0], [1], [0, 0, 1, 1], [], []>} : vector<8x4xbf16>, vector<4x768xbf16>, vector<8x768xf32> -> vector<8x768xf32>
    %196 = arith.addf %189, %195 : vector<8x768xf32>
    %c3_106 = arith.constant 3 : index
    %c0_107 = arith.constant 0 : index
    %c0_108 = arith.constant 0 : index
    %197 = vector.load %arg6[%c3_106, %c0_107, %c0_108] : memref<9x8x4xbf16, #tpu.memory_space<vmem>>, vector<1x8x4xbf16>
    %198 = vector.shape_cast %197 : vector<1x8x4xbf16> to vector<8x4xbf16>
    %c0_109 = arith.constant 0 : index
    %c127_110 = arith.constant 127 : index
    %199 = vector.load %arg10[%c0_109, %c127_110] : memref<4x1024xbf16, #tpu.memory_space<vmem>>, vector<4x768xbf16>
    %200 = vector.broadcast %37 : vector<1x768xbf16> to vector<4x768xbf16>
    %201 = arith.mulf %199, %200 : vector<4x768xbf16>
    %cst_111 = arith.constant dense<0.000000e+00> : vector<8x768xf32>
    %202 = tpu.matmul %198, %201, %cst_111 {dimension_numbers = #tpu.dot_dimension_numbers<[1], [0], [0], [1], [0, 0, 1, 1], [], []>} : vector<8x4xbf16>, vector<4x768xbf16>, vector<8x768xf32> -> vector<8x768xf32>
    %203 = arith.addf %196, %202 : vector<8x768xf32>
    %c4_112 = arith.constant 4 : index
    %c0_113 = arith.constant 0 : index
    %c0_114 = arith.constant 0 : index
    %204 = vector.load %arg6[%c4_112, %c0_113, %c0_114] : memref<9x8x4xbf16, #tpu.memory_space<vmem>>, vector<1x8x4xbf16>
    %205 = vector.shape_cast %204 : vector<1x8x4xbf16> to vector<8x4xbf16>
    %c0_115 = arith.constant 0 : index
    %c128_116 = arith.constant 128 : index
    %206 = vector.load %arg10[%c0_115, %c128_116] : memref<4x1024xbf16, #tpu.memory_space<vmem>>, vector<4x768xbf16>
    %cst_117 = arith.constant dense<0.000000e+00> : vector<8x768xf32>
    %207 = tpu.matmul %205, %206, %cst_117 {dimension_numbers = #tpu.dot_dimension_numbers<[1], [0], [0], [1], [0, 0, 1, 1], [], []>} : vector<8x4xbf16>, vector<4x768xbf16>, vector<8x768xf32> -> vector<8x768xf32>
    %208 = arith.addf %203, %207 : vector<8x768xf32>
    %c5_118 = arith.constant 5 : index
    %c0_119 = arith.constant 0 : index
    %c0_120 = arith.constant 0 : index
    %209 = vector.load %arg6[%c5_118, %c0_119, %c0_120] : memref<9x8x4xbf16, #tpu.memory_space<vmem>>, vector<1x8x4xbf16>
    %210 = vector.shape_cast %209 : vector<1x8x4xbf16> to vector<8x4xbf16>
    %c0_121 = arith.constant 0 : index
    %c129_122 = arith.constant 129 : index
    %211 = vector.load %arg10[%c0_121, %c129_122] : memref<4x1024xbf16, #tpu.memory_space<vmem>>, vector<4x768xbf16>
    %212 = vector.broadcast %42 : vector<1x768xbf16> to vector<4x768xbf16>
    %213 = arith.mulf %211, %212 : vector<4x768xbf16>
    %cst_123 = arith.constant dense<0.000000e+00> : vector<8x768xf32>
    %214 = tpu.matmul %210, %213, %cst_123 {dimension_numbers = #tpu.dot_dimension_numbers<[1], [0], [0], [1], [0, 0, 1, 1], [], []>} : vector<8x4xbf16>, vector<4x768xbf16>, vector<8x768xf32> -> vector<8x768xf32>
    %215 = arith.addf %208, %214 : vector<8x768xf32>
    %c6_124 = arith.constant 6 : index
    %c0_125 = arith.constant 0 : index
    %c0_126 = arith.constant 0 : index
    %216 = vector.load %arg6[%c6_124, %c0_125, %c0_126] : memref<9x8x4xbf16, #tpu.memory_space<vmem>>, vector<1x8x4xbf16>
    %217 = vector.shape_cast %216 : vector<1x8x4xbf16> to vector<8x4xbf16>
    %c0_127 = arith.constant 0 : index
    %c143_128 = arith.constant 143 : index
    %218 = vector.load %arg10[%c0_127, %c143_128] : memref<4x1024xbf16, #tpu.memory_space<vmem>>, vector<4x768xbf16>
    %219 = vector.broadcast %37 : vector<1x768xbf16> to vector<4x768xbf16>
    %220 = arith.mulf %218, %219 : vector<4x768xbf16>
    %cst_129 = arith.constant dense<0.000000e+00> : vector<8x768xf32>
    %221 = tpu.matmul %217, %220, %cst_129 {dimension_numbers = #tpu.dot_dimension_numbers<[1], [0], [0], [1], [0, 0, 1, 1], [], []>} : vector<8x4xbf16>, vector<4x768xbf16>, vector<8x768xf32> -> vector<8x768xf32>
    %222 = arith.addf %215, %221 : vector<8x768xf32>
    %c7_130 = arith.constant 7 : index
    %c0_131 = arith.constant 0 : index
    %c0_132 = arith.constant 0 : index
    %223 = vector.load %arg6[%c7_130, %c0_131, %c0_132] : memref<9x8x4xbf16, #tpu.memory_space<vmem>>, vector<1x8x4xbf16>
    %224 = vector.shape_cast %223 : vector<1x8x4xbf16> to vector<8x4xbf16>
    %c0_133 = arith.constant 0 : index
    %c144_134 = arith.constant 144 : index
    %225 = vector.load %arg10[%c0_133, %c144_134] : memref<4x1024xbf16, #tpu.memory_space<vmem>>, vector<4x768xbf16>
    %cst_135 = arith.constant dense<0.000000e+00> : vector<8x768xf32>
    %226 = tpu.matmul %224, %225, %cst_135 {dimension_numbers = #tpu.dot_dimension_numbers<[1], [0], [0], [1], [0, 0, 1, 1], [], []>} : vector<8x4xbf16>, vector<4x768xbf16>, vector<8x768xf32> -> vector<8x768xf32>
    %227 = arith.addf %222, %226 : vector<8x768xf32>
    %c8_136 = arith.constant 8 : index
    %c0_137 = arith.constant 0 : index
    %c0_138 = arith.constant 0 : index
    %228 = vector.load %arg6[%c8_136, %c0_137, %c0_138] : memref<9x8x4xbf16, #tpu.memory_space<vmem>>, vector<1x8x4xbf16>
    %229 = vector.shape_cast %228 : vector<1x8x4xbf16> to vector<8x4xbf16>
    %c0_139 = arith.constant 0 : index
    %c145_140 = arith.constant 145 : index
    %230 = vector.load %arg10[%c0_139, %c145_140] : memref<4x1024xbf16, #tpu.memory_space<vmem>>, vector<4x768xbf16>
    %231 = vector.broadcast %42 : vector<1x768xbf16> to vector<4x768xbf16>
    %232 = arith.mulf %230, %231 : vector<4x768xbf16>
    %cst_141 = arith.constant dense<0.000000e+00> : vector<8x768xf32>
    %233 = tpu.matmul %229, %232, %cst_141 {dimension_numbers = #tpu.dot_dimension_numbers<[1], [0], [0], [1], [0, 0, 1, 1], [], []>} : vector<8x4xbf16>, vector<4x768xbf16>, vector<8x768xf32> -> vector<8x768xf32>
    %234 = arith.addf %227, %233 : vector<8x768xf32>
    %c0_142 = arith.constant 0 : index
    %c0_143 = arith.constant 0 : index
    %235 = vector.load %arg7[%c0_142, %c0_143] : memref<8x1xf32, #tpu.memory_space<vmem>>, vector<8x1xf32>
    %236 = vector.broadcast %235 : vector<8x1xf32> to vector<8x768xf32>
    %237 = arith.mulf %234, %236 : vector<8x768xf32>
    %c0_144 = arith.constant 0 : index
    %c0_145 = arith.constant 0 : index
    %238 = vector.load %arg8[%c0_144, %c0_145] : memref<8x1xf32, #tpu.memory_space<vmem>>, vector<8x1xf32>
    %239 = vector.broadcast %238 : vector<8x1xf32> to vector<8x768xf32>
    %240 = arith.addf %237, %239 : vector<8x768xf32>
    %cst_146 = arith.constant 0.000000e+00 : f32
    %241 = vector.broadcast %cst_146 : f32 to vector<8x768xf32>
    %242 = arith.maximumf %240, %241 : vector<8x768xf32>
    %243 = vector.extract_strided_slice %242 {offsets = [0, 0], sizes = [8, 256], strides = [1, 1]} : vector<8x768xf32> to vector<8x256xf32>
    %244 = arith.truncf %243 : vector<8x256xf32> to vector<8x256xbf16>
    %c0_147 = arith.constant 0 : index
    %c0_148 = arith.constant 0 : index
    %c0_149 = arith.constant 0 : index
    %245 = vector.load %arg9[%c0_147, %c0_148, %c0_149] : memref<2x8x256xbf16, #tpu.memory_space<vmem>>, vector<1x8x256xbf16>
    %246 = vector.shape_cast %245 : vector<1x8x256xbf16> to vector<8x256xbf16>
    %247 = vector.shape_cast %244 : vector<8x256xbf16> to vector<1x8x256xbf16>
    tpu.vector_store %arg9[%c0_147, %c0_148, %c0_149], %247 {strides = array<i32>} : memref<2x8x256xbf16, #tpu.memory_space<vmem>>, vector<1x8x256xbf16>,
    %248 = vector.extract_strided_slice %242 {offsets = [0, 512], sizes = [8, 256], strides = [1, 1]} : vector<8x768xf32> to vector<8x256xf32>
    %249 = arith.truncf %248 : vector<8x256xf32> to vector<8x256xbf16>
    %c1_150 = arith.constant 1 : index
    %c0_151 = arith.constant 0 : index
    %c0_152 = arith.constant 0 : index
    %250 = vector.load %arg9[%c1_150, %c0_151, %c0_152] : memref<2x8x256xbf16, #tpu.memory_space<vmem>>, vector<1x8x256xbf16>
    %251 = vector.shape_cast %250 : vector<1x8x256xbf16> to vector<8x256xbf16>
    %252 = vector.shape_cast %249 : vector<8x256xbf16> to vector<1x8x256xbf16>
    tpu.vector_store %arg9[%c1_150, %c0_151, %c0_152], %252 {strides = array<i32>} : memref<2x8x256xbf16, #tpu.memory_space<vmem>>, vector<1x8x256xbf16>,
    return
  }
  func.func @transform_0(%arg0: i32) -> (i32, i32) {
    %c0_i32 = arith.constant 0 : i32
    %c0_i32_0 = arith.constant 0 : i32
    return %c0_i32, %arg0 : i32, i32
  }
  func.func @transform_1(%arg0: i32) -> (i32, i32) {
    %c0_i32 = arith.constant 0 : i32
    %c0_i32_0 = arith.constant 0 : i32
    return %c0_i32, %arg0 : i32, i32
  }
  func.func @transform_2(%arg0: i32) -> (i32, i32, i32) {
    %c0_i32 = arith.constant 0 : i32
    %c0_i32_0 = arith.constant 0 : i32
    %c0_i32_1 = arith.constant 0 : i32
    %c0_i32_2 = arith.constant 0 : i32
    return %c0_i32, %c0_i32_0, %c0_i32_1 : i32, i32, i32
  }
  func.func @transform_3(%arg0: i32) -> (i32, i32) {
    %c0_i32 = arith.constant 0 : i32
    %c0_i32_0 = arith.constant 0 : i32
    %c0_i32_1 = arith.constant 0 : i32
    return %c0_i32, %c0_i32_0 : i32, i32
  }
  func.func @transform_4(%arg0: i32) -> (i32, i32) {
    %c0_i32 = arith.constant 0 : i32
    %c0_i32_0 = arith.constant 0 : i32
    %c0_i32_1 = arith.constant 0 : i32
    return %c0_i32, %c0_i32_0 : i32, i32
  }
  func.func @transform_5(%arg0: i32) -> (i32, i32, i32) {
    %c0_i32 = arith.constant 0 : i32
    %c0_i32_0 = arith.constant 0 : i32
    %c0_i32_1 = arith.constant 0 : i32
    %c0_i32_2 = arith.constant 0 : i32
    return %c0_i32, %c0_i32_0, %c0_i32_1 : i32, i32, i32
  }
  func.func @transform_6(%arg0: i32) -> (i32, i32) {
    %c0_i32 = arith.constant 0 : i32
    %c0_i32_0 = arith.constant 0 : i32
    %c0_i32_1 = arith.constant 0 : i32
    return %c0_i32, %c0_i32_0 : i32, i32
  }
  func.func @transform_7(%arg0: i32) -> (i32, i32) {
    %c0_i32 = arith.constant 0 : i32
    %c0_i32_0 = arith.constant 0 : i32
    %c0_i32_1 = arith.constant 0 : i32
    return %c0_i32, %c0_i32_0 : i32, i32
  }
  func.func @transform_8(%arg0: i32) -> (i32, i32, i32) {
    %c0_i32 = arith.constant 0 : i32
    %c0_i32_0 = arith.constant 0 : i32
    %c0_i32_1 = arith.constant 0 : i32
    return %arg0, %c0_i32, %c0_i32_0 : i32, i32, i32
  }
}

</mosaic_0001>

<llo_original>
// kernel: up_forward.1
$region0: #{up_forward.1}
  #allocation0 [shape = 'u32[]', space=smem, size = 0x4, offset = 0x4, fixed_abs, tag = 'smem constant byte address 0x4 - core index']
  #allocation1 [shape = 'u32[144,128]{1,0:T(1,128)}', space=vmem, size = 0x12000, scoped, tag = 'internal scratch']
  #allocation2 [shape = 'bf16[4,1024]{1,0:T(4,128)(2,1)}', space=vmem, size = 0x2000, scoped, tag = 'scratch operand']
  %s0 = inlined_call_operand.vmem [shape: bf16[4,1024], index: 0, kind: input, shape index: {}]
  %s1 = inlined_call_operand.vmem [shape: bf16[4,1024], index: 1, kind: input, shape index: {}]
  %s2 = inlined_call_operand.vmem [shape: bf16[9,4,8], index: 2, kind: input, shape index: {}]
  %s3 = inlined_call_operand.vmem [shape: f32[4,1], index: 3, kind: input, shape index: {}]
  %s4 = inlined_call_operand.vmem [shape: f32[4,1], index: 4, kind: input, shape index: {}]
  %s5 = inlined_call_operand.vmem [shape: bf16[9,8,4], index: 5, kind: input, shape index: {}]
  %s6 = inlined_call_operand.vmem [shape: f32[8,1], index: 6, kind: input, shape index: {}]
  %s7 = inlined_call_operand.vmem [shape: f32[8,1], index: 7, kind: input, shape index: {}]
  %s8 = inlined_call_operand.vmem [shape: bf16[2,8,256], index: 8, kind: output, shape index: {}]
  %s9 = sld [smem:[#allocation0]]
  $region42: #{up_forward.1} parent=0
    _
  %s11 = ssub.s32 1, %s9
  %s12 = scalar_select 0, %s11, %s9
  // Predicated region
  $region2: #{up_forward.1} parent=0 // pred_check
    _
  $region3: #{up_forward.1} parent=0 // pred_check_branch
    %14 = sbr.rel (0) target = $region5
  $region4: #{up_forward.1} parent=0 // pred_region
    _
  $region5: #{up_forward.1} parent=0 // pred_fallthru
    _
  // Predicated region
  $region6: #{up_forward.1} parent=0 // pred_check
    _
  $region7: #{up_forward.1} parent=0 // pred_check_branch
    %16 = sbr.rel (0) target = $region9
  $region8: #{up_forward.1} parent=0 // pred_region
    _
  $region9: #{up_forward.1} parent=0 // pred_fallthru
    _
  // Predicated region
  $region10: #{up_forward.1} parent=0 // pred_check
    _
  $region11: #{up_forward.1} parent=0 // pred_check_branch
    %18 = sbr.rel (0) target = $region13
  $region12: #{up_forward.1} parent=0 // pred_region
    _
  $region13: #{up_forward.1} parent=0 // pred_fallthru
    _
  // Predicated region
  $region14: #{up_forward.1} parent=0 // pred_check
    _
  $region15: #{up_forward.1} parent=0 // pred_check_branch
    %20 = sbr.rel (0) target = $region17
  $region16: #{up_forward.1} parent=0 // pred_region
    _
  $region17: #{up_forward.1} parent=0 // pred_fallthru
    _
  // Predicated region
  $region18: #{up_forward.1} parent=0 // pred_check
    _
  $region19: #{up_forward.1} parent=0 // pred_check_branch
    %22 = sbr.rel (0) target = $region21
  $region20: #{up_forward.1} parent=0 // pred_region
    _
  $region21: #{up_forward.1} parent=0 // pred_fallthru
    _
  // Predicated region
  $region22: #{up_forward.1} parent=0 // pred_check
    _
  $region23: #{up_forward.1} parent=0 // pred_check_branch
    %24 = sbr.rel (0) target = $region25
  $region24: #{up_forward.1} parent=0 // pred_region
    _
  $region25: #{up_forward.1} parent=0 // pred_fallthru
    _
  // Predicated region
  $region26: #{up_forward.1} parent=0 // pred_check
    _
  $region27: #{up_forward.1} parent=0 // pred_check_branch
    %26 = sbr.rel (0) target = $region29
  $region28: #{up_forward.1} parent=0 // pred_region
    _
  $region29: #{up_forward.1} parent=0 // pred_fallthru
    _
  // Predicated region
  $region30: #{up_forward.1} parent=0 // pred_check
    _
  $region31: #{up_forward.1} parent=0 // pred_check_branch
    %28 = sbr.rel (0) target = $region33
  $region32: #{up_forward.1} parent=0 // pred_region
    _
  $region33: #{up_forward.1} parent=0 // pred_fallthru
    _
  %v30 = vlaneseq
  %v31 = vand.u32 %v30, 127
  %v32 = vadd.s32 %v31, 128
  %v33 = vadd.s32 %v31, 256
  %v34 = vadd.s32 %v31, 384
  %v35 = vadd.s32 %v31, 512
  %v36 = vadd.s32 %v31, 640
  %vm37 = vcmp.lt.s32.totalorder %v31, 0
  %v38 = vsub.s32 0, %v31
  %v39 = vsel %vm37, %v38, %v31
  %v40 = vshrl.u32 %v39, 9
  %v41 = vand.u32 %v39, 511
  %v42 = vsub.s32 0, %v41
  %v43 = vsel %vm37, %v42, %v41
  %vm44 = vcmp.lt.s32.totalorder %v32, 0
  %v45 = vsub.s32 0, %v32
  %v46 = vsel %vm44, %v45, %v32
  %v47 = vshrl.u32 %v46, 9
  %v48 = vand.u32 %v46, 511
  %v49 = vsub.s32 0, %v48
  %v50 = vsel %vm44, %v49, %v48
  %vm51 = vcmp.lt.s32.totalorder %v33, 0
  %v52 = vsub.s32 0, %v33
  %v53 = vsel %vm51, %v52, %v33
  %v54 = vshrl.u32 %v53, 9
  %v55 = vand.u32 %v53, 511
  %v56 = vsub.s32 0, %v55
  %v57 = vsel %vm51, %v56, %v55
  %vm58 = vcmp.lt.s32.totalorder %v34, 0
  %v59 = vsub.s32 0, %v34
  %v60 = vsel %vm58, %v59, %v34
  %v61 = vshrl.u32 %v60, 9
  %v62 = vand.u32 %v60, 511
  %v63 = vsub.s32 0, %v62
  %v64 = vsel %vm58, %v63, %v62
  %vm65 = vcmp.lt.s32.totalorder %v35, 0
  %v66 = vsub.s32 0, %v35
  %v67 = vsel %vm65, %v66, %v35
  %v68 = vshrl.u32 %v67, 9
  %v69 = vand.u32 %v67, 511
  %v70 = vsub.s32 0, %v69
  %v71 = vsel %vm65, %v70, %v69
  %vm72 = vcmp.lt.s32.totalorder %v36, 0
  %v73 = vsub.s32 0, %v36
  %v74 = vsel %vm72, %v73, %v36
  %v75 = vshrl.u32 %v74, 9
  %v76 = vand.u32 %v74, 511
  %v77 = vsub.s32 0, %v76
  %v78 = vsel %vm72, %v77, %v76
  %vm79 = vcmp.ne.s32.totalorder %v43, 0
  %vm80 = vcmp.ne.s32.totalorder %v50, 0
  %vm81 = vcmp.ne.s32.totalorder %v57, 0
  %vm82 = vcmp.ne.s32.totalorder %v64, 0
  %vm83 = vcmp.ne.s32.totalorder %v71, 0
  %vm84 = vcmp.ne.s32.totalorder %v78, 0
  %vm85 = vcmp.lt.s32.totalorder %v43, 0
  %vm86 = vcmp.lt.s32.totalorder %v50, 0
  %vm87 = vcmp.lt.s32.totalorder %v57, 0
  %vm88 = vcmp.lt.s32.totalorder %v64, 0
  %vm89 = vcmp.lt.s32.totalorder %v71, 0
  %vm90 = vcmp.lt.s32.totalorder %v78, 0
  %vm91 = vmand %vm85, %vm79
  %vm92 = vmand %vm86, %vm80
  %vm93 = vmand %vm87, %vm81
  %vm94 = vmand %vm88, %vm82
  %vm95 = vmand %vm89, %vm83
  %vm96 = vmand %vm90, %vm84
  %v97 = vadd.s32 %v43, 512
  %v98 = vadd.s32 %v50, 512
  %v99 = vadd.s32 %v57, 512
  %v100 = vadd.s32 %v64, 512
  %v101 = vadd.s32 %v71, 512
  %v102 = vadd.s32 %v78, 512
  %v103 = vsel %vm91, %v97, %v43
  %v104 = vsel %vm92, %v98, %v50
  %v105 = vsel %vm93, %v99, %v57
  %v106 = vsel %vm94, %v100, %v64
  %v107 = vsel %vm95, %v101, %v71
  %v108 = vsel %vm96, %v102, %v78
  %vm109 = vcmp.lt.s32.totalorder %v103, 0
  %v110 = vsub.s32 0, %v103
  %v111 = vsel %vm109, %v110, %v103
  %v112 = vshrl.u32 %v111, 4
  %v113 = vand.u32 %v111, 15
  %v114 = vsub.s32 0, %v113
  %v115 = vsel %vm109, %v114, %v113
  %vm116 = vcmp.lt.s32.totalorder %v104, 0
  %v117 = vsub.s32 0, %v104
  %v118 = vsel %vm116, %v117, %v104
  %v119 = vshrl.u32 %v118, 4
  %v120 = vand.u32 %v118, 15
  %v121 = vsub.s32 0, %v120
  %v122 = vsel %vm116, %v121, %v120
  %vm123 = vcmp.lt.s32.totalorder %v105, 0
  %v124 = vsub.s32 0, %v105
  %v125 = vsel %vm123, %v124, %v105
  %v126 = vshrl.u32 %v125, 4
  %v127 = vand.u32 %v125, 15
  %v128 = vsub.s32 0, %v127
  %v129 = vsel %vm123, %v128, %v127
  %vm130 = vcmp.lt.s32.totalorder %v106, 0
  %v131 = vsub.s32 0, %v106
  %v132 = vsel %vm130, %v131, %v106
  %v133 = vshrl.u32 %v132, 4
  %v134 = vand.u32 %v132, 15
  %v135 = vsub.s32 0, %v134
  %v136 = vsel %vm130, %v135, %v134
  %vm137 = vcmp.lt.s32.totalorder %v107, 0
  %v138 = vsub.s32 0, %v107
  %v139 = vsel %vm137, %v138, %v107
  %v140 = vshrl.u32 %v139, 4
  %v141 = vand.u32 %v139, 15
  %v142 = vsub.s32 0, %v141
  %v143 = vsel %vm137, %v142, %v141
  %vm144 = vcmp.lt.s32.totalorder %v108, 0
  %v145 = vsub.s32 0, %v108
  %v146 = vsel %vm144, %v145, %v108
  %v147 = vshrl.u32 %v146, 4
  %v148 = vand.u32 %v146, 15
  %v149 = vsub.s32 0, %v148
  %v150 = vsel %vm144, %v149, %v148
  %vm151 = vcmp.ne.s32.totalorder %v115, 0
  %vm152 = vcmp.ne.s32.totalorder %v122, 0
  %vm153 = vcmp.ne.s32.totalorder %v129, 0
  %vm154 = vcmp.ne.s32.totalorder %v136, 0
  %vm155 = vcmp.ne.s32.totalorder %v143, 0
  %vm156 = vcmp.ne.s32.totalorder %v150, 0
  %vm157 = vcmp.lt.s32.totalorder %v115, 0
  %vm158 = vcmp.lt.s32.totalorder %v122, 0
  %vm159 = vcmp.lt.s32.totalorder %v129, 0
  %vm160 = vcmp.lt.s32.totalorder %v136, 0
  %vm161 = vcmp.lt.s32.totalorder %v143, 0
  %vm162 = vcmp.lt.s32.totalorder %v150, 0
  %vm163 = vmand %vm157, %vm151
  %vm164 = vmand %vm158, %vm152
  %vm165 = vmand %vm159, %vm153
  %vm166 = vmand %vm160, %vm154
  %vm167 = vmand %vm161, %vm155
  %vm168 = vmand %vm162, %vm156
  %v169 = vadd.s32 %v115, 16
  %v170 = vadd.s32 %v122, 16
  %v171 = vadd.s32 %v129, 16
  %v172 = vadd.s32 %v136, 16
  %v173 = vadd.s32 %v143, 16
  %v174 = vadd.s32 %v150, 16
  %v175 = vsel %vm163, %v169, %v115
  %v176 = vsel %vm164, %v170, %v122
  %v177 = vsel %vm165, %v171, %v129
  %v178 = vsel %vm166, %v172, %v136
  %v179 = vsel %vm167, %v173, %v143
  %v180 = vsel %vm168, %v174, %v150
  %vm181 = vcmp.ne.s32.totalorder %v175, 0
  %vm182 = vcmp.ne.s32.totalorder %v176, 0
  %vm183 = vcmp.ne.s32.totalorder %v177, 0
  %vm184 = vcmp.ne.s32.totalorder %v178, 0
  %vm185 = vcmp.ne.s32.totalorder %v179, 0
  %vm186 = vcmp.ne.s32.totalorder %v180, 0
  %v187 = vsel %vm181, 1, 0
  %v188 = vsel %vm182, 1, 0
  %v189 = vsel %vm183, 1, 0
  %v190 = vsel %vm184, 1, 0
  %v191 = vsel %vm185, 1, 0
  %v192 = vsel %vm186, 1, 0
  %v193 = vcvt.s32.f32 %v187
  %v194 = vcvt.s32.f32 %v188
  %v195 = vcvt.s32.f32 %v189
  %v196 = vcvt.s32.f32 %v190
  %v197 = vcvt.s32.f32 %v191
  %v198 = vcvt.s32.f32 %v192
  %v199 = vpack.c.bf16 %v193, %v193
  %v200 = vpack.c.bf16 %v194, %v194
  %v201 = vpack.c.bf16 %v195, %v195
  %v202 = vpack.c.bf16 %v196, %v196
  %v203 = vpack.c.bf16 %v197, %v197
  %v204 = vpack.c.bf16 %v198, %v198
  %vm205 = vcmp.ne.s32.totalorder %v175, 15
  %vm206 = vcmp.ne.s32.totalorder %v176, 15
  %vm207 = vcmp.ne.s32.totalorder %v177, 15
  %vm208 = vcmp.ne.s32.totalorder %v178, 15
  %vm209 = vcmp.ne.s32.totalorder %v179, 15
  %vm210 = vcmp.ne.s32.totalorder %v180, 15
  %v211 = vsel %vm205, 1, 0
  %v212 = vsel %vm206, 1, 0
  %v213 = vsel %vm207, 1, 0
  %v214 = vsel %vm208, 1, 0
  %v215 = vsel %vm209, 1, 0
  %v216 = vsel %vm210, 1, 0
  %v217 = vcvt.s32.f32 %v211
  %v218 = vcvt.s32.f32 %v212
  %v219 = vcvt.s32.f32 %v213
  %v220 = vcvt.s32.f32 %v214
  %v221 = vcvt.s32.f32 %v215
  %v222 = vcvt.s32.f32 %v216
  %v223 = vpack.c.bf16 %v217, %v217
  %v224 = vpack.c.bf16 %v218, %v218
  %v225 = vpack.c.bf16 %v219, %v219
  %v226 = vpack.c.bf16 %v220, %v220
  %v227 = vpack.c.bf16 %v221, %v221
  %v228 = vpack.c.bf16 %v222, %v222
  %v229 = vld [vmem:[%s2] sm:$0x3]
  %v230 = vld [vmem:[%s0] sm:$0xff]
  %v231 = vld [vmem:[%s0 + $0x8] sm:$0x3f]
  %v238 = vcombine.low %v199, %v200
  %v239 = vcombine.low %v201, %v202
  %v241 = vunpack.c.l.s4 1983009808
  %v242 = vunpack.c.0.s8 %v241
  %v243 = vlaneseq
  %v244 = vshrl.u32 %v243, 7
  %v245 = vsub.s32 %v242, %v244
  %v246 = vrot.slane %v238, %v245
  %v248 = vunpack.c.l.s4 1983009808
  %v249 = vunpack.c.0.s8 %v248
  %v250 = vlaneseq
  %v251 = vshrl.u32 %v250, 7
  %v252 = vsub.s32 %v249, %v251
  %v253 = vrot.slane %v239, %v252
  %v254 = vcombine.low %v246, %v253
  %v255 = vcombine.low %v203, %v204
  %v257 = vunpack.c.l.s4 1983009808
  %v258 = vunpack.c.0.s8 %v257
  %v259 = vlaneseq
  %v260 = vshrl.u32 %v259, 7
  %v261 = vsub.s32 %v258, %v260
  %v262 = vrot.slane %v255, %v261
  %263 = vrot.lane.b32.xlu0 %v254, 111
  %v264 = vpop.permute.xlu0 %263
  %265 = vrot.lane.b32.xlu0 %v262, 111
  %v266 = vpop.permute.xlu0 %265
  %v267 = vrot.slane %v264, 6
  %v268 = vrot.slane %v266, 6
  %vm269 = vcmask 908288
  %v270 = vsel %vm269, %v267, %v264
  %vm271 = vcmask 1041408
  %v272 = vsel %vm271, %v267, %v268
  %v273 = vsel %vm269, %v272, %v266
  %v276 = vmul.bf16 %v230, %v270
  %v277 = vmul.bf16 %v231, %v273
  %v278 = vld [vmem:[%s1] sm:$0xff]
  %v279 = vld [vmem:[%s1 + $0x8] sm:$0x3f]
  %v280 = vmul.bf16 %v278, %v270
  %v281 = vmul.bf16 %v279, %v273
  %v284 = vunpack.c.l.s4 1983009808
  %v285 = vunpack.c.0.s8 %v284
  %v286 = vlaneseq
  %v287 = vshrl.u32 %v286, 7
  %v288 = vsub.s32 %v285, %v287
  %v289 = vrot.slane %v229, %v288
  %290 = vrot.lane.b32.xlu0 %v289, 124
  %v291 = vpop.permute.xlu0 %290
  %v294 = vcombine.high %v280, %v280
  %v296 = vunpack.c.l.s4 1983009808
  %v297 = vunpack.c.0.s8 %v296
  %v298 = vlaneseq
  %v299 = vshrl.u32 %v298, 7
  %v300 = vsub.s32 %v297, %v299
  %v301 = vrot.slane %v280, %v300
  %v303 = vunpack.c.l.s4 1983009808
  %v304 = vunpack.c.0.s8 %v303
  %v305 = vlaneseq
  %v306 = vshrl.u32 %v305, 7
  %v307 = vsub.s32 %v304, %v306
  %v308 = vrot.slane %v294, %v307
  %v309 = vcombine.high %v301, %v301
  %v310 = vcombine.high %v281, %v281
  %v312 = vunpack.c.l.s4 1983009808
  %v313 = vunpack.c.0.s8 %v312
  %v314 = vlaneseq
  %v315 = vshrl.u32 %v314, 7
  %v316 = vsub.s32 %v313, %v315
  %v317 = vrot.slane %v281, %v316
  %v319 = vunpack.c.l.s4 1983009808
  %v320 = vunpack.c.0.s8 %v319
  %v321 = vlaneseq
  %v322 = vshrl.u32 %v321, 7
  %v323 = vsub.s32 %v320, %v322
  %v324 = vrot.slane %v310, %v323
  %v325 = vcombine.high %v317, %v317
  %326 = vrot.lane.b32.xlu0 %v301, 17
  %v327 = vpop.permute.xlu0 %326
  %328 = vrot.lane.b32.xlu0 %v309, 17
  %v329 = vpop.permute.xlu0 %328
  %330 = vrot.lane.b32.xlu0 %v308, 17
  %v331 = vpop.permute.xlu0 %330
  %332 = vrot.lane.b32.xlu0 %v317, 17
  %v333 = vpop.permute.xlu0 %332
  %334 = vrot.lane.b32.xlu0 %v325, 17
  %v335 = vpop.permute.xlu0 %334
  %336 = vrot.lane.b32.xlu0 %v324, 17
  %v337 = vpop.permute.xlu0 %336
  %vm338 = vcmask 138240
  %v339 = vsel %vm338, %v327, %v329
  %v340 = vsel %vm338, %v329, %v331
  %v341 = vsel %vm338, %v333, %v335
  %v342 = vsel %vm338, %v335, %v337
  %vm343 = vcmask 31744
  %v345 = vsel %vm343, %v291, 0
  %vm347 = vcmask 1041408
  %v349 = vsel %vm347, %v339, 0
  %v352 = vsel %vm347, %v340, 0
  %v355 = vsel %vm347, %v341, 0
  %v358 = vsel %vm347, %v342, 0
  %360 = vmatprep.subr.bf16.mxu0 %v352
  %361 = vmatpush1.bf16.msra.mxu0 %v349
  %362 = vmatprep.subr.bf16.mxu0 0
  %363 = vmatpush1.bf16.msra.mxu0 0
  %364 = vmatprep.subr.bf16.mxu0 0
  %365 = vmatpush1.bf16.msra.mxu0 0
  %366 = vmatprep.subr.bf16.mxu0 0
  %367 = vmatpush1.bf16.msra.mxu0 0
  %368 = vmatprep.subr.bf16.mxu0 0
  %369 = vmatpush1.bf16.msra.mxu0 0
  %370 = vmatprep.subr.bf16.mxu0 0
  %371 = vmatpush1.bf16.msra.mxu0 0
  %372 = vmatprep.subr.bf16.mxu0 0
  %373 = vmatpush1.bf16.msra.mxu0 0
  %374 = vmatprep.subr.bf16.mxu0 0
  %375 = vmatpush1.bf16.msra.mxu0 0
  %376 = vmatprep.subr.bf16.mxu0 0
  %377 = vmatpush1.bf16.msra.mxu0 0
  %378 = vmatprep.subr.bf16.mxu0 0
  %379 = vmatpush1.bf16.msra.mxu0 0
  %380 = vmatprep.subr.bf16.mxu0 0
  %381 = vmatpush1.bf16.msra.mxu0 0
  %382 = vmatprep.subr.bf16.mxu0 0
  %383 = vmatpush1.bf16.msra.mxu0 0
  %384 = vmatprep.subr.bf16.mxu0 0
  %385 = vmatpush1.bf16.msra.mxu0 0
  %386 = vmatprep.subr.bf16.mxu0 0
  %387 = vmatpush1.bf16.msra.mxu0 0
  %388 = vmatprep.subr.bf16.mxu0 0
  %389 = vmatpush1.bf16.msra.mxu0 0
  %390 = vmatprep.subr.bf16.mxu0 0
  %391 = vmatpush1.bf16.msra.mxu0 0
  %392 = vmatprep.mubr.bf16.mxu0 0
  %393 = vmatmul.mubr.bf16.gmra.mrb[0].mxu0 %v345
  %v394 = vpop.f32.mrb[0].mxu0
  %v395 = vadd.f32 0.0, %v394
  %v396 = vpop.f32.mrb[0].mxu0
  %v397 = vadd.f32 0.0, %v396
  %v398 = vpop.f32.mrb[0].mxu0
  %v399 = vpop.f32.mrb[0].mxu0
  %400 = vdwg.mxu0
  %401 = vmatprep.subr.bf16.mxu0 %v358
  %402 = vmatpush1.bf16.msra.mxu0 %v355
  %403 = vmatprep.subr.bf16.mxu0 0
  %404 = vmatpush1.bf16.msra.mxu0 0
  %405 = vmatprep.subr.bf16.mxu0 0
  %406 = vmatpush1.bf16.msra.mxu0 0
  %407 = vmatprep.subr.bf16.mxu0 0
  %408 = vmatpush1.bf16.msra.mxu0 0
  %409 = vmatprep.subr.bf16.mxu0 0
  %410 = vmatpush1.bf16.msra.mxu0 0
  %411 = vmatprep.subr.bf16.mxu0 0
  %412 = vmatpush1.bf16.msra.mxu0 0
  %413 = vmatprep.subr.bf16.mxu0 0
  %414 = vmatpush1.bf16.msra.mxu0 0
  %415 = vmatprep.subr.bf16.mxu0 0
  %416 = vmatpush1.bf16.msra.mxu0 0
  %417 = vmatprep.subr.bf16.mxu0 0
  %418 = vmatpush1.bf16.msra.mxu0 0
  %419 = vmatprep.subr.bf16.mxu0 0
  %420 = vmatpush1.bf16.msra.mxu0 0
  %421 = vmatprep.subr.bf16.mxu0 0
  %422 = vmatpush1.bf16.msra.mxu0 0
  %423 = vmatprep.subr.bf16.mxu0 0
  %424 = vmatpush1.bf16.msra.mxu0 0
  %425 = vmatprep.subr.bf16.mxu0 0
  %426 = vmatpush1.bf16.msra.mxu0 0
  %427 = vmatprep.subr.bf16.mxu0 0
  %428 = vmatpush1.bf16.msra.mxu0 0
  %429 = vmatprep.subr.bf16.mxu0 0
  %430 = vmatpush1.bf16.msra.mxu0 0
  %431 = vmatprep.subr.bf16.mxu0 0
  %432 = vmatpush1.bf16.msra.mxu0 0
  %433 = vmatprep.mubr.bf16.mxu0 0
  %434 = vmatmul.mubr.bf16.gmra.mrb[0].mxu0 %v345
  %v435 = vpop.f32.mrb[0].mxu0
  %v436 = vadd.f32 0.0, %v435
  %v437 = vpop.f32.mrb[0].mxu0
  %v438 = vadd.f32 0.0, %v437
  %v439 = vpop.f32.mrb[0].mxu0
  %v440 = vpop.f32.mrb[0].mxu0
  %441 = vdwg.mxu0
  %v444 = vcombine.high %v276, %v276
  %v446 = vunpack.c.l.s4 1983009808
  %v447 = vunpack.c.0.s8 %v446
  %v448 = vlaneseq
  %v449 = vshrl.u32 %v448, 7
  %v450 = vsub.s32 %v447, %v449
  %v451 = vrot.slane %v276, %v450
  %v453 = vunpack.c.l.s4 1983009808
  %v454 = vunpack.c.0.s8 %v453
  %v455 = vlaneseq
  %v456 = vshrl.u32 %v455, 7
  %v457 = vsub.s32 %v454, %v456
  %v458 = vrot.slane %v444, %v457
  %v459 = vcombine.high %v451, %v451
  %v460 = vcombine.high %v277, %v277
  %v462 = vunpack.c.l.s4 1983009808
  %v463 = vunpack.c.0.s8 %v462
  %v464 = vlaneseq
  %v465 = vshrl.u32 %v464, 7
  %v466 = vsub.s32 %v463, %v465
  %v467 = vrot.slane %v277, %v466
  %v469 = vunpack.c.l.s4 1983009808
  %v470 = vunpack.c.0.s8 %v469
  %v471 = vlaneseq
  %v472 = vshrl.u32 %v471, 7
  %v473 = vsub.s32 %v470, %v472
  %v474 = vrot.slane %v460, %v473
  %v475 = vcombine.high %v467, %v467
  %476 = vrot.lane.b32.xlu0 %v451, 17
  %v477 = vpop.permute.xlu0 %476
  %478 = vrot.lane.b32.xlu0 %v459, 17
  %v479 = vpop.permute.xlu0 %478
  %480 = vrot.lane.b32.xlu0 %v458, 17
  %v481 = vpop.permute.xlu0 %480
  %482 = vrot.lane.b32.xlu0 %v467, 17
  %v483 = vpop.permute.xlu0 %482
  %484 = vrot.lane.b32.xlu0 %v475, 17
  %v485 = vpop.permute.xlu0 %484
  %486 = vrot.lane.b32.xlu0 %v474, 17
  %v487 = vpop.permute.xlu0 %486
  %v488 = vsel %vm338, %v477, %v479
  %v489 = vsel %vm338, %v479, %v481
  %v490 = vsel %vm338, %v483, %v485
  %v491 = vsel %vm338, %v485, %v487
  %v493 = vsel %vm343, %v229, 0
  %v496 = vsel %vm347, %v488, 0
  %v499 = vsel %vm347, %v489, 0
  %v502 = vsel %vm347, %v490, 0
  %v505 = vsel %vm347, %v491, 0
  %507 = vmatprep.subr.bf16.mxu0 %v499
  %508 = vmatpush1.bf16.msra.mxu0 %v496
  %509 = vmatprep.subr.bf16.mxu0 0
  %510 = vmatpush1.bf16.msra.mxu0 0
  %511 = vmatprep.subr.bf16.mxu0 0
  %512 = vmatpush1.bf16.msra.mxu0 0
  %513 = vmatprep.subr.bf16.mxu0 0
  %514 = vmatpush1.bf16.msra.mxu0 0
  %515 = vmatprep.subr.bf16.mxu0 0
  %516 = vmatpush1.bf16.msra.mxu0 0
  %517 = vmatprep.subr.bf16.mxu0 0
  %518 = vmatpush1.bf16.msra.mxu0 0
  %519 = vmatprep.subr.bf16.mxu0 0
  %520 = vmatpush1.bf16.msra.mxu0 0
  %521 = vmatprep.subr.bf16.mxu0 0
  %522 = vmatpush1.bf16.msra.mxu0 0
  %523 = vmatprep.subr.bf16.mxu0 0
  %524 = vmatpush1.bf16.msra.mxu0 0
  %525 = vmatprep.subr.bf16.mxu0 0
  %526 = vmatpush1.bf16.msra.mxu0 0
  %527 = vmatprep.subr.bf16.mxu0 0
  %528 = vmatpush1.bf16.msra.mxu0 0
  %529 = vmatprep.subr.bf16.mxu0 0
  %530 = vmatpush1.bf16.msra.mxu0 0
  %531 = vmatprep.subr.bf16.mxu0 0
  %532 = vmatpush1.bf16.msra.mxu0 0
  %533 = vmatprep.subr.bf16.mxu0 0
  %534 = vmatpush1.bf16.msra.mxu0 0
  %535 = vmatprep.subr.bf16.mxu0 0
  %536 = vmatpush1.bf16.msra.mxu0 0
  %537 = vmatprep.subr.bf16.mxu0 0
  %538 = vmatpush1.bf16.msra.mxu0 0
  %539 = vmatprep.mubr.bf16.mxu0 0
  %540 = vmatmul.mubr.bf16.gmra.mrb[0].mxu0 %v493
  %v541 = vpop.f32.mrb[0].mxu0
  %v542 = vadd.f32 %v395, %v541
  %v543 = vpop.f32.mrb[0].mxu0
  %v544 = vadd.f32 %v397, %v543
  %v545 = vpop.f32.mrb[0].mxu0
  %v546 = vpop.f32.mrb[0].mxu0
  %547 = vdwg.mxu0
  %548 = vmatprep.subr.bf16.mxu0 %v505
  %549 = vmatpush1.bf16.msra.mxu0 %v502
  %550 = vmatprep.subr.bf16.mxu0 0
  %551 = vmatpush1.bf16.msra.mxu0 0
  %552 = vmatprep.subr.bf16.mxu0 0
  %553 = vmatpush1.bf16.msra.mxu0 0
  %554 = vmatprep.subr.bf16.mxu0 0
  %555 = vmatpush1.bf16.msra.mxu0 0
  %556 = vmatprep.subr.bf16.mxu0 0
  %557 = vmatpush1.bf16.msra.mxu0 0
  %558 = vmatprep.subr.bf16.mxu0 0
  %559 = vmatpush1.bf16.msra.mxu0 0
  %560 = vmatprep.subr.bf16.mxu0 0
  %561 = vmatpush1.bf16.msra.mxu0 0
  %562 = vmatprep.subr.bf16.mxu0 0
  %563 = vmatpush1.bf16.msra.mxu0 0
  %564 = vmatprep.subr.bf16.mxu0 0
  %565 = vmatpush1.bf16.msra.mxu0 0
  %566 = vmatprep.subr.bf16.mxu0 0
  %567 = vmatpush1.bf16.msra.mxu0 0
  %568 = vmatprep.subr.bf16.mxu0 0
  %569 = vmatpush1.bf16.msra.mxu0 0
  %570 = vmatprep.subr.bf16.mxu0 0
  %571 = vmatpush1.bf16.msra.mxu0 0
  %572 = vmatprep.subr.bf16.mxu0 0
  %573 = vmatpush1.bf16.msra.mxu0 0
  %574 = vmatprep.subr.bf16.mxu0 0
  %575 = vmatpush1.bf16.msra.mxu0 0
  %576 = vmatprep.subr.bf16.mxu0 0
  %577 = vmatpush1.bf16.msra.mxu0 0
  %578 = vmatprep.subr.bf16.mxu0 0
  %579 = vmatpush1.bf16.msra.mxu0 0
  %580 = vmatprep.mubr.bf16.mxu0 0
  %581 = vmatmul.mubr.bf16.gmra.mrb[0].mxu0 %v493
  %v582 = vpop.f32.mrb[0].mxu0
  %v583 = vadd.f32 %v436, %v582
  %v584 = vpop.f32.mrb[0].mxu0
  %v585 = vadd.f32 %v438, %v584
  %v586 = vpop.f32.mrb[0].mxu0
  %v587 = vpop.f32.mrb[0].mxu0
  %588 = vdwg.mxu0
  %s589 = scalar_lea.vmem %s2, 2
  %v590 = vld [vmem:[%s589] sm:$0x3]
  %v591 = vld [vmem:[%s0] sm:$0xff]
  %v592 = vld [vmem:[%s0 + $0x8] sm:$0x3f]
  %v595 = vcombine.high %v591, %v591
  %v597 = vunpack.c.l.s4 1983009808
  %v598 = vunpack.c.0.s8 %v597
  %v599 = vlaneseq
  %v600 = vshrl.u32 %v599, 7
  %v601 = vsub.s32 %v598, %v600
  %v602 = vrot.slane %v591, %v601
  %v604 = vunpack.c.l.s4 1983009808
  %v605 = vunpack.c.0.s8 %v604
  %v606 = vlaneseq
  %v607 = vshrl.u32 %v606, 7
  %v608 = vsub.s32 %v605, %v607
  %v609 = vrot.slane %v595, %v608
  %v610 = vcombine.high %v602, %v602
  %v611 = vcombine.high %v592, %v592
  %v613 = vunpack.c.l.s4 1983009808
  %v614 = vunpack.c.0.s8 %v613
  %v615 = vlaneseq
  %v616 = vshrl.u32 %v615, 7
  %v617 = vsub.s32 %v614, %v616
  %v618 = vrot.slane %v592, %v617
  %v620 = vunpack.c.l.s4 1983009808
  %v621 = vunpack.c.0.s8 %v620
  %v622 = vlaneseq
  %v623 = vshrl.u32 %v622, 7
  %v624 = vsub.s32 %v621, %v623
  %v625 = vrot.slane %v611, %v624
  %v626 = vcombine.high %v618, %v618
  %627 = vrot.lane.b32.xlu0 %v602, 16
  %v628 = vpop.permute.xlu0 %627
  %629 = vrot.lane.b32.xlu0 %v610, 16
  %v630 = vpop.permute.xlu0 %629
  %631 = vrot.lane.b32.xlu0 %v609, 16
  %v632 = vpop.permute.xlu0 %631
  %633 = vrot.lane.b32.xlu0 %v618, 16
  %v634 = vpop.permute.xlu0 %633
  %635 = vrot.lane.b32.xlu0 %v626, 16
  %v636 = vpop.permute.xlu0 %635
  %637 = vrot.lane.b32.xlu0 %v625, 16
  %v638 = vpop.permute.xlu0 %637
  %vm639 = vcmask 130048
  %v640 = vsel %vm639, %v628, %v630
  %v641 = vsel %vm639, %v630, %v632
  %v642 = vsel %vm639, %v634, %v636
  %v643 = vsel %vm639, %v636, %v638
  %v645 = vsel %vm343, %v590, 0
  %v648 = vsel %vm347, %v640, 0
  %v651 = vsel %vm347, %v641, 0
  %v654 = vsel %vm347, %v642, 0
  %v657 = vsel %vm347, %v643, 0
  %659 = vmatprep.subr.bf16.mxu0 %v651
  %660 = vmatpush1.bf16.msra.mxu0 %v648
  %661 = vmatprep.subr.bf16.mxu0 0
  %662 = vmatpush1.bf16.msra.mxu0 0
  %663 = vmatprep.subr.bf16.mxu0 0
  %664 = vmatpush1.bf16.msra.mxu0 0
  %665 = vmatprep.subr.bf16.mxu0 0
  %666 = vmatpush1.bf16.msra.mxu0 0
  %667 = vmatprep.subr.bf16.mxu0 0
  %668 = vmatpush1.bf16.msra.mxu0 0
  %669 = vmatprep.subr.bf16.mxu0 0
  %670 = vmatpush1.bf16.msra.mxu0 0
  %671 = vmatprep.subr.bf16.mxu0 0
  %672 = vmatpush1.bf16.msra.mxu0 0
  %673 = vmatprep.subr.bf16.mxu0 0
  %674 = vmatpush1.bf16.msra.mxu0 0
  %675 = vmatprep.subr.bf16.mxu0 0
  %676 = vmatpush1.bf16.msra.mxu0 0
  %677 = vmatprep.subr.bf16.mxu0 0
  %678 = vmatpush1.bf16.msra.mxu0 0
  %679 = vmatprep.subr.bf16.mxu0 0
  %680 = vmatpush1.bf16.msra.mxu0 0
  %681 = vmatprep.subr.bf16.mxu0 0
  %682 = vmatpush1.bf16.msra.mxu0 0
  %683 = vmatprep.subr.bf16.mxu0 0
  %684 = vmatpush1.bf16.msra.mxu0 0
  %685 = vmatprep.subr.bf16.mxu0 0
  %686 = vmatpush1.bf16.msra.mxu0 0
  %687 = vmatprep.subr.bf16.mxu0 0
  %688 = vmatpush1.bf16.msra.mxu0 0
  %689 = vmatprep.subr.bf16.mxu0 0
  %690 = vmatpush1.bf16.msra.mxu0 0
  %691 = vmatprep.mubr.bf16.mxu0 0
  %692 = vmatmul.mubr.bf16.gmra.mrb[0].mxu0 %v645
  %v693 = vpop.f32.mrb[0].mxu0
  %v694 = vadd.f32 0.0, %v693
  %v695 = vpop.f32.mrb[0].mxu0
  %v696 = vadd.f32 0.0, %v695
  %v697 = vpop.f32.mrb[0].mxu0
  %v698 = vpop.f32.mrb[0].mxu0
  %699 = vdwg.mxu0
  %700 = vmatprep.subr.bf16.mxu0 %v657
  %701 = vmatpush1.bf16.msra.mxu0 %v654
  %702 = vmatprep.subr.bf16.mxu0 0
  %703 = vmatpush1.bf16.msra.mxu0 0
  %704 = vmatprep.subr.bf16.mxu0 0
  %705 = vmatpush1.bf16.msra.mxu0 0
  %706 = vmatprep.subr.bf16.mxu0 0
  %707 = vmatpush1.bf16.msra.mxu0 0
  %708 = vmatprep.subr.bf16.mxu0 0
  %709 = vmatpush1.bf16.msra.mxu0 0
  %710 = vmatprep.subr.bf16.mxu0 0
  %711 = vmatpush1.bf16.msra.mxu0 0
  %712 = vmatprep.subr.bf16.mxu0 0
  %713 = vmatpush1.bf16.msra.mxu0 0
  %714 = vmatprep.subr.bf16.mxu0 0
  %715 = vmatpush1.bf16.msra.mxu0 0
  %716 = vmatprep.subr.bf16.mxu0 0
  %717 = vmatpush1.bf16.msra.mxu0 0
  %718 = vmatprep.subr.bf16.mxu0 0
  %719 = vmatpush1.bf16.msra.mxu0 0
  %720 = vmatprep.subr.bf16.mxu0 0
  %721 = vmatpush1.bf16.msra.mxu0 0
  %722 = vmatprep.subr.bf16.mxu0 0
  %723 = vmatpush1.bf16.msra.mxu0 0
  %724 = vmatprep.subr.bf16.mxu0 0
  %725 = vmatpush1.bf16.msra.mxu0 0
  %726 = vmatprep.subr.bf16.mxu0 0
  %727 = vmatpush1.bf16.msra.mxu0 0
  %728 = vmatprep.subr.bf16.mxu0 0
  %729 = vmatpush1.bf16.msra.mxu0 0
  %730 = vmatprep.subr.bf16.mxu0 0
  %731 = vmatpush1.bf16.msra.mxu0 0
  %732 = vmatprep.mubr.bf16.mxu0 0
  %733 = vmatmul.mubr.bf16.gmra.mrb[0].mxu0 %v645
  %v734 = vpop.f32.mrb[0].mxu0
  %v735 = vadd.f32 0.0, %v734
  %v736 = vpop.f32.mrb[0].mxu0
  %v737 = vadd.f32 0.0, %v736
  %v738 = vpop.f32.mrb[0].mxu0
  %v739 = vpop.f32.mrb[0].mxu0
  %740 = vdwg.mxu0
  %v741 = vadd.f32 %v542, %v694
  %v742 = vadd.f32 %v544, %v696
  %v743 = vadd.f32 %v583, %v735
  %v744 = vadd.f32 %v585, %v737
  %v745 = vld [vmem:[%s1] sm:$0xff]
  %v746 = vld [vmem:[%s1 + $0x8] sm:$0x3f]
  %v749 = vunpack.c.l.s4 1983009808
  %v750 = vunpack.c.0.s8 %v749
  %v751 = vlaneseq
  %v752 = vshrl.u32 %v751, 7
  %v753 = vsub.s32 %v750, %v752
  %v754 = vrot.slane %v590, %v753
  %755 = vrot.lane.b32.xlu0 %v754, 124
  %v756 = vpop.permute.xlu0 %755
  %v759 = vcombine.high %v745, %v745
  %v761 = vunpack.c.l.s4 1983009808
  %v762 = vunpack.c.0.s8 %v761
  %v763 = vlaneseq
  %v764 = vshrl.u32 %v763, 7
  %v765 = vsub.s32 %v762, %v764
  %v766 = vrot.slane %v745, %v765
  %v768 = vunpack.c.l.s4 1983009808
  %v769 = vunpack.c.0.s8 %v768
  %v770 = vlaneseq
  %v771 = vshrl.u32 %v770, 7
  %v772 = vsub.s32 %v769, %v771
  %v773 = vrot.slane %v759, %v772
  %v774 = vcombine.high %v766, %v766
  %v775 = vcombine.high %v746, %v746
  %v777 = vunpack.c.l.s4 1983009808
  %v778 = vunpack.c.0.s8 %v777
  %v779 = vlaneseq
  %v780 = vshrl.u32 %v779, 7
  %v781 = vsub.s32 %v778, %v780
  %v782 = vrot.slane %v746, %v781
  %v784 = vunpack.c.l.s4 1983009808
  %v785 = vunpack.c.0.s8 %v784
  %v786 = vlaneseq
  %v787 = vshrl.u32 %v786, 7
  %v788 = vsub.s32 %v785, %v787
  %v789 = vrot.slane %v775, %v788
  %v790 = vcombine.high %v782, %v782
  %791 = vrot.lane.b32.xlu0 %v766, 16
  %v792 = vpop.permute.xlu0 %791
  %793 = vrot.lane.b32.xlu0 %v774, 16
  %v794 = vpop.permute.xlu0 %793
  %795 = vrot.lane.b32.xlu0 %v773, 16
  %v796 = vpop.permute.xlu0 %795
  %797 = vrot.lane.b32.xlu0 %v782, 16
  %v798 = vpop.permute.xlu0 %797
  %799 = vrot.lane.b32.xlu0 %v790, 16
  %v800 = vpop.permute.xlu0 %799
  %801 = vrot.lane.b32.xlu0 %v789, 16
  %v802 = vpop.permute.xlu0 %801
  %v803 = vsel %vm639, %v792, %v794
  %v804 = vsel %vm639, %v794, %v796
  %v805 = vsel %vm639, %v798, %v800
  %v806 = vsel %vm639, %v800, %v802
  %v808 = vsel %vm343, %v756, 0
  %v811 = vsel %vm347, %v803, 0
  %v814 = vsel %vm347, %v804, 0
  %v817 = vsel %vm347, %v805, 0
  %v820 = vsel %vm347, %v806, 0
  %822 = vmatprep.subr.bf16.mxu0 %v814
  %823 = vmatpush1.bf16.msra.mxu0 %v811
  %824 = vmatprep.subr.bf16.mxu0 0
  %825 = vmatpush1.bf16.msra.mxu0 0
  %826 = vmatprep.subr.bf16.mxu0 0
  %827 = vmatpush1.bf16.msra.mxu0 0
  %828 = vmatprep.subr.bf16.mxu0 0
  %829 = vmatpush1.bf16.msra.mxu0 0
  %830 = vmatprep.subr.bf16.mxu0 0
  %831 = vmatpush1.bf16.msra.mxu0 0
  %832 = vmatprep.subr.bf16.mxu0 0
  %833 = vmatpush1.bf16.msra.mxu0 0
  %834 = vmatprep.subr.bf16.mxu0 0
  %835 = vmatpush1.bf16.msra.mxu0 0
  %836 = vmatprep.subr.bf16.mxu0 0
  %837 = vmatpush1.bf16.msra.mxu0 0
  %838 = vmatprep.subr.bf16.mxu0 0
  %839 = vmatpush1.bf16.msra.mxu0 0
  %840 = vmatprep.subr.bf16.mxu0 0
  %841 = vmatpush1.bf16.msra.mxu0 0
  %842 = vmatprep.subr.bf16.mxu0 0
  %843 = vmatpush1.bf16.msra.mxu0 0
  %844 = vmatprep.subr.bf16.mxu0 0
  %845 = vmatpush1.bf16.msra.mxu0 0
  %846 = vmatprep.subr.bf16.mxu0 0
  %847 = vmatpush1.bf16.msra.mxu0 0
  %848 = vmatprep.subr.bf16.mxu0 0
  %849 = vmatpush1.bf16.msra.mxu0 0
  %850 = vmatprep.subr.bf16.mxu0 0
  %851 = vmatpush1.bf16.msra.mxu0 0
  %852 = vmatprep.subr.bf16.mxu0 0
  %853 = vmatpush1.bf16.msra.mxu0 0
  %854 = vmatprep.mubr.bf16.mxu0 0
  %855 = vmatmul.mubr.bf16.gmra.mrb[0].mxu0 %v808
  %v856 = vpop.f32.mrb[0].mxu0
  %v857 = vadd.f32 0.0, %v856
  %v858 = vpop.f32.mrb[0].mxu0
  %v859 = vadd.f32 0.0, %v858
  %v860 = vpop.f32.mrb[0].mxu0
  %v861 = vpop.f32.mrb[0].mxu0
  %862 = vdwg.mxu0
  %863 = vmatprep.subr.bf16.mxu0 %v820
  %864 = vmatpush1.bf16.msra.mxu0 %v817
  %865 = vmatprep.subr.bf16.mxu0 0
  %866 = vmatpush1.bf16.msra.mxu0 0
  %867 = vmatprep.subr.bf16.mxu0 0
  %868 = vmatpush1.bf16.msra.mxu0 0
  %869 = vmatprep.subr.bf16.mxu0 0
  %870 = vmatpush1.bf16.msra.mxu0 0
  %871 = vmatprep.subr.bf16.mxu0 0
  %872 = vmatpush1.bf16.msra.mxu0 0
  %873 = vmatprep.subr.bf16.mxu0 0
  %874 = vmatpush1.bf16.msra.mxu0 0
  %875 = vmatprep.subr.bf16.mxu0 0
  %876 = vmatpush1.bf16.msra.mxu0 0
  %877 = vmatprep.subr.bf16.mxu0 0
  %878 = vmatpush1.bf16.msra.mxu0 0
  %879 = vmatprep.subr.bf16.mxu0 0
  %880 = vmatpush1.bf16.msra.mxu0 0
  %881 = vmatprep.subr.bf16.mxu0 0
  %882 = vmatpush1.bf16.msra.mxu0 0
  %883 = vmatprep.subr.bf16.mxu0 0
  %884 = vmatpush1.bf16.msra.mxu0 0
  %885 = vmatprep.subr.bf16.mxu0 0
  %886 = vmatpush1.bf16.msra.mxu0 0
  %887 = vmatprep.subr.bf16.mxu0 0
  %888 = vmatpush1.bf16.msra.mxu0 0
  %889 = vmatprep.subr.bf16.mxu0 0
  %890 = vmatpush1.bf16.msra.mxu0 0
  %891 = vmatprep.subr.bf16.mxu0 0
  %892 = vmatpush1.bf16.msra.mxu0 0
  %893 = vmatprep.subr.bf16.mxu0 0
  %894 = vmatpush1.bf16.msra.mxu0 0
  %895 = vmatprep.mubr.bf16.mxu0 0
  %896 = vmatmul.mubr.bf16.gmra.mrb[0].mxu0 %v808
  %v897 = vpop.f32.mrb[0].mxu0
  %v898 = vadd.f32 0.0, %v897
  %v899 = vpop.f32.mrb[0].mxu0
  %v900 = vadd.f32 0.0, %v899
  %v901 = vpop.f32.mrb[0].mxu0
  %v902 = vpop.f32.mrb[0].mxu0
  %903 = vdwg.mxu0
  %v904 = vadd.f32 %v741, %v857
  %v905 = vadd.f32 %v742, %v859
  %v906 = vadd.f32 %v743, %v898
  %v907 = vadd.f32 %v744, %v900
  %s908 = scalar_lea.vmem %s2, 4
  %v909 = vld [vmem:[%s908] sm:$0x3]
  %v910 = vld [vmem:[%s0] sm:$0xff]
  %v911 = vld [vmem:[%s0 + $0x8] sm:$0x3f]
  %v918 = vcombine.low %v223, %v224
  %v919 = vcombine.low %v225, %v226
  %v921 = vunpack.c.l.s4 1983009808
  %v922 = vunpack.c.0.s8 %v921
  %v923 = vlaneseq
  %v924 = vshrl.u32 %v923, 7
  %v925 = vsub.s32 %v922, %v924
  %v926 = vrot.slane %v918, %v925
  %v928 = vunpack.c.l.s4 1983009808
  %v929 = vunpack.c.0.s8 %v928
  %v930 = vlaneseq
  %v931 = vshrl.u32 %v930, 7
  %v932 = vsub.s32 %v929, %v931
  %v933 = vrot.slane %v919, %v932
  %v934 = vcombine.low %v926, %v933
  %v935 = vcombine.low %v227, %v228
  %v937 = vunpack.c.l.s4 1983009808
  %v938 = vunpack.c.0.s8 %v937
  %v939 = vlaneseq
  %v940 = vshrl.u32 %v939, 7
  %v941 = vsub.s32 %v938, %v940
  %v942 = vrot.slane %v935, %v941
  %943 = vrot.lane.b32.xlu0 %v934, 113
  %v944 = vpop.permute.xlu0 %943
  %945 = vrot.lane.b32.xlu0 %v942, 113
  %v946 = vpop.permute.xlu0 %945
  %v947 = vrot.slane %v944, 6
  %v948 = vrot.slane %v946, 6
  %vm949 = vcmask 924672
  %v950 = vsel %vm949, %v947, %v944
  %v951 = vsel %vm271, %v947, %v948
  %v952 = vsel %vm949, %v951, %v946
  %v955 = vmul.bf16 %v910, %v950
  %v956 = vmul.bf16 %v911, %v952
  %v959 = vcombine.high %v955, %v955
  %v961 = vunpack.c.l.s4 1983009808
  %v962 = vunpack.c.0.s8 %v961
  %v963 = vlaneseq
  %v964 = vshrl.u32 %v963, 7
  %v965 = vsub.s32 %v962, %v964
  %v966 = vrot.slane %v955, %v965
  %v968 = vunpack.c.l.s4 1983009808
  %v969 = vunpack.c.0.s8 %v968
  %v970 = vlaneseq
  %v971 = vshrl.u32 %v970, 7
  %v972 = vsub.s32 %v969, %v971
  %v973 = vrot.slane %v959, %v972
  %v974 = vcombine.high %v966, %v966
  %v975 = vcombine.high %v956, %v956
  %v977 = vunpack.c.l.s4 1983009808
  %v978 = vunpack.c.0.s8 %v977
  %v979 = vlaneseq
  %v980 = vshrl.u32 %v979, 7
  %v981 = vsub.s32 %v978, %v980
  %v982 = vrot.slane %v956, %v981
  %v984 = vunpack.c.l.s4 1983009808
  %v985 = vunpack.c.0.s8 %v984
  %v986 = vlaneseq
  %v987 = vshrl.u32 %v986, 7
  %v988 = vsub.s32 %v985, %v987
  %v989 = vrot.slane %v975, %v988
  %v990 = vcombine.high %v982, %v982
  %991 = vrot.lane.b32.xlu0 %v966, 15
  %v992 = vpop.permute.xlu0 %991
  %993 = vrot.lane.b32.xlu0 %v974, 15
  %v994 = vpop.permute.xlu0 %993
  %995 = vrot.lane.b32.xlu0 %v973, 15
  %v996 = vpop.permute.xlu0 %995
  %997 = vrot.lane.b32.xlu0 %v982, 15
  %v998 = vpop.permute.xlu0 %997
  %999 = vrot.lane.b32.xlu0 %v990, 15
  %v1000 = vpop.permute.xlu0 %999
  %1001 = vrot.lane.b32.xlu0 %v989, 15
  %v1002 = vpop.permute.xlu0 %1001
  %vm1003 = vcmask 121856
  %v1004 = vsel %vm1003, %v992, %v994
  %v1005 = vsel %vm1003, %v994, %v996
  %v1006 = vsel %vm1003, %v998, %v1000
  %v1007 = vsel %vm1003, %v1000, %v1002
  %v1009 = vsel %vm343, %v909, 0
  %v1012 = vsel %vm347, %v1004, 0
  %v1015 = vsel %vm347, %v1005, 0
  %v1018 = vsel %vm347, %v1006, 0
  %v1021 = vsel %vm347, %v1007, 0
  %1023 = vmatprep.subr.bf16.mxu0 %v1015
  %1024 = vmatpush1.bf16.msra.mxu0 %v1012
  %1025 = vmatprep.subr.bf16.mxu0 0
  %1026 = vmatpush1.bf16.msra.mxu0 0
  %1027 = vmatprep.subr.bf16.mxu0 0
  %1028 = vmatpush1.bf16.msra.mxu0 0
  %1029 = vmatprep.subr.bf16.mxu0 0
  %1030 = vmatpush1.bf16.msra.mxu0 0
  %1031 = vmatprep.subr.bf16.mxu0 0
  %1032 = vmatpush1.bf16.msra.mxu0 0
  %1033 = vmatprep.subr.bf16.mxu0 0
  %1034 = vmatpush1.bf16.msra.mxu0 0
  %1035 = vmatprep.subr.bf16.mxu0 0
  %1036 = vmatpush1.bf16.msra.mxu0 0
  %1037 = vmatprep.subr.bf16.mxu0 0
  %1038 = vmatpush1.bf16.msra.mxu0 0
  %1039 = vmatprep.subr.bf16.mxu0 0
  %1040 = vmatpush1.bf16.msra.mxu0 0
  %1041 = vmatprep.subr.bf16.mxu0 0
  %1042 = vmatpush1.bf16.msra.mxu0 0
  %1043 = vmatprep.subr.bf16.mxu0 0
  %1044 = vmatpush1.bf16.msra.mxu0 0
  %1045 = vmatprep.subr.bf16.mxu0 0
  %1046 = vmatpush1.bf16.msra.mxu0 0
  %1047 = vmatprep.subr.bf16.mxu0 0
  %1048 = vmatpush1.bf16.msra.mxu0 0
  %1049 = vmatprep.subr.bf16.mxu0 0
  %1050 = vmatpush1.bf16.msra.mxu0 0
  %1051 = vmatprep.subr.bf16.mxu0 0
  %1052 = vmatpush1.bf16.msra.mxu0 0
  %1053 = vmatprep.subr.bf16.mxu0 0
  %1054 = vmatpush1.bf16.msra.mxu0 0
  %1055 = vmatprep.mubr.bf16.mxu0 0
  %1056 = vmatmul.mubr.bf16.gmra.mrb[0].mxu0 %v1009
  %v1057 = vpop.f32.mrb[0].mxu0
  %v1058 = vadd.f32 0.0, %v1057
  %v1059 = vpop.f32.mrb[0].mxu0
  %v1060 = vadd.f32 0.0, %v1059
  %v1061 = vpop.f32.mrb[0].mxu0
  %v1062 = vpop.f32.mrb[0].mxu0
  %1063 = vdwg.mxu0
  %1064 = vmatprep.subr.bf16.mxu0 %v1021
  %1065 = vmatpush1.bf16.msra.mxu0 %v1018
  %1066 = vmatprep.subr.bf16.mxu0 0
  %1067 = vmatpush1.bf16.msra.mxu0 0
  %1068 = vmatprep.subr.bf16.mxu0 0
  %1069 = vmatpush1.bf16.msra.mxu0 0
  %1070 = vmatprep.subr.bf16.mxu0 0
  %1071 = vmatpush1.bf16.msra.mxu0 0
  %1072 = vmatprep.subr.bf16.mxu0 0
  %1073 = vmatpush1.bf16.msra.mxu0 0
  %1074 = vmatprep.subr.bf16.mxu0 0
  %1075 = vmatpush1.bf16.msra.mxu0 0
  %1076 = vmatprep.subr.bf16.mxu0 0
  %1077 = vmatpush1.bf16.msra.mxu0 0
  %1078 = vmatprep.subr.bf16.mxu0 0
  %1079 = vmatpush1.bf16.msra.mxu0 0
  %1080 = vmatprep.subr.bf16.mxu0 0
  %1081 = vmatpush1.bf16.msra.mxu0 0
  %1082 = vmatprep.subr.bf16.mxu0 0
  %1083 = vmatpush1.bf16.msra.mxu0 0
  %1084 = vmatprep.subr.bf16.mxu0 0
  %1085 = vmatpush1.bf16.msra.mxu0 0
  %1086 = vmatprep.subr.bf16.mxu0 0
  %1087 = vmatpush1.bf16.msra.mxu0 0
  %1088 = vmatprep.subr.bf16.mxu0 0
  %1089 = vmatpush1.bf16.msra.mxu0 0
  %1090 = vmatprep.subr.bf16.mxu0 0
  %1091 = vmatpush1.bf16.msra.mxu0 0
  %1092 = vmatprep.subr.bf16.mxu0 0
  %1093 = vmatpush1.bf16.msra.mxu0 0
  %1094 = vmatprep.subr.bf16.mxu0 0
  %1095 = vmatpush1.bf16.msra.mxu0 0
  %1096 = vmatprep.mubr.bf16.mxu0 0
  %1097 = vmatmul.mubr.bf16.gmra.mrb[0].mxu0 %v1009
  %v1098 = vpop.f32.mrb[0].mxu0
  %v1099 = vadd.f32 0.0, %v1098
  %v1100 = vpop.f32.mrb[0].mxu0
  %v1101 = vadd.f32 0.0, %v1100
  %v1102 = vpop.f32.mrb[0].mxu0
  %v1103 = vpop.f32.mrb[0].mxu0
  %1104 = vdwg.mxu0
  %v1105 = vadd.f32 %v904, %v1058
  %v1106 = vadd.f32 %v905, %v1060
  %v1107 = vadd.f32 %v906, %v1099
  %v1108 = vadd.f32 %v907, %v1101
  %v1109 = vld [vmem:[%s1] sm:$0xff]
  %v1110 = vld [vmem:[%s1 + $0x8] sm:$0x3f]
  %v1111 = vmul.bf16 %v1109, %v950
  %v1112 = vmul.bf16 %v1110, %v952
  %v1115 = vunpack.c.l.s4 1983009808
  %v1116 = vunpack.c.0.s8 %v1115
  %v1117 = vlaneseq
  %v1118 = vshrl.u32 %v1117, 7
  %v1119 = vsub.s32 %v1116, %v1118
  %v1120 = vrot.slane %v909, %v1119
  %1121 = vrot.lane.b32.xlu0 %v1120, 124
  %v1122 = vpop.permute.xlu0 %1121
  %v1125 = vcombine.high %v1111, %v1111
  %v1127 = vunpack.c.l.s4 1983009808
  %v1128 = vunpack.c.0.s8 %v1127
  %v1129 = vlaneseq
  %v1130 = vshrl.u32 %v1129, 7
  %v1131 = vsub.s32 %v1128, %v1130
  %v1132 = vrot.slane %v1111, %v1131
  %v1134 = vunpack.c.l.s4 1983009808
  %v1135 = vunpack.c.0.s8 %v1134
  %v1136 = vlaneseq
  %v1137 = vshrl.u32 %v1136, 7
  %v1138 = vsub.s32 %v1135, %v1137
  %v1139 = vrot.slane %v1125, %v1138
  %v1140 = vcombine.high %v1132, %v1132
  %v1141 = vcombine.high %v1112, %v1112
  %v1143 = vunpack.c.l.s4 1983009808
  %v1144 = vunpack.c.0.s8 %v1143
  %v1145 = vlaneseq
  %v1146 = vshrl.u32 %v1145, 7
  %v1147 = vsub.s32 %v1144, %v1146
  %v1148 = vrot.slane %v1112, %v1147
  %v1150 = vunpack.c.l.s4 1983009808
  %v1151 = vunpack.c.0.s8 %v1150
  %v1152 = vlaneseq
  %v1153 = vshrl.u32 %v1152, 7
  %v1154 = vsub.s32 %v1151, %v1153
  %v1155 = vrot.slane %v1141, %v1154
  %v1156 = vcombine.high %v1148, %v1148
  %1157 = vrot.lane.b32.xlu0 %v1132, 15
  %v1158 = vpop.permute.xlu0 %1157
  %1159 = vrot.lane.b32.xlu0 %v1140, 15
  %v1160 = vpop.permute.xlu0 %1159
  %1161 = vrot.lane.b32.xlu0 %v1139, 15
  %v1162 = vpop.permute.xlu0 %1161
  %1163 = vrot.lane.b32.xlu0 %v1148, 15
  %v1164 = vpop.permute.xlu0 %1163
  %1165 = vrot.lane.b32.xlu0 %v1156, 15
  %v1166 = vpop.permute.xlu0 %1165
  %1167 = vrot.lane.b32.xlu0 %v1155, 15
  %v1168 = vpop.permute.xlu0 %1167
  %v1169 = vsel %vm1003, %v1158, %v1160
  %v1170 = vsel %vm1003, %v1160, %v1162
  %v1171 = vsel %vm1003, %v1164, %v1166
  %v1172 = vsel %vm1003, %v1166, %v1168
  %v1174 = vsel %vm343, %v1122, 0
  %v1177 = vsel %vm347, %v1169, 0
  %v1180 = vsel %vm347, %v1170, 0
  %v1183 = vsel %vm347, %v1171, 0
  %v1186 = vsel %vm347, %v1172, 0
  %1188 = vmatprep.subr.bf16.mxu0 %v1180
  %1189 = vmatpush1.bf16.msra.mxu0 %v1177
  %1190 = vmatprep.subr.bf16.mxu0 0
  %1191 = vmatpush1.bf16.msra.mxu0 0
  %1192 = vmatprep.subr.bf16.mxu0 0
  %1193 = vmatpush1.bf16.msra.mxu0 0
  %1194 = vmatprep.subr.bf16.mxu0 0
  %1195 = vmatpush1.bf16.msra.mxu0 0
  %1196 = vmatprep.subr.bf16.mxu0 0
  %1197 = vmatpush1.bf16.msra.mxu0 0
  %1198 = vmatprep.subr.bf16.mxu0 0
  %1199 = vmatpush1.bf16.msra.mxu0 0
  %1200 = vmatprep.subr.bf16.mxu0 0
  %1201 = vmatpush1.bf16.msra.mxu0 0
  %1202 = vmatprep.subr.bf16.mxu0 0
  %1203 = vmatpush1.bf16.msra.mxu0 0
  %1204 = vmatprep.subr.bf16.mxu0 0
  %1205 = vmatpush1.bf16.msra.mxu0 0
  %1206 = vmatprep.subr.bf16.mxu0 0
  %1207 = vmatpush1.bf16.msra.mxu0 0
  %1208 = vmatprep.subr.bf16.mxu0 0
  %1209 = vmatpush1.bf16.msra.mxu0 0
  %1210 = vmatprep.subr.bf16.mxu0 0
  %1211 = vmatpush1.bf16.msra.mxu0 0
  %1212 = vmatprep.subr.bf16.mxu0 0
  %1213 = vmatpush1.bf16.msra.mxu0 0
  %1214 = vmatprep.subr.bf16.mxu0 0
  %1215 = vmatpush1.bf16.msra.mxu0 0
  %1216 = vmatprep.subr.bf16.mxu0 0
  %1217 = vmatpush1.bf16.msra.mxu0 0
  %1218 = vmatprep.subr.bf16.mxu0 0
  %1219 = vmatpush1.bf16.msra.mxu0 0
  %1220 = vmatprep.mubr.bf16.mxu0 0
  %1221 = vmatmul.mubr.bf16.gmra.mrb[0].mxu0 %v1174
  %v1222 = vpop.f32.mrb[0].mxu0
  %v1223 = vadd.f32 0.0, %v1222
  %v1224 = vpop.f32.mrb[0].mxu0
  %v1225 = vadd.f32 0.0, %v1224
  %v1226 = vpop.f32.mrb[0].mxu0
  %v1227 = vpop.f32.mrb[0].mxu0
  %1228 = vdwg.mxu0
  %1229 = vmatprep.subr.bf16.mxu0 %v1186
  %1230 = vmatpush1.bf16.msra.mxu0 %v1183
  %1231 = vmatprep.subr.bf16.mxu0 0
  %1232 = vmatpush1.bf16.msra.mxu0 0
  %1233 = vmatprep.subr.bf16.mxu0 0
  %1234 = vmatpush1.bf16.msra.mxu0 0
  %1235 = vmatprep.subr.bf16.mxu0 0
  %1236 = vmatpush1.bf16.msra.mxu0 0
  %1237 = vmatprep.subr.bf16.mxu0 0
  %1238 = vmatpush1.bf16.msra.mxu0 0
  %1239 = vmatprep.subr.bf16.mxu0 0
  %1240 = vmatpush1.bf16.msra.mxu0 0
  %1241 = vmatprep.subr.bf16.mxu0 0
  %1242 = vmatpush1.bf16.msra.mxu0 0
  %1243 = vmatprep.subr.bf16.mxu0 0
  %1244 = vmatpush1.bf16.msra.mxu0 0
  %1245 = vmatprep.subr.bf16.mxu0 0
  %1246 = vmatpush1.bf16.msra.mxu0 0
  %1247 = vmatprep.subr.bf16.mxu0 0
  %1248 = vmatpush1.bf16.msra.mxu0 0
  %1249 = vmatprep.subr.bf16.mxu0 0
  %1250 = vmatpush1.bf16.msra.mxu0 0
  %1251 = vmatprep.subr.bf16.mxu0 0
  %1252 = vmatpush1.bf16.msra.mxu0 0
  %1253 = vmatprep.subr.bf16.mxu0 0
  %1254 = vmatpush1.bf16.msra.mxu0 0
  %1255 = vmatprep.subr.bf16.mxu0 0
  %1256 = vmatpush1.bf16.msra.mxu0 0
  %1257 = vmatprep.subr.bf16.mxu0 0
  %1258 = vmatpush1.bf16.msra.mxu0 0
  %1259 = vmatprep.subr.bf16.mxu0 0
  %1260 = vmatpush1.bf16.msra.mxu0 0
  %1261 = vmatprep.mubr.bf16.mxu0 0
  %1262 = vmatmul.mubr.bf16.gmra.mrb[0].mxu0 %v1174
  %v1263 = vpop.f32.mrb[0].mxu0
  %v1264 = vadd.f32 0.0, %v1263
  %v1265 = vpop.f32.mrb[0].mxu0
  %v1266 = vadd.f32 0.0, %v1265
  %v1267 = vpop.f32.mrb[0].mxu0
  %v1268 = vpop.f32.mrb[0].mxu0
  %1269 = vdwg.mxu0
  %v1270 = vadd.f32 %v1105, %v1223
  %v1271 = vadd.f32 %v1106, %v1225
  %v1272 = vadd.f32 %v1107, %v1264
  %v1273 = vadd.f32 %v1108, %v1266
  %s1274 = scalar_lea.vmem %s2, 6
  %v1275 = vld [vmem:[%s1274] sm:$0x3]
  %v1276 = vld [vmem:[%s0] sm:$0xff]
  %v1277 = vld [vmem:[%s0 + $0x8] sm:$0x3f]
  %1278 = vrot.lane.b32.xlu0 %v254, 127
  %v1279 = vpop.permute.xlu0 %1278
  %1280 = vrot.lane.b32.xlu0 %v262, 127
  %v1281 = vpop.permute.xlu0 %1280
  %v1282 = vrot.slane %v1279, 6
  %v1283 = vrot.slane %v1281, 6
  %vm1284 = vcmask 1039360
  %v1285 = vsel %vm1284, %v1282, %v1279
  %v1286 = vsel %vm271, %v1282, %v1283
  %v1287 = vsel %vm1284, %v1286, %v1281
  %v1290 = vmul.bf16 %v1276, %v1285
  %v1291 = vmul.bf16 %v1277, %v1287
  %v1294 = vcombine.high %v1290, %v1290
  %v1296 = vunpack.c.l.s4 1983009808
  %v1297 = vunpack.c.0.s8 %v1296
  %v1298 = vlaneseq
  %v1299 = vshrl.u32 %v1298, 7
  %v1300 = vsub.s32 %v1297, %v1299
  %v1301 = vrot.slane %v1290, %v1300
  %v1303 = vunpack.c.l.s4 1983009808
  %v1304 = vunpack.c.0.s8 %v1303
  %v1305 = vlaneseq
  %v1306 = vshrl.u32 %v1305, 7
  %v1307 = vsub.s32 %v1304, %v1306
  %v1308 = vrot.slane %v1294, %v1307
  %v1309 = vcombine.high %v1301, %v1301
  %v1310 = vcombine.high %v1291, %v1291
  %v1312 = vunpack.c.l.s4 1983009808
  %v1313 = vunpack.c.0.s8 %v1312
  %v1314 = vlaneseq
  %v1315 = vshrl.u32 %v1314, 7
  %v1316 = vsub.s32 %v1313, %v1315
  %v1317 = vrot.slane %v1291, %v1316
  %v1319 = vunpack.c.l.s4 1983009808
  %v1320 = vunpack.c.0.s8 %v1319
  %v1321 = vlaneseq
  %v1322 = vshrl.u32 %v1321, 7
  %v1323 = vsub.s32 %v1320, %v1322
  %v1324 = vrot.slane %v1310, %v1323
  %v1325 = vcombine.high %v1317, %v1317
  %1326 = vrot.lane.b32.xlu0 %v1301, 1
  %v1327 = vpop.permute.xlu0 %1326
  %1328 = vrot.lane.b32.xlu0 %v1309, 1
  %v1329 = vpop.permute.xlu0 %1328
  %1330 = vrot.lane.b32.xlu0 %v1308, 1
  %v1331 = vpop.permute.xlu0 %1330
  %1332 = vrot.lane.b32.xlu0 %v1317, 1
  %v1333 = vpop.permute.xlu0 %1332
  %1334 = vrot.lane.b32.xlu0 %v1325, 1
  %v1335 = vpop.permute.xlu0 %1334
  %1336 = vrot.lane.b32.xlu0 %v1324, 1
  %v1337 = vpop.permute.xlu0 %1336
  %vm1338 = vcmask 7168
  %v1339 = vsel %vm1338, %v1327, %v1329
  %v1340 = vsel %vm1338, %v1329, %v1331
  %v1341 = vsel %vm1338, %v1333, %v1335
  %v1342 = vsel %vm1338, %v1335, %v1337
  %v1344 = vsel %vm343, %v1275, 0
  %v1347 = vsel %vm347, %v1339, 0
  %v1350 = vsel %vm347, %v1340, 0
  %v1353 = vsel %vm347, %v1341, 0
  %v1356 = vsel %vm347, %v1342, 0
  %1358 = vmatprep.subr.bf16.mxu0 %v1350
  %1359 = vmatpush1.bf16.msra.mxu0 %v1347
  %1360 = vmatprep.subr.bf16.mxu0 0
  %1361 = vmatpush1.bf16.msra.mxu0 0
  %1362 = vmatprep.subr.bf16.mxu0 0
  %1363 = vmatpush1.bf16.msra.mxu0 0
  %1364 = vmatprep.subr.bf16.mxu0 0
  %1365 = vmatpush1.bf16.msra.mxu0 0
  %1366 = vmatprep.subr.bf16.mxu0 0
  %1367 = vmatpush1.bf16.msra.mxu0 0
  %1368 = vmatprep.subr.bf16.mxu0 0
  %1369 = vmatpush1.bf16.msra.mxu0 0
  %1370 = vmatprep.subr.bf16.mxu0 0
  %1371 = vmatpush1.bf16.msra.mxu0 0
  %1372 = vmatprep.subr.bf16.mxu0 0
  %1373 = vmatpush1.bf16.msra.mxu0 0
  %1374 = vmatprep.subr.bf16.mxu0 0
  %1375 = vmatpush1.bf16.msra.mxu0 0
  %1376 = vmatprep.subr.bf16.mxu0 0
  %1377 = vmatpush1.bf16.msra.mxu0 0
  %1378 = vmatprep.subr.bf16.mxu0 0
  %1379 = vmatpush1.bf16.msra.mxu0 0
  %1380 = vmatprep.subr.bf16.mxu0 0
  %1381 = vmatpush1.bf16.msra.mxu0 0
  %1382 = vmatprep.subr.bf16.mxu0 0
  %1383 = vmatpush1.bf16.msra.mxu0 0
  %1384 = vmatprep.subr.bf16.mxu0 0
  %1385 = vmatpush1.bf16.msra.mxu0 0
  %1386 = vmatprep.subr.bf16.mxu0 0
  %1387 = vmatpush1.bf16.msra.mxu0 0
  %1388 = vmatprep.subr.bf16.mxu0 0
  %1389 = vmatpush1.bf16.msra.mxu0 0
  %1390 = vmatprep.mubr.bf16.mxu0 0
  %1391 = vmatmul.mubr.bf16.gmra.mrb[0].mxu0 %v1344
  %v1392 = vpop.f32.mrb[0].mxu0
  %v1393 = vadd.f32 0.0, %v1392
  %v1394 = vpop.f32.mrb[0].mxu0
  %v1395 = vadd.f32 0.0, %v1394
  %v1396 = vpop.f32.mrb[0].mxu0
  %v1397 = vpop.f32.mrb[0].mxu0
  %1398 = vdwg.mxu0
  %1399 = vmatprep.subr.bf16.mxu0 %v1356
  %1400 = vmatpush1.bf16.msra.mxu0 %v1353
  %1401 = vmatprep.subr.bf16.mxu0 0
  %1402 = vmatpush1.bf16.msra.mxu0 0
  %1403 = vmatprep.subr.bf16.mxu0 0
  %1404 = vmatpush1.bf16.msra.mxu0 0
  %1405 = vmatprep.subr.bf16.mxu0 0
  %1406 = vmatpush1.bf16.msra.mxu0 0
  %1407 = vmatprep.subr.bf16.mxu0 0
  %1408 = vmatpush1.bf16.msra.mxu0 0
  %1409 = vmatprep.subr.bf16.mxu0 0
  %1410 = vmatpush1.bf16.msra.mxu0 0
  %1411 = vmatprep.subr.bf16.mxu0 0
  %1412 = vmatpush1.bf16.msra.mxu0 0
  %1413 = vmatprep.subr.bf16.mxu0 0
  %1414 = vmatpush1.bf16.msra.mxu0 0
  %1415 = vmatprep.subr.bf16.mxu0 0
  %1416 = vmatpush1.bf16.msra.mxu0 0
  %1417 = vmatprep.subr.bf16.mxu0 0
  %1418 = vmatpush1.bf16.msra.mxu0 0
  %1419 = vmatprep.subr.bf16.mxu0 0
  %1420 = vmatpush1.bf16.msra.mxu0 0
  %1421 = vmatprep.subr.bf16.mxu0 0
  %1422 = vmatpush1.bf16.msra.mxu0 0
  %1423 = vmatprep.subr.bf16.mxu0 0
  %1424 = vmatpush1.bf16.msra.mxu0 0
  %1425 = vmatprep.subr.bf16.mxu0 0
  %1426 = vmatpush1.bf16.msra.mxu0 0
  %1427 = vmatprep.subr.bf16.mxu0 0
  %1428 = vmatpush1.bf16.msra.mxu0 0
  %1429 = vmatprep.subr.bf16.mxu0 0
  %1430 = vmatpush1.bf16.msra.mxu0 0
  %1431 = vmatprep.mubr.bf16.mxu0 0
  %1432 = vmatmul.mubr.bf16.gmra.mrb[0].mxu0 %v1344
  %v1433 = vpop.f32.mrb[0].mxu0
  %v1434 = vadd.f32 0.0, %v1433
  %v1435 = vpop.f32.mrb[0].mxu0
  %v1436 = vadd.f32 0.0, %v1435
  %v1437 = vpop.f32.mrb[0].mxu0
  %v1438 = vpop.f32.mrb[0].mxu0
  %1439 = vdwg.mxu0
  %v1440 = vadd.f32 %v1270, %v1393
  %v1441 = vadd.f32 %v1271, %v1395
  %v1442 = vadd.f32 %v1272, %v1434
  %v1443 = vadd.f32 %v1273, %v1436
  %v1444 = vld [vmem:[%s1] sm:$0xff]
  %v1445 = vld [vmem:[%s1 + $0x8] sm:$0x3f]
  %v1446 = vmul.bf16 %v1444, %v1285
  %v1447 = vmul.bf16 %v1445, %v1287
  %v1450 = vunpack.c.l.s4 1983009808
  %v1451 = vunpack.c.0.s8 %v1450
  %v1452 = vlaneseq
  %v1453 = vshrl.u32 %v1452, 7
  %v1454 = vsub.s32 %v1451, %v1453
  %v1455 = vrot.slane %v1275, %v1454
  %1456 = vrot.lane.b32.xlu0 %v1455, 124
  %v1457 = vpop.permute.xlu0 %1456
  %v1460 = vcombine.high %v1446, %v1446
  %v1462 = vunpack.c.l.s4 1983009808
  %v1463 = vunpack.c.0.s8 %v1462
  %v1464 = vlaneseq
  %v1465 = vshrl.u32 %v1464, 7
  %v1466 = vsub.s32 %v1463, %v1465
  %v1467 = vrot.slane %v1446, %v1466
  %v1469 = vunpack.c.l.s4 1983009808
  %v1470 = vunpack.c.0.s8 %v1469
  %v1471 = vlaneseq
  %v1472 = vshrl.u32 %v1471, 7
  %v1473 = vsub.s32 %v1470, %v1472
  %v1474 = vrot.slane %v1460, %v1473
  %v1475 = vcombine.high %v1467, %v1467
  %v1476 = vcombine.high %v1447, %v1447
  %v1478 = vunpack.c.l.s4 1983009808
  %v1479 = vunpack.c.0.s8 %v1478
  %v1480 = vlaneseq
  %v1481 = vshrl.u32 %v1480, 7
  %v1482 = vsub.s32 %v1479, %v1481
  %v1483 = vrot.slane %v1447, %v1482
  %v1485 = vunpack.c.l.s4 1983009808
  %v1486 = vunpack.c.0.s8 %v1485
  %v1487 = vlaneseq
  %v1488 = vshrl.u32 %v1487, 7
  %v1489 = vsub.s32 %v1486, %v1488
  %v1490 = vrot.slane %v1476, %v1489
  %v1491 = vcombine.high %v1483, %v1483
  %1492 = vrot.lane.b32.xlu0 %v1467, 1
  %v1493 = vpop.permute.xlu0 %1492
  %1494 = vrot.lane.b32.xlu0 %v1475, 1
  %v1495 = vpop.permute.xlu0 %1494
  %1496 = vrot.lane.b32.xlu0 %v1474, 1
  %v1497 = vpop.permute.xlu0 %1496
  %1498 = vrot.lane.b32.xlu0 %v1483, 1
  %v1499 = vpop.permute.xlu0 %1498
  %1500 = vrot.lane.b32.xlu0 %v1491, 1
  %v1501 = vpop.permute.xlu0 %1500
  %1502 = vrot.lane.b32.xlu0 %v1490, 1
  %v1503 = vpop.permute.xlu0 %1502
  %v1504 = vsel %vm1338, %v1493, %v1495
  %v1505 = vsel %vm1338, %v1495, %v1497
  %v1506 = vsel %vm1338, %v1499, %v1501
  %v1507 = vsel %vm1338, %v1501, %v1503
  %v1509 = vsel %vm343, %v1457, 0
  %v1512 = vsel %vm347, %v1504, 0
  %v1515 = vsel %vm347, %v1505, 0
  %v1518 = vsel %vm347, %v1506, 0
  %v1521 = vsel %vm347, %v1507, 0
  %1523 = vmatprep.subr.bf16.mxu0 %v1515
  %1524 = vmatpush1.bf16.msra.mxu0 %v1512
  %1525 = vmatprep.subr.bf16.mxu0 0
  %1526 = vmatpush1.bf16.msra.mxu0 0
  %1527 = vmatprep.subr.bf16.mxu0 0
  %1528 = vmatpush1.bf16.msra.mxu0 0
  %1529 = vmatprep.subr.bf16.mxu0 0
  %1530 = vmatpush1.bf16.msra.mxu0 0
  %1531 = vmatprep.subr.bf16.mxu0 0
  %1532 = vmatpush1.bf16.msra.mxu0 0
  %1533 = vmatprep.subr.bf16.mxu0 0
  %1534 = vmatpush1.bf16.msra.mxu0 0
  %1535 = vmatprep.subr.bf16.mxu0 0
  %1536 = vmatpush1.bf16.msra.mxu0 0
  %1537 = vmatprep.subr.bf16.mxu0 0
  %1538 = vmatpush1.bf16.msra.mxu0 0
  %1539 = vmatprep.subr.bf16.mxu0 0
  %1540 = vmatpush1.bf16.msra.mxu0 0
  %1541 = vmatprep.subr.bf16.mxu0 0
  %1542 = vmatpush1.bf16.msra.mxu0 0
  %1543 = vmatprep.subr.bf16.mxu0 0
  %1544 = vmatpush1.bf16.msra.mxu0 0
  %1545 = vmatprep.subr.bf16.mxu0 0
  %1546 = vmatpush1.bf16.msra.mxu0 0
  %1547 = vmatprep.subr.bf16.mxu0 0
  %1548 = vmatpush1.bf16.msra.mxu0 0
  %1549 = vmatprep.subr.bf16.mxu0 0
  %1550 = vmatpush1.bf16.msra.mxu0 0
  %1551 = vmatprep.subr.bf16.mxu0 0
  %1552 = vmatpush1.bf16.msra.mxu0 0
  %1553 = vmatprep.subr.bf16.mxu0 0
  %1554 = vmatpush1.bf16.msra.mxu0 0
  %1555 = vmatprep.mubr.bf16.mxu0 0
  %1556 = vmatmul.mubr.bf16.gmra.mrb[0].mxu0 %v1509
  %v1557 = vpop.f32.mrb[0].mxu0
  %v1558 = vadd.f32 0.0, %v1557
  %v1559 = vpop.f32.mrb[0].mxu0
  %v1560 = vadd.f32 0.0, %v1559
  %v1561 = vpop.f32.mrb[0].mxu0
  %v1562 = vpop.f32.mrb[0].mxu0
  %1563 = vdwg.mxu0
  %1564 = vmatprep.subr.bf16.mxu0 %v1521
  %1565 = vmatpush1.bf16.msra.mxu0 %v1518
  %1566 = vmatprep.subr.bf16.mxu0 0
  %1567 = vmatpush1.bf16.msra.mxu0 0
  %1568 = vmatprep.subr.bf16.mxu0 0
  %1569 = vmatpush1.bf16.msra.mxu0 0
  %1570 = vmatprep.subr.bf16.mxu0 0
  %1571 = vmatpush1.bf16.msra.mxu0 0
  %1572 = vmatprep.subr.bf16.mxu0 0
  %1573 = vmatpush1.bf16.msra.mxu0 0
  %1574 = vmatprep.subr.bf16.mxu0 0
  %1575 = vmatpush1.bf16.msra.mxu0 0
  %1576 = vmatprep.subr.bf16.mxu0 0
  %1577 = vmatpush1.bf16.msra.mxu0 0
  %1578 = vmatprep.subr.bf16.mxu0 0
  %1579 = vmatpush1.bf16.msra.mxu0 0
  %1580 = vmatprep.subr.bf16.mxu0 0
  %1581 = vmatpush1.bf16.msra.mxu0 0
  %1582 = vmatprep.subr.bf16.mxu0 0
  %1583 = vmatpush1.bf16.msra.mxu0 0
  %1584 = vmatprep.subr.bf16.mxu0 0
  %1585 = vmatpush1.bf16.msra.mxu0 0
  %1586 = vmatprep.subr.bf16.mxu0 0
  %1587 = vmatpush1.bf16.msra.mxu0 0
  %1588 = vmatprep.subr.bf16.mxu0 0
  %1589 = vmatpush1.bf16.msra.mxu0 0
  %1590 = vmatprep.subr.bf16.mxu0 0
  %1591 = vmatpush1.bf16.msra.mxu0 0
  %1592 = vmatprep.subr.bf16.mxu0 0
  %1593 = vmatpush1.bf16.msra.mxu0 0
  %1594 = vmatprep.subr.bf16.mxu0 0
  %1595 = vmatpush1.bf16.msra.mxu0 0
  %1596 = vmatprep.mubr.bf16.mxu0 0
  %1597 = vmatmul.mubr.bf16.gmra.mrb[0].mxu0 %v1509
  %v1598 = vpop.f32.mrb[0].mxu0
  %v1599 = vadd.f32 0.0, %v1598
  %v1600 = vpop.f32.mrb[0].mxu0
  %v1601 = vadd.f32 0.0, %v1600
  %v1602 = vpop.f32.mrb[0].mxu0
  %v1603 = vpop.f32.mrb[0].mxu0
  %1604 = vdwg.mxu0
  %v1605 = vadd.f32 %v1440, %v1558
  %v1606 = vadd.f32 %v1441, %v1560
  %v1607 = vadd.f32 %v1442, %v1599
  %v1608 = vadd.f32 %v1443, %v1601
  %s1609 = scalar_lea.vmem %s2, 8
  %v1610 = vld [vmem:[%s1609] sm:$0x3]
  %v1611 = vld [vmem:[%s0 + $0x2] sm:$0xff]
  %v1612 = vld [vmem:[%s0 + $0xa] sm:$0xf]
  %v1616 = vunpack.c.l.s4 1983009808
  %v1617 = vunpack.c.0.s8 %v1616
  %v1618 = vlaneseq
  %v1619 = vshrl.u32 %v1618, 7
  %v1620 = vsub.s32 %v1617, %v1619
  %v1621 = vrot.slane %v1611, %v1620
  %v1622 = vcombine.high %v1621, %v1621
  %v1624 = vunpack.c.l.s4 1983009808
  %v1625 = vunpack.c.0.s8 %v1624
  %v1626 = vlaneseq
  %v1627 = vshrl.u32 %v1626, 7
  %v1628 = vsub.s32 %v1625, %v1627
  %v1629 = vrot.slane %v1612, %v1628
  %v1630 = vcombine.high %v1629, %v1629
  %v1632 = vsel %vm343, %v1610, 0
  %v1635 = vsel %vm347, %v1621, 0
  %v1638 = vsel %vm347, %v1622, 0
  %v1641 = vsel %vm347, %v1629, 0
  %v1644 = vsel %vm347, %v1630, 0
  %1646 = vmatprep.subr.bf16.mxu0 %v1638
  %1647 = vmatpush1.bf16.msra.mxu0 %v1635
  %1648 = vmatprep.subr.bf16.mxu0 0
  %1649 = vmatpush1.bf16.msra.mxu0 0
  %1650 = vmatprep.subr.bf16.mxu0 0
  %1651 = vmatpush1.bf16.msra.mxu0 0
  %1652 = vmatprep.subr.bf16.mxu0 0
  %1653 = vmatpush1.bf16.msra.mxu0 0
  %1654 = vmatprep.subr.bf16.mxu0 0
  %1655 = vmatpush1.bf16.msra.mxu0 0
  %1656 = vmatprep.subr.bf16.mxu0 0
  %1657 = vmatpush1.bf16.msra.mxu0 0
  %1658 = vmatprep.subr.bf16.mxu0 0
  %1659 = vmatpush1.bf16.msra.mxu0 0
  %1660 = vmatprep.subr.bf16.mxu0 0
  %1661 = vmatpush1.bf16.msra.mxu0 0
  %1662 = vmatprep.subr.bf16.mxu0 0
  %1663 = vmatpush1.bf16.msra.mxu0 0
  %1664 = vmatprep.subr.bf16.mxu0 0
  %1665 = vmatpush1.bf16.msra.mxu0 0
  %1666 = vmatprep.subr.bf16.mxu0 0
  %1667 = vmatpush1.bf16.msra.mxu0 0
  %1668 = vmatprep.subr.bf16.mxu0 0
  %1669 = vmatpush1.bf16.msra.mxu0 0
  %1670 = vmatprep.subr.bf16.mxu0 0
  %1671 = vmatpush1.bf16.msra.mxu0 0
  %1672 = vmatprep.subr.bf16.mxu0 0
  %1673 = vmatpush1.bf16.msra.mxu0 0
  %1674 = vmatprep.subr.bf16.mxu0 0
  %1675 = vmatpush1.bf16.msra.mxu0 0
  %1676 = vmatprep.subr.bf16.mxu0 0
  %1677 = vmatpush1.bf16.msra.mxu0 0
  %1678 = vmatprep.mubr.bf16.mxu0 0
  %1679 = vmatmul.mubr.bf16.gmra.mrb[0].mxu0 %v1632
  %v1680 = vpop.f32.mrb[0].mxu0
  %v1681 = vadd.f32 0.0, %v1680
  %v1682 = vpop.f32.mrb[0].mxu0
  %v1683 = vadd.f32 0.0, %v1682
  %v1684 = vpop.f32.mrb[0].mxu0
  %v1685 = vpop.f32.mrb[0].mxu0
  %1686 = vdwg.mxu0
  %1687 = vmatprep.subr.bf16.mxu0 %v1644
  %1688 = vmatpush1.bf16.msra.mxu0 %v1641
  %1689 = vmatprep.subr.bf16.mxu0 0
  %1690 = vmatpush1.bf16.msra.mxu0 0
  %1691 = vmatprep.subr.bf16.mxu0 0
  %1692 = vmatpush1.bf16.msra.mxu0 0
  %1693 = vmatprep.subr.bf16.mxu0 0
  %1694 = vmatpush1.bf16.msra.mxu0 0
  %1695 = vmatprep.subr.bf16.mxu0 0
  %1696 = vmatpush1.bf16.msra.mxu0 0
  %1697 = vmatprep.subr.bf16.mxu0 0
  %1698 = vmatpush1.bf16.msra.mxu0 0
  %1699 = vmatprep.subr.bf16.mxu0 0
  %1700 = vmatpush1.bf16.msra.mxu0 0
  %1701 = vmatprep.subr.bf16.mxu0 0
  %1702 = vmatpush1.bf16.msra.mxu0 0
  %1703 = vmatprep.subr.bf16.mxu0 0
  %1704 = vmatpush1.bf16.msra.mxu0 0
  %1705 = vmatprep.subr.bf16.mxu0 0
  %1706 = vmatpush1.bf16.msra.mxu0 0
  %1707 = vmatprep.subr.bf16.mxu0 0
  %1708 = vmatpush1.bf16.msra.mxu0 0
  %1709 = vmatprep.subr.bf16.mxu0 0
  %1710 = vmatpush1.bf16.msra.mxu0 0
  %1711 = vmatprep.subr.bf16.mxu0 0
  %1712 = vmatpush1.bf16.msra.mxu0 0
  %1713 = vmatprep.subr.bf16.mxu0 0
  %1714 = vmatpush1.bf16.msra.mxu0 0
  %1715 = vmatprep.subr.bf16.mxu0 0
  %1716 = vmatpush1.bf16.msra.mxu0 0
  %1717 = vmatprep.subr.bf16.mxu0 0
  %1718 = vmatpush1.bf16.msra.mxu0 0
  %1719 = vmatprep.mubr.bf16.mxu0 0
  %1720 = vmatmul.mubr.bf16.gmra.mrb[0].mxu0 %v1632
  %v1721 = vpop.f32.mrb[0].mxu0
  %v1722 = vadd.f32 0.0, %v1721
  %v1723 = vpop.f32.mrb[0].mxu0
  %v1724 = vadd.f32 0.0, %v1723
  %v1725 = vpop.f32.mrb[0].mxu0
  %v1726 = vpop.f32.mrb[0].mxu0
  %1727 = vdwg.mxu0
  %v1728 = vadd.f32 %v1605, %v1681
  %v1729 = vadd.f32 %v1606, %v1683
  %v1730 = vadd.f32 %v1607, %v1722
  %v1731 = vadd.f32 %v1608, %v1724
  %v1732 = vld [vmem:[%s1 + $0x2] sm:$0xff]
  %v1733 = vld [vmem:[%s1 + $0xa] sm:$0xf]
  %v1736 = vunpack.c.l.s4 1983009808
  %v1737 = vunpack.c.0.s8 %v1736
  %v1738 = vlaneseq
  %v1739 = vshrl.u32 %v1738, 7
  %v1740 = vsub.s32 %v1737, %v1739
  %v1741 = vrot.slane %v1610, %v1740
  %1742 = vrot.lane.b32.xlu0 %v1741, 124
  %v1743 = vpop.permute.xlu0 %1742
  %v1747 = vunpack.c.l.s4 1983009808
  %v1748 = vunpack.c.0.s8 %v1747
  %v1749 = vlaneseq
  %v1750 = vshrl.u32 %v1749, 7
  %v1751 = vsub.s32 %v1748, %v1750
  %v1752 = vrot.slane %v1732, %v1751
  %v1753 = vcombine.high %v1752, %v1752
  %v1755 = vunpack.c.l.s4 1983009808
  %v1756 = vunpack.c.0.s8 %v1755
  %v1757 = vlaneseq
  %v1758 = vshrl.u32 %v1757, 7
  %v1759 = vsub.s32 %v1756, %v1758
  %v1760 = vrot.slane %v1733, %v1759
  %v1761 = vcombine.high %v1760, %v1760
  %v1763 = vsel %vm343, %v1743, 0
  %v1766 = vsel %vm347, %v1752, 0
  %v1769 = vsel %vm347, %v1753, 0
  %v1772 = vsel %vm347, %v1760, 0
  %v1775 = vsel %vm347, %v1761, 0
  %1777 = vmatprep.subr.bf16.mxu0 %v1769
  %1778 = vmatpush1.bf16.msra.mxu0 %v1766
  %1779 = vmatprep.subr.bf16.mxu0 0
  %1780 = vmatpush1.bf16.msra.mxu0 0
  %1781 = vmatprep.subr.bf16.mxu0 0
  %1782 = vmatpush1.bf16.msra.mxu0 0
  %1783 = vmatprep.subr.bf16.mxu0 0
  %1784 = vmatpush1.bf16.msra.mxu0 0
  %1785 = vmatprep.subr.bf16.mxu0 0
  %1786 = vmatpush1.bf16.msra.mxu0 0
  %1787 = vmatprep.subr.bf16.mxu0 0
  %1788 = vmatpush1.bf16.msra.mxu0 0
  %1789 = vmatprep.subr.bf16.mxu0 0
  %1790 = vmatpush1.bf16.msra.mxu0 0
  %1791 = vmatprep.subr.bf16.mxu0 0
  %1792 = vmatpush1.bf16.msra.mxu0 0
  %1793 = vmatprep.subr.bf16.mxu0 0
  %1794 = vmatpush1.bf16.msra.mxu0 0
  %1795 = vmatprep.subr.bf16.mxu0 0
  %1796 = vmatpush1.bf16.msra.mxu0 0
  %1797 = vmatprep.subr.bf16.mxu0 0
  %1798 = vmatpush1.bf16.msra.mxu0 0
  %1799 = vmatprep.subr.bf16.mxu0 0
  %1800 = vmatpush1.bf16.msra.mxu0 0
  %1801 = vmatprep.subr.bf16.mxu0 0
  %1802 = vmatpush1.bf16.msra.mxu0 0
  %1803 = vmatprep.subr.bf16.mxu0 0
  %1804 = vmatpush1.bf16.msra.mxu0 0
  %1805 = vmatprep.subr.bf16.mxu0 0
  %1806 = vmatpush1.bf16.msra.mxu0 0
  %1807 = vmatprep.subr.bf16.mxu0 0
  %1808 = vmatpush1.bf16.msra.mxu0 0
  %1809 = vmatprep.mubr.bf16.mxu0 0
  %1810 = vmatmul.mubr.bf16.gmra.mrb[0].mxu0 %v1763
  %v1811 = vpop.f32.mrb[0].mxu0
  %v1812 = vadd.f32 0.0, %v1811
  %v1813 = vpop.f32.mrb[0].mxu0
  %v1814 = vadd.f32 0.0, %v1813
  %v1815 = vpop.f32.mrb[0].mxu0
  %v1816 = vpop.f32.mrb[0].mxu0
  %1817 = vdwg.mxu0
  %1818 = vmatprep.subr.bf16.mxu0 %v1775
  %1819 = vmatpush1.bf16.msra.mxu0 %v1772
  %1820 = vmatprep.subr.bf16.mxu0 0
  %1821 = vmatpush1.bf16.msra.mxu0 0
  %1822 = vmatprep.subr.bf16.mxu0 0
  %1823 = vmatpush1.bf16.msra.mxu0 0
  %1824 = vmatprep.subr.bf16.mxu0 0
  %1825 = vmatpush1.bf16.msra.mxu0 0
  %1826 = vmatprep.subr.bf16.mxu0 0
  %1827 = vmatpush1.bf16.msra.mxu0 0
  %1828 = vmatprep.subr.bf16.mxu0 0
  %1829 = vmatpush1.bf16.msra.mxu0 0
  %1830 = vmatprep.subr.bf16.mxu0 0
  %1831 = vmatpush1.bf16.msra.mxu0 0
  %1832 = vmatprep.subr.bf16.mxu0 0
  %1833 = vmatpush1.bf16.msra.mxu0 0
  %1834 = vmatprep.subr.bf16.mxu0 0
  %1835 = vmatpush1.bf16.msra.mxu0 0
  %1836 = vmatprep.subr.bf16.mxu0 0
  %1837 = vmatpush1.bf16.msra.mxu0 0
  %1838 = vmatprep.subr.bf16.mxu0 0
  %1839 = vmatpush1.bf16.msra.mxu0 0
  %1840 = vmatprep.subr.bf16.mxu0 0
  %1841 = vmatpush1.bf16.msra.mxu0 0
  %1842 = vmatprep.subr.bf16.mxu0 0
  %1843 = vmatpush1.bf16.msra.mxu0 0
  %1844 = vmatprep.subr.bf16.mxu0 0
  %1845 = vmatpush1.bf16.msra.mxu0 0
  %1846 = vmatprep.subr.bf16.mxu0 0
  %1847 = vmatpush1.bf16.msra.mxu0 0
  %1848 = vmatprep.subr.bf16.mxu0 0
  %1849 = vmatpush1.bf16.msra.mxu0 0
  %1850 = vmatprep.mubr.bf16.mxu0 0
  %1851 = vmatmul.mubr.bf16.gmra.mrb[0].mxu0 %v1763
  %v1852 = vpop.f32.mrb[0].mxu0
  %v1853 = vadd.f32 0.0, %v1852
  %v1854 = vpop.f32.mrb[0].mxu0
  %v1855 = vadd.f32 0.0, %v1854
  %v1856 = vpop.f32.mrb[0].mxu0
  %v1857 = vpop.f32.mrb[0].mxu0
  %1858 = vdwg.mxu0
  %v1859 = vadd.f32 %v1728, %v1812
  %v1860 = vadd.f32 %v1729, %v1814
  %v1861 = vadd.f32 %v1730, %v1853
  %v1862 = vadd.f32 %v1731, %v1855
  %s1863 = scalar_lea.vmem %s2, 10
  %v1864 = vld [vmem:[%s1863] sm:$0x3]
  %v1865 = vld [vmem:[%s0 + $0x2] sm:$0xff]
  %v1866 = vld [vmem:[%s0 + $0xa] sm:$0x3f]
  %1867 = vrot.lane.b32.xlu0 %v934, 1
  %v1868 = vpop.permute.xlu0 %1867
  %1869 = vrot.lane.b32.xlu0 %v942, 1
  %v1870 = vpop.permute.xlu0 %1869
  %v1871 = vrot.slane %v1868, 6
  %v1872 = vrot.slane %v1870, 6
  %v1873 = vsel %vm1338, %v1871, %v1868
  %v1874 = vsel %vm271, %v1871, %v1872
  %v1875 = vsel %vm1338, %v1874, %v1870
  %v1878 = vmul.bf16 %v1865, %v1873
  %v1879 = vmul.bf16 %v1866, %v1875
  %v1882 = vcombine.high %v1878, %v1878
  %v1884 = vunpack.c.l.s4 1983009808
  %v1885 = vunpack.c.0.s8 %v1884
  %v1886 = vlaneseq
  %v1887 = vshrl.u32 %v1886, 7
  %v1888 = vsub.s32 %v1885, %v1887
  %v1889 = vrot.slane %v1878, %v1888
  %v1891 = vunpack.c.l.s4 1983009808
  %v1892 = vunpack.c.0.s8 %v1891
  %v1893 = vlaneseq
  %v1894 = vshrl.u32 %v1893, 7
  %v1895 = vsub.s32 %v1892, %v1894
  %v1896 = vrot.slane %v1882, %v1895
  %v1897 = vcombine.high %v1889, %v1889
  %v1898 = vcombine.high %v1879, %v1879
  %v1900 = vunpack.c.l.s4 1983009808
  %v1901 = vunpack.c.0.s8 %v1900
  %v1902 = vlaneseq
  %v1903 = vshrl.u32 %v1902, 7
  %v1904 = vsub.s32 %v1901, %v1903
  %v1905 = vrot.slane %v1879, %v1904
  %v1907 = vunpack.c.l.s4 1983009808
  %v1908 = vunpack.c.0.s8 %v1907
  %v1909 = vlaneseq
  %v1910 = vshrl.u32 %v1909, 7
  %v1911 = vsub.s32 %v1908, %v1910
  %v1912 = vrot.slane %v1898, %v1911
  %v1913 = vcombine.high %v1905, %v1905
  %1914 = vrot.lane.b32.xlu0 %v1889, 127
  %v1915 = vpop.permute.xlu0 %1914
  %1916 = vrot.lane.b32.xlu0 %v1897, 127
  %v1917 = vpop.permute.xlu0 %1916
  %1918 = vrot.lane.b32.xlu0 %v1896, 127
  %v1919 = vpop.permute.xlu0 %1918
  %1920 = vrot.lane.b32.xlu0 %v1905, 127
  %v1921 = vpop.permute.xlu0 %1920
  %1922 = vrot.lane.b32.xlu0 %v1913, 127
  %v1923 = vpop.permute.xlu0 %1922
  %1924 = vrot.lane.b32.xlu0 %v1912, 127
  %v1925 = vpop.permute.xlu0 %1924
  %v1926 = vsel %vm1284, %v1915, %v1917
  %v1927 = vsel %vm1284, %v1917, %v1919
  %v1928 = vsel %vm1284, %v1921, %v1923
  %v1929 = vsel %vm1284, %v1923, %v1925
  %v1931 = vsel %vm343, %v1864, 0
  %v1934 = vsel %vm347, %v1926, 0
  %v1937 = vsel %vm347, %v1927, 0
  %v1940 = vsel %vm347, %v1928, 0
  %v1943 = vsel %vm347, %v1929, 0
  %1945 = vmatprep.subr.bf16.mxu0 %v1937
  %1946 = vmatpush1.bf16.msra.mxu0 %v1934
  %1947 = vmatprep.subr.bf16.mxu0 0
  %1948 = vmatpush1.bf16.msra.mxu0 0
  %1949 = vmatprep.subr.bf16.mxu0 0
  %1950 = vmatpush1.bf16.msra.mxu0 0
  %1951 = vmatprep.subr.bf16.mxu0 0
  %1952 = vmatpush1.bf16.msra.mxu0 0
  %1953 = vmatprep.subr.bf16.mxu0 0
  %1954 = vmatpush1.bf16.msra.mxu0 0
  %1955 = vmatprep.subr.bf16.mxu0 0
  %1956 = vmatpush1.bf16.msra.mxu0 0
  %1957 = vmatprep.subr.bf16.mxu0 0
  %1958 = vmatpush1.bf16.msra.mxu0 0
  %1959 = vmatprep.subr.bf16.mxu0 0
  %1960 = vmatpush1.bf16.msra.mxu0 0
  %1961 = vmatprep.subr.bf16.mxu0 0
  %1962 = vmatpush1.bf16.msra.mxu0 0
  %1963 = vmatprep.subr.bf16.mxu0 0
  %1964 = vmatpush1.bf16.msra.mxu0 0
  %1965 = vmatprep.subr.bf16.mxu0 0
  %1966 = vmatpush1.bf16.msra.mxu0 0
  %1967 = vmatprep.subr.bf16.mxu0 0
  %1968 = vmatpush1.bf16.msra.mxu0 0
  %1969 = vmatprep.subr.bf16.mxu0 0
  %1970 = vmatpush1.bf16.msra.mxu0 0
  %1971 = vmatprep.subr.bf16.mxu0 0
  %1972 = vmatpush1.bf16.msra.mxu0 0
  %1973 = vmatprep.subr.bf16.mxu0 0
  %1974 = vmatpush1.bf16.msra.mxu0 0
  %1975 = vmatprep.subr.bf16.mxu0 0
  %1976 = vmatpush1.bf16.msra.mxu0 0
  %1977 = vmatprep.mubr.bf16.mxu0 0
  %1978 = vmatmul.mubr.bf16.gmra.mrb[0].mxu0 %v1931
  %v1979 = vpop.f32.mrb[0].mxu0
  %v1980 = vadd.f32 0.0, %v1979
  %v1981 = vpop.f32.mrb[0].mxu0
  %v1982 = vadd.f32 0.0, %v1981
  %v1983 = vpop.f32.mrb[0].mxu0
  %v1984 = vpop.f32.mrb[0].mxu0
  %1985 = vdwg.mxu0
  %1986 = vmatprep.subr.bf16.mxu0 %v1943
  %1987 = vmatpush1.bf16.msra.mxu0 %v1940
  %1988 = vmatprep.subr.bf16.mxu0 0
  %1989 = vmatpush1.bf16.msra.mxu0 0
  %1990 = vmatprep.subr.bf16.mxu0 0
  %1991 = vmatpush1.bf16.msra.mxu0 0
  %1992 = vmatprep.subr.bf16.mxu0 0
  %1993 = vmatpush1.bf16.msra.mxu0 0
  %1994 = vmatprep.subr.bf16.mxu0 0
  %1995 = vmatpush1.bf16.msra.mxu0 0
  %1996 = vmatprep.subr.bf16.mxu0 0
  %1997 = vmatpush1.bf16.msra.mxu0 0
  %1998 = vmatprep.subr.bf16.mxu0 0
  %1999 = vmatpush1.bf16.msra.mxu0 0
  %2000 = vmatprep.subr.bf16.mxu0 0
  %2001 = vmatpush1.bf16.msra.mxu0 0
  %2002 = vmatprep.subr.bf16.mxu0 0
  %2003 = vmatpush1.bf16.msra.mxu0 0
  %2004 = vmatprep.subr.bf16.mxu0 0
  %2005 = vmatpush1.bf16.msra.mxu0 0
  %2006 = vmatprep.subr.bf16.mxu0 0
  %2007 = vmatpush1.bf16.msra.mxu0 0
  %2008 = vmatprep.subr.bf16.mxu0 0
  %2009 = vmatpush1.bf16.msra.mxu0 0
  %2010 = vmatprep.subr.bf16.mxu0 0
  %2011 = vmatpush1.bf16.msra.mxu0 0
  %2012 = vmatprep.subr.bf16.mxu0 0
  %2013 = vmatpush1.bf16.msra.mxu0 0
  %2014 = vmatprep.subr.bf16.mxu0 0
  %2015 = vmatpush1.bf16.msra.mxu0 0
  %2016 = vmatprep.subr.bf16.mxu0 0
  %2017 = vmatpush1.bf16.msra.mxu0 0
  %2018 = vmatprep.mubr.bf16.mxu0 0
  %2019 = vmatmul.mubr.bf16.gmra.mrb[0].mxu0 %v1931
  %v2020 = vpop.f32.mrb[0].mxu0
  %v2021 = vadd.f32 0.0, %v2020
  %v2022 = vpop.f32.mrb[0].mxu0
  %v2023 = vadd.f32 0.0, %v2022
  %v2024 = vpop.f32.mrb[0].mxu0
  %v2025 = vpop.f32.mrb[0].mxu0
  %2026 = vdwg.mxu0
  %v2027 = vadd.f32 %v1859, %v1980
  %v2028 = vadd.f32 %v1860, %v1982
  %v2029 = vadd.f32 %v1861, %v2021
  %v2030 = vadd.f32 %v1862, %v2023
  %v2031 = vld [vmem:[%s1 + $0x2] sm:$0xff]
  %v2032 = vld [vmem:[%s1 + $0xa] sm:$0x3f]
  %v2033 = vmul.bf16 %v2031, %v1873
  %v2034 = vmul.bf16 %v2032, %v1875
  %v2037 = vunpack.c.l.s4 1983009808
  %v2038 = vunpack.c.0.s8 %v2037
  %v2039 = vlaneseq
  %v2040 = vshrl.u32 %v2039, 7
  %v2041 = vsub.s32 %v2038, %v2040
  %v2042 = vrot.slane %v1864, %v2041
  %2043 = vrot.lane.b32.xlu0 %v2042, 124
  %v2044 = vpop.permute.xlu0 %2043
  %v2047 = vcombine.high %v2033, %v2033
  %v2049 = vunpack.c.l.s4 1983009808
  %v2050 = vunpack.c.0.s8 %v2049
  %v2051 = vlaneseq
  %v2052 = vshrl.u32 %v2051, 7
  %v2053 = vsub.s32 %v2050, %v2052
  %v2054 = vrot.slane %v2033, %v2053
  %v2056 = vunpack.c.l.s4 1983009808
  %v2057 = vunpack.c.0.s8 %v2056
  %v2058 = vlaneseq
  %v2059 = vshrl.u32 %v2058, 7
  %v2060 = vsub.s32 %v2057, %v2059
  %v2061 = vrot.slane %v2047, %v2060
  %v2062 = vcombine.high %v2054, %v2054
  %v2063 = vcombine.high %v2034, %v2034
  %v2065 = vunpack.c.l.s4 1983009808
  %v2066 = vunpack.c.0.s8 %v2065
  %v2067 = vlaneseq
  %v2068 = vshrl.u32 %v2067, 7
  %v2069 = vsub.s32 %v2066, %v2068
  %v2070 = vrot.slane %v2034, %v2069
  %v2072 = vunpack.c.l.s4 1983009808
  %v2073 = vunpack.c.0.s8 %v2072
  %v2074 = vlaneseq
  %v2075 = vshrl.u32 %v2074, 7
  %v2076 = vsub.s32 %v2073, %v2075
  %v2077 = vrot.slane %v2063, %v2076
  %v2078 = vcombine.high %v2070, %v2070
  %2079 = vrot.lane.b32.xlu0 %v2054, 127
  %v2080 = vpop.permute.xlu0 %2079
  %2081 = vrot.lane.b32.xlu0 %v2062, 127
  %v2082 = vpop.permute.xlu0 %2081
  %2083 = vrot.lane.b32.xlu0 %v2061, 127
  %v2084 = vpop.permute.xlu0 %2083
  %2085 = vrot.lane.b32.xlu0 %v2070, 127
  %v2086 = vpop.permute.xlu0 %2085
  %2087 = vrot.lane.b32.xlu0 %v2078, 127
  %v2088 = vpop.permute.xlu0 %2087
  %2089 = vrot.lane.b32.xlu0 %v2077, 127
  %v2090 = vpop.permute.xlu0 %2089
  %v2091 = vsel %vm1284, %v2080, %v2082
  %v2092 = vsel %vm1284, %v2082, %v2084
  %v2093 = vsel %vm1284, %v2086, %v2088
  %v2094 = vsel %vm1284, %v2088, %v2090
  %v2096 = vsel %vm343, %v2044, 0
  %v2099 = vsel %vm347, %v2091, 0
  %v2102 = vsel %vm347, %v2092, 0
  %v2105 = vsel %vm347, %v2093, 0
  %v2108 = vsel %vm347, %v2094, 0
  %2110 = vmatprep.subr.bf16.mxu0 %v2102
  %2111 = vmatpush1.bf16.msra.mxu0 %v2099
  %2112 = vmatprep.subr.bf16.mxu0 0
  %2113 = vmatpush1.bf16.msra.mxu0 0
  %2114 = vmatprep.subr.bf16.mxu0 0
  %2115 = vmatpush1.bf16.msra.mxu0 0
  %2116 = vmatprep.subr.bf16.mxu0 0
  %2117 = vmatpush1.bf16.msra.mxu0 0
  %2118 = vmatprep.subr.bf16.mxu0 0
  %2119 = vmatpush1.bf16.msra.mxu0 0
  %2120 = vmatprep.subr.bf16.mxu0 0
  %2121 = vmatpush1.bf16.msra.mxu0 0
  %2122 = vmatprep.subr.bf16.mxu0 0
  %2123 = vmatpush1.bf16.msra.mxu0 0
  %2124 = vmatprep.subr.bf16.mxu0 0
  %2125 = vmatpush1.bf16.msra.mxu0 0
  %2126 = vmatprep.subr.bf16.mxu0 0
  %2127 = vmatpush1.bf16.msra.mxu0 0
  %2128 = vmatprep.subr.bf16.mxu0 0
  %2129 = vmatpush1.bf16.msra.mxu0 0
  %2130 = vmatprep.subr.bf16.mxu0 0
  %2131 = vmatpush1.bf16.msra.mxu0 0
  %2132 = vmatprep.subr.bf16.mxu0 0
  %2133 = vmatpush1.bf16.msra.mxu0 0
  %2134 = vmatprep.subr.bf16.mxu0 0
  %2135 = vmatpush1.bf16.msra.mxu0 0
  %2136 = vmatprep.subr.bf16.mxu0 0
  %2137 = vmatpush1.bf16.msra.mxu0 0
  %2138 = vmatprep.subr.bf16.mxu0 0
  %2139 = vmatpush1.bf16.msra.mxu0 0
  %2140 = vmatprep.subr.bf16.mxu0 0
  %2141 = vmatpush1.bf16.msra.mxu0 0
  %2142 = vmatprep.mubr.bf16.mxu0 0
  %2143 = vmatmul.mubr.bf16.gmra.mrb[0].mxu0 %v2096
  %v2144 = vpop.f32.mrb[0].mxu0
  %v2145 = vadd.f32 0.0, %v2144
  %v2146 = vpop.f32.mrb[0].mxu0
  %v2147 = vadd.f32 0.0, %v2146
  %v2148 = vpop.f32.mrb[0].mxu0
  %v2149 = vpop.f32.mrb[0].mxu0
  %2150 = vdwg.mxu0
  %2151 = vmatprep.subr.bf16.mxu0 %v2108
  %2152 = vmatpush1.bf16.msra.mxu0 %v2105
  %2153 = vmatprep.subr.bf16.mxu0 0
  %2154 = vmatpush1.bf16.msra.mxu0 0
  %2155 = vmatprep.subr.bf16.mxu0 0
  %2156 = vmatpush1.bf16.msra.mxu0 0
  %2157 = vmatprep.subr.bf16.mxu0 0
  %2158 = vmatpush1.bf16.msra.mxu0 0
  %2159 = vmatprep.subr.bf16.mxu0 0
  %2160 = vmatpush1.bf16.msra.mxu0 0
  %2161 = vmatprep.subr.bf16.mxu0 0
  %2162 = vmatpush1.bf16.msra.mxu0 0
  %2163 = vmatprep.subr.bf16.mxu0 0
  %2164 = vmatpush1.bf16.msra.mxu0 0
  %2165 = vmatprep.subr.bf16.mxu0 0
  %2166 = vmatpush1.bf16.msra.mxu0 0
  %2167 = vmatprep.subr.bf16.mxu0 0
  %2168 = vmatpush1.bf16.msra.mxu0 0
  %2169 = vmatprep.subr.bf16.mxu0 0
  %2170 = vmatpush1.bf16.msra.mxu0 0
  %2171 = vmatprep.subr.bf16.mxu0 0
  %2172 = vmatpush1.bf16.msra.mxu0 0
  %2173 = vmatprep.subr.bf16.mxu0 0
  %2174 = vmatpush1.bf16.msra.mxu0 0
  %2175 = vmatprep.subr.bf16.mxu0 0
  %2176 = vmatpush1.bf16.msra.mxu0 0
  %2177 = vmatprep.subr.bf16.mxu0 0
  %2178 = vmatpush1.bf16.msra.mxu0 0
  %2179 = vmatprep.subr.bf16.mxu0 0
  %2180 = vmatpush1.bf16.msra.mxu0 0
  %2181 = vmatprep.subr.bf16.mxu0 0
  %2182 = vmatpush1.bf16.msra.mxu0 0
  %2183 = vmatprep.mubr.bf16.mxu0 0
  %2184 = vmatmul.mubr.bf16.gmra.mrb[0].mxu0 %v2096
  %v2185 = vpop.f32.mrb[0].mxu0
  %v2186 = vadd.f32 0.0, %v2185
  %v2187 = vpop.f32.mrb[0].mxu0
  %v2188 = vadd.f32 0.0, %v2187
  %v2189 = vpop.f32.mrb[0].mxu0
  %v2190 = vpop.f32.mrb[0].mxu0
  %2191 = vdwg.mxu0
  %v2192 = vadd.f32 %v2027, %v2145
  %v2193 = vadd.f32 %v2028, %v2147
  %v2194 = vadd.f32 %v2029, %v2186
  %v2195 = vadd.f32 %v2030, %v2188
  %s2196 = scalar_lea.vmem %s2, 12
  %v2197 = vld [vmem:[%s2196] sm:$0x3]
  %v2198 = vld [vmem:[%s0 + $0x2] sm:$0xff]
  %v2199 = vld [vmem:[%s0 + $0xa] sm:$0x3f]
  %2200 = vrot.lane.b32.xlu0 %v254, 15
  %v2201 = vpop.permute.xlu0 %2200
  %2202 = vrot.lane.b32.xlu0 %v262, 15
  %v2203 = vpop.permute.xlu0 %2202
  %v2204 = vrot.slane %v2201, 6
  %v2205 = vrot.slane %v2203, 6
  %v2206 = vsel %vm1003, %v2204, %v2201
  %v2207 = vsel %vm271, %v2204, %v2205
  %v2208 = vsel %vm1003, %v2207, %v2203
  %v2211 = vmul.bf16 %v2198, %v2206
  %v2212 = vmul.bf16 %v2199, %v2208
  %v2215 = vcombine.high %v2211, %v2211
  %v2217 = vunpack.c.l.s4 1983009808
  %v2218 = vunpack.c.0.s8 %v2217
  %v2219 = vlaneseq
  %v2220 = vshrl.u32 %v2219, 7
  %v2221 = vsub.s32 %v2218, %v2220
  %v2222 = vrot.slane %v2211, %v2221
  %v2224 = vunpack.c.l.s4 1983009808
  %v2225 = vunpack.c.0.s8 %v2224
  %v2226 = vlaneseq
  %v2227 = vshrl.u32 %v2226, 7
  %v2228 = vsub.s32 %v2225, %v2227
  %v2229 = vrot.slane %v2215, %v2228
  %v2230 = vcombine.high %v2222, %v2222
  %v2231 = vcombine.high %v2212, %v2212
  %v2233 = vunpack.c.l.s4 1983009808
  %v2234 = vunpack.c.0.s8 %v2233
  %v2235 = vlaneseq
  %v2236 = vshrl.u32 %v2235, 7
  %v2237 = vsub.s32 %v2234, %v2236
  %v2238 = vrot.slane %v2212, %v2237
  %v2240 = vunpack.c.l.s4 1983009808
  %v2241 = vunpack.c.0.s8 %v2240
  %v2242 = vlaneseq
  %v2243 = vshrl.u32 %v2242, 7
  %v2244 = vsub.s32 %v2241, %v2243
  %v2245 = vrot.slane %v2231, %v2244
  %v2246 = vcombine.high %v2238, %v2238
  %2247 = vrot.lane.b32.xlu0 %v2222, 113
  %v2248 = vpop.permute.xlu0 %2247
  %2249 = vrot.lane.b32.xlu0 %v2230, 113
  %v2250 = vpop.permute.xlu0 %2249
  %2251 = vrot.lane.b32.xlu0 %v2229, 113
  %v2252 = vpop.permute.xlu0 %2251
  %2253 = vrot.lane.b32.xlu0 %v2238, 113
  %v2254 = vpop.permute.xlu0 %2253
  %2255 = vrot.lane.b32.xlu0 %v2246, 113
  %v2256 = vpop.permute.xlu0 %2255
  %2257 = vrot.lane.b32.xlu0 %v2245, 113
  %v2258 = vpop.permute.xlu0 %2257
  %v2259 = vsel %vm949, %v2248, %v2250
  %v2260 = vsel %vm949, %v2250, %v2252
  %v2261 = vsel %vm949, %v2254, %v2256
  %v2262 = vsel %vm949, %v2256, %v2258
  %v2264 = vsel %vm343, %v2197, 0
  %v2267 = vsel %vm347, %v2259, 0
  %v2270 = vsel %vm347, %v2260, 0
  %v2273 = vsel %vm347, %v2261, 0
  %v2276 = vsel %vm347, %v2262, 0
  %2278 = vmatprep.subr.bf16.mxu0 %v2270
  %2279 = vmatpush1.bf16.msra.mxu0 %v2267
  %2280 = vmatprep.subr.bf16.mxu0 0
  %2281 = vmatpush1.bf16.msra.mxu0 0
  %2282 = vmatprep.subr.bf16.mxu0 0
  %2283 = vmatpush1.bf16.msra.mxu0 0
  %2284 = vmatprep.subr.bf16.mxu0 0
  %2285 = vmatpush1.bf16.msra.mxu0 0
  %2286 = vmatprep.subr.bf16.mxu0 0
  %2287 = vmatpush1.bf16.msra.mxu0 0
  %2288 = vmatprep.subr.bf16.mxu0 0
  %2289 = vmatpush1.bf16.msra.mxu0 0
  %2290 = vmatprep.subr.bf16.mxu0 0
  %2291 = vmatpush1.bf16.msra.mxu0 0
  %2292 = vmatprep.subr.bf16.mxu0 0
  %2293 = vmatpush1.bf16.msra.mxu0 0
  %2294 = vmatprep.subr.bf16.mxu0 0
  %2295 = vmatpush1.bf16.msra.mxu0 0
  %2296 = vmatprep.subr.bf16.mxu0 0
  %2297 = vmatpush1.bf16.msra.mxu0 0
  %2298 = vmatprep.subr.bf16.mxu0 0
  %2299 = vmatpush1.bf16.msra.mxu0 0
  %2300 = vmatprep.subr.bf16.mxu0 0
  %2301 = vmatpush1.bf16.msra.mxu0 0
  %2302 = vmatprep.subr.bf16.mxu0 0
  %2303 = vmatpush1.bf16.msra.mxu0 0
  %2304 = vmatprep.subr.bf16.mxu0 0
  %2305 = vmatpush1.bf16.msra.mxu0 0
  %2306 = vmatprep.subr.bf16.mxu0 0
  %2307 = vmatpush1.bf16.msra.mxu0 0
  %2308 = vmatprep.subr.bf16.mxu0 0
  %2309 = vmatpush1.bf16.msra.mxu0 0
  %2310 = vmatprep.mubr.bf16.mxu0 0
  %2311 = vmatmul.mubr.bf16.gmra.mrb[0].mxu0 %v2264
  %v2312 = vpop.f32.mrb[0].mxu0
  %v2313 = vadd.f32 0.0, %v2312
  %v2314 = vpop.f32.mrb[0].mxu0
  %v2315 = vadd.f32 0.0, %v2314
  %v2316 = vpop.f32.mrb[0].mxu0
  %v2317 = vpop.f32.mrb[0].mxu0
  %2318 = vdwg.mxu0
  %2319 = vmatprep.subr.bf16.mxu0 %v2276
  %2320 = vmatpush1.bf16.msra.mxu0 %v2273
  %2321 = vmatprep.subr.bf16.mxu0 0
  %2322 = vmatpush1.bf16.msra.mxu0 0
  %2323 = vmatprep.subr.bf16.mxu0 0
  %2324 = vmatpush1.bf16.msra.mxu0 0
  %2325 = vmatprep.subr.bf16.mxu0 0
  %2326 = vmatpush1.bf16.msra.mxu0 0
  %2327 = vmatprep.subr.bf16.mxu0 0
  %2328 = vmatpush1.bf16.msra.mxu0 0
  %2329 = vmatprep.subr.bf16.mxu0 0
  %2330 = vmatpush1.bf16.msra.mxu0 0
  %2331 = vmatprep.subr.bf16.mxu0 0
  %2332 = vmatpush1.bf16.msra.mxu0 0
  %2333 = vmatprep.subr.bf16.mxu0 0
  %2334 = vmatpush1.bf16.msra.mxu0 0
  %2335 = vmatprep.subr.bf16.mxu0 0
  %2336 = vmatpush1.bf16.msra.mxu0 0
  %2337 = vmatprep.subr.bf16.mxu0 0
  %2338 = vmatpush1.bf16.msra.mxu0 0
  %2339 = vmatprep.subr.bf16.mxu0 0
  %2340 = vmatpush1.bf16.msra.mxu0 0
  %2341 = vmatprep.subr.bf16.mxu0 0
  %2342 = vmatpush1.bf16.msra.mxu0 0
  %2343 = vmatprep.subr.bf16.mxu0 0
  %2344 = vmatpush1.bf16.msra.mxu0 0
  %2345 = vmatprep.subr.bf16.mxu0 0
  %2346 = vmatpush1.bf16.msra.mxu0 0
  %2347 = vmatprep.subr.bf16.mxu0 0
  %2348 = vmatpush1.bf16.msra.mxu0 0
  %2349 = vmatprep.subr.bf16.mxu0 0
  %2350 = vmatpush1.bf16.msra.mxu0 0
  %2351 = vmatprep.mubr.bf16.mxu0 0
  %2352 = vmatmul.mubr.bf16.gmra.mrb[0].mxu0 %v2264
  %v2353 = vpop.f32.mrb[0].mxu0
  %v2354 = vadd.f32 0.0, %v2353
  %v2355 = vpop.f32.mrb[0].mxu0
  %v2356 = vadd.f32 0.0, %v2355
  %v2357 = vpop.f32.mrb[0].mxu0
  %v2358 = vpop.f32.mrb[0].mxu0
  %2359 = vdwg.mxu0
  %v2360 = vadd.f32 %v2192, %v2313
  %v2361 = vadd.f32 %v2193, %v2315
  %v2362 = vadd.f32 %v2194, %v2354
  %v2363 = vadd.f32 %v2195, %v2356
  %v2364 = vld [vmem:[%s1 + $0x2] sm:$0xff]
  %v2365 = vld [vmem:[%s1 + $0xa] sm:$0x3f]
  %v2366 = vmul.bf16 %v2364, %v2206
  %v2367 = vmul.bf16 %v2365, %v2208
  %v2370 = vunpack.c.l.s4 1983009808
  %v2371 = vunpack.c.0.s8 %v2370
  %v2372 = vlaneseq
  %v2373 = vshrl.u32 %v2372, 7
  %v2374 = vsub.s32 %v2371, %v2373
  %v2375 = vrot.slane %v2197, %v2374
  %2376 = vrot.lane.b32.xlu0 %v2375, 124
  %v2377 = vpop.permute.xlu0 %2376
  %v2380 = vcombine.high %v2366, %v2366
  %v2382 = vunpack.c.l.s4 1983009808
  %v2383 = vunpack.c.0.s8 %v2382
  %v2384 = vlaneseq
  %v2385 = vshrl.u32 %v2384, 7
  %v2386 = vsub.s32 %v2383, %v2385
  %v2387 = vrot.slane %v2366, %v2386
  %v2389 = vunpack.c.l.s4 1983009808
  %v2390 = vunpack.c.0.s8 %v2389
  %v2391 = vlaneseq
  %v2392 = vshrl.u32 %v2391, 7
  %v2393 = vsub.s32 %v2390, %v2392
  %v2394 = vrot.slane %v2380, %v2393
  %v2395 = vcombine.high %v2387, %v2387
  %v2396 = vcombine.high %v2367, %v2367
  %v2398 = vunpack.c.l.s4 1983009808
  %v2399 = vunpack.c.0.s8 %v2398
  %v2400 = vlaneseq
  %v2401 = vshrl.u32 %v2400, 7
  %v2402 = vsub.s32 %v2399, %v2401
  %v2403 = vrot.slane %v2367, %v2402
  %v2405 = vunpack.c.l.s4 1983009808
  %v2406 = vunpack.c.0.s8 %v2405
  %v2407 = vlaneseq
  %v2408 = vshrl.u32 %v2407, 7
  %v2409 = vsub.s32 %v2406, %v2408
  %v2410 = vrot.slane %v2396, %v2409
  %v2411 = vcombine.high %v2403, %v2403
  %2412 = vrot.lane.b32.xlu0 %v2387, 113
  %v2413 = vpop.permute.xlu0 %2412
  %2414 = vrot.lane.b32.xlu0 %v2395, 113
  %v2415 = vpop.permute.xlu0 %2414
  %2416 = vrot.lane.b32.xlu0 %v2394, 113
  %v2417 = vpop.permute.xlu0 %2416
  %2418 = vrot.lane.b32.xlu0 %v2403, 113
  %v2419 = vpop.permute.xlu0 %2418
  %2420 = vrot.lane.b32.xlu0 %v2411, 113
  %v2421 = vpop.permute.xlu0 %2420
  %2422 = vrot.lane.b32.xlu0 %v2410, 113
  %v2423 = vpop.permute.xlu0 %2422
  %v2424 = vsel %vm949, %v2413, %v2415
  %v2425 = vsel %vm949, %v2415, %v2417
  %v2426 = vsel %vm949, %v2419, %v2421
  %v2427 = vsel %vm949, %v2421, %v2423
  %v2429 = vsel %vm343, %v2377, 0
  %v2432 = vsel %vm347, %v2424, 0
  %v2435 = vsel %vm347, %v2425, 0
  %v2438 = vsel %vm347, %v2426, 0
  %v2441 = vsel %vm347, %v2427, 0
  %2443 = vmatprep.subr.bf16.mxu0 %v2435
  %2444 = vmatpush1.bf16.msra.mxu0 %v2432
  %2445 = vmatprep.subr.bf16.mxu0 0
  %2446 = vmatpush1.bf16.msra.mxu0 0
  %2447 = vmatprep.subr.bf16.mxu0 0
  %2448 = vmatpush1.bf16.msra.mxu0 0
  %2449 = vmatprep.subr.bf16.mxu0 0
  %2450 = vmatpush1.bf16.msra.mxu0 0
  %2451 = vmatprep.subr.bf16.mxu0 0
  %2452 = vmatpush1.bf16.msra.mxu0 0
  %2453 = vmatprep.subr.bf16.mxu0 0
  %2454 = vmatpush1.bf16.msra.mxu0 0
  %2455 = vmatprep.subr.bf16.mxu0 0
  %2456 = vmatpush1.bf16.msra.mxu0 0
  %2457 = vmatprep.subr.bf16.mxu0 0
  %2458 = vmatpush1.bf16.msra.mxu0 0
  %2459 = vmatprep.subr.bf16.mxu0 0
  %2460 = vmatpush1.bf16.msra.mxu0 0
  %2461 = vmatprep.subr.bf16.mxu0 0
  %2462 = vmatpush1.bf16.msra.mxu0 0
  %2463 = vmatprep.subr.bf16.mxu0 0
  %2464 = vmatpush1.bf16.msra.mxu0 0
  %2465 = vmatprep.subr.bf16.mxu0 0
  %2466 = vmatpush1.bf16.msra.mxu0 0
  %2467 = vmatprep.subr.bf16.mxu0 0
  %2468 = vmatpush1.bf16.msra.mxu0 0
  %2469 = vmatprep.subr.bf16.mxu0 0
  %2470 = vmatpush1.bf16.msra.mxu0 0
  %2471 = vmatprep.subr.bf16.mxu0 0
  %2472 = vmatpush1.bf16.msra.mxu0 0
  %2473 = vmatprep.subr.bf16.mxu0 0
  %2474 = vmatpush1.bf16.msra.mxu0 0
  %2475 = vmatprep.mubr.bf16.mxu0 0
  %2476 = vmatmul.mubr.bf16.gmra.mrb[0].mxu0 %v2429
  %v2477 = vpop.f32.mrb[0].mxu0
  %v2478 = vadd.f32 0.0, %v2477
  %v2479 = vpop.f32.mrb[0].mxu0
  %v2480 = vadd.f32 0.0, %v2479
  %v2481 = vpop.f32.mrb[0].mxu0
  %v2482 = vpop.f32.mrb[0].mxu0
  %2483 = vdwg.mxu0
  %2484 = vmatprep.subr.bf16.mxu0 %v2441
  %2485 = vmatpush1.bf16.msra.mxu0 %v2438
  %2486 = vmatprep.subr.bf16.mxu0 0
  %2487 = vmatpush1.bf16.msra.mxu0 0
  %2488 = vmatprep.subr.bf16.mxu0 0
  %2489 = vmatpush1.bf16.msra.mxu0 0
  %2490 = vmatprep.subr.bf16.mxu0 0
  %2491 = vmatpush1.bf16.msra.mxu0 0
  %2492 = vmatprep.subr.bf16.mxu0 0
  %2493 = vmatpush1.bf16.msra.mxu0 0
  %2494 = vmatprep.subr.bf16.mxu0 0
  %2495 = vmatpush1.bf16.msra.mxu0 0
  %2496 = vmatprep.subr.bf16.mxu0 0
  %2497 = vmatpush1.bf16.msra.mxu0 0
  %2498 = vmatprep.subr.bf16.mxu0 0
  %2499 = vmatpush1.bf16.msra.mxu0 0
  %2500 = vmatprep.subr.bf16.mxu0 0
  %2501 = vmatpush1.bf16.msra.mxu0 0
  %2502 = vmatprep.subr.bf16.mxu0 0
  %2503 = vmatpush1.bf16.msra.mxu0 0
  %2504 = vmatprep.subr.bf16.mxu0 0
  %2505 = vmatpush1.bf16.msra.mxu0 0
  %2506 = vmatprep.subr.bf16.mxu0 0
  %2507 = vmatpush1.bf16.msra.mxu0 0
  %2508 = vmatprep.subr.bf16.mxu0 0
  %2509 = vmatpush1.bf16.msra.mxu0 0
  %2510 = vmatprep.subr.bf16.mxu0 0
  %2511 = vmatpush1.bf16.msra.mxu0 0
  %2512 = vmatprep.subr.bf16.mxu0 0
  %2513 = vmatpush1.bf16.msra.mxu0 0
  %2514 = vmatprep.subr.bf16.mxu0 0
  %2515 = vmatpush1.bf16.msra.mxu0 0
  %2516 = vmatprep.mubr.bf16.mxu0 0
  %2517 = vmatmul.mubr.bf16.gmra.mrb[0].mxu0 %v2429
  %v2518 = vpop.f32.mrb[0].mxu0
  %v2519 = vadd.f32 0.0, %v2518
  %v2520 = vpop.f32.mrb[0].mxu0
  %v2521 = vadd.f32 0.0, %v2520
  %v2522 = vpop.f32.mrb[0].mxu0
  %v2523 = vpop.f32.mrb[0].mxu0
  %2524 = vdwg.mxu0
  %v2525 = vadd.f32 %v2360, %v2478
  %v2526 = vadd.f32 %v2361, %v2480
  %v2527 = vadd.f32 %v2362, %v2519
  %v2528 = vadd.f32 %v2363, %v2521
  %s2529 = scalar_lea.vmem %s2, 14
  %v2530 = vld [vmem:[%s2529] sm:$0x3]
  %v2531 = vld [vmem:[%s0 + $0x2] sm:$0xff]
  %v2532 = vld [vmem:[%s0 + $0xa] sm:$0x3f]
  %v2535 = vcombine.high %v2531, %v2531
  %v2537 = vunpack.c.l.s4 1983009808
  %v2538 = vunpack.c.0.s8 %v2537
  %v2539 = vlaneseq
  %v2540 = vshrl.u32 %v2539, 7
  %v2541 = vsub.s32 %v2538, %v2540
  %v2542 = vrot.slane %v2531, %v2541
  %v2544 = vunpack.c.l.s4 1983009808
  %v2545 = vunpack.c.0.s8 %v2544
  %v2546 = vlaneseq
  %v2547 = vshrl.u32 %v2546, 7
  %v2548 = vsub.s32 %v2545, %v2547
  %v2549 = vrot.slane %v2535, %v2548
  %v2550 = vcombine.high %v2542, %v2542
  %v2551 = vcombine.high %v2532, %v2532
  %v2553 = vunpack.c.l.s4 1983009808
  %v2554 = vunpack.c.0.s8 %v2553
  %v2555 = vlaneseq
  %v2556 = vshrl.u32 %v2555, 7
  %v2557 = vsub.s32 %v2554, %v2556
  %v2558 = vrot.slane %v2532, %v2557
  %v2560 = vunpack.c.l.s4 1983009808
  %v2561 = vunpack.c.0.s8 %v2560
  %v2562 = vlaneseq
  %v2563 = vshrl.u32 %v2562, 7
  %v2564 = vsub.s32 %v2561, %v2563
  %v2565 = vrot.slane %v2551, %v2564
  %v2566 = vcombine.high %v2558, %v2558
  %2567 = vrot.lane.b32.xlu0 %v2542, 112
  %v2568 = vpop.permute.xlu0 %2567
  %2569 = vrot.lane.b32.xlu0 %v2550, 112
  %v2570 = vpop.permute.xlu0 %2569
  %2571 = vrot.lane.b32.xlu0 %v2549, 112
  %v2572 = vpop.permute.xlu0 %2571
  %2573 = vrot.lane.b32.xlu0 %v2558, 112
  %v2574 = vpop.permute.xlu0 %2573
  %2575 = vrot.lane.b32.xlu0 %v2566, 112
  %v2576 = vpop.permute.xlu0 %2575
  %2577 = vrot.lane.b32.xlu0 %v2565, 112
  %v2578 = vpop.permute.xlu0 %2577
  %vm2579 = vcmask 916480
  %v2580 = vsel %vm2579, %v2568, %v2570
  %v2581 = vsel %vm2579, %v2570, %v2572
  %v2582 = vsel %vm2579, %v2574, %v2576
  %v2583 = vsel %vm2579, %v2576, %v2578
  %v2585 = vsel %vm343, %v2530, 0
  %v2588 = vsel %vm347, %v2580, 0
  %v2591 = vsel %vm347, %v2581, 0
  %v2594 = vsel %vm347, %v2582, 0
  %v2597 = vsel %vm347, %v2583, 0
  %2599 = vmatprep.subr.bf16.mxu0 %v2591
  %2600 = vmatpush1.bf16.msra.mxu0 %v2588
  %2601 = vmatprep.subr.bf16.mxu0 0
  %2602 = vmatpush1.bf16.msra.mxu0 0
  %2603 = vmatprep.subr.bf16.mxu0 0
  %2604 = vmatpush1.bf16.msra.mxu0 0
  %2605 = vmatprep.subr.bf16.mxu0 0
  %2606 = vmatpush1.bf16.msra.mxu0 0
  %2607 = vmatprep.subr.bf16.mxu0 0
  %2608 = vmatpush1.bf16.msra.mxu0 0
  %2609 = vmatprep.subr.bf16.mxu0 0
  %2610 = vmatpush1.bf16.msra.mxu0 0
  %2611 = vmatprep.subr.bf16.mxu0 0
  %2612 = vmatpush1.bf16.msra.mxu0 0
  %2613 = vmatprep.subr.bf16.mxu0 0
  %2614 = vmatpush1.bf16.msra.mxu0 0
  %2615 = vmatprep.subr.bf16.mxu0 0
  %2616 = vmatpush1.bf16.msra.mxu0 0
  %2617 = vmatprep.subr.bf16.mxu0 0
  %2618 = vmatpush1.bf16.msra.mxu0 0
  %2619 = vmatprep.subr.bf16.mxu0 0
  %2620 = vmatpush1.bf16.msra.mxu0 0
  %2621 = vmatprep.subr.bf16.mxu0 0
  %2622 = vmatpush1.bf16.msra.mxu0 0
  %2623 = vmatprep.subr.bf16.mxu0 0
  %2624 = vmatpush1.bf16.msra.mxu0 0
  %2625 = vmatprep.subr.bf16.mxu0 0
  %2626 = vmatpush1.bf16.msra.mxu0 0
  %2627 = vmatprep.subr.bf16.mxu0 0
  %2628 = vmatpush1.bf16.msra.mxu0 0
  %2629 = vmatprep.subr.bf16.mxu0 0
  %2630 = vmatpush1.bf16.msra.mxu0 0
  %2631 = vmatprep.mubr.bf16.mxu0 0
  %2632 = vmatmul.mubr.bf16.gmra.mrb[0].mxu0 %v2585
  %v2633 = vpop.f32.mrb[0].mxu0
  %v2634 = vadd.f32 0.0, %v2633
  %v2635 = vpop.f32.mrb[0].mxu0
  %v2636 = vadd.f32 0.0, %v2635
  %v2637 = vpop.f32.mrb[0].mxu0
  %v2638 = vpop.f32.mrb[0].mxu0
  %2639 = vdwg.mxu0
  %2640 = vmatprep.subr.bf16.mxu0 %v2597
  %2641 = vmatpush1.bf16.msra.mxu0 %v2594
  %2642 = vmatprep.subr.bf16.mxu0 0
  %2643 = vmatpush1.bf16.msra.mxu0 0
  %2644 = vmatprep.subr.bf16.mxu0 0
  %2645 = vmatpush1.bf16.msra.mxu0 0
  %2646 = vmatprep.subr.bf16.mxu0 0
  %2647 = vmatpush1.bf16.msra.mxu0 0
  %2648 = vmatprep.subr.bf16.mxu0 0
  %2649 = vmatpush1.bf16.msra.mxu0 0
  %2650 = vmatprep.subr.bf16.mxu0 0
  %2651 = vmatpush1.bf16.msra.mxu0 0
  %2652 = vmatprep.subr.bf16.mxu0 0
  %2653 = vmatpush1.bf16.msra.mxu0 0
  %2654 = vmatprep.subr.bf16.mxu0 0
  %2655 = vmatpush1.bf16.msra.mxu0 0
  %2656 = vmatprep.subr.bf16.mxu0 0
  %2657 = vmatpush1.bf16.msra.mxu0 0
  %2658 = vmatprep.subr.bf16.mxu0 0
  %2659 = vmatpush1.bf16.msra.mxu0 0
  %2660 = vmatprep.subr.bf16.mxu0 0
  %2661 = vmatpush1.bf16.msra.mxu0 0
  %2662 = vmatprep.subr.bf16.mxu0 0
  %2663 = vmatpush1.bf16.msra.mxu0 0
  %2664 = vmatprep.subr.bf16.mxu0 0
  %2665 = vmatpush1.bf16.msra.mxu0 0
  %2666 = vmatprep.subr.bf16.mxu0 0
  %2667 = vmatpush1.bf16.msra.mxu0 0
  %2668 = vmatprep.subr.bf16.mxu0 0
  %2669 = vmatpush1.bf16.msra.mxu0 0
  %2670 = vmatprep.subr.bf16.mxu0 0
  %2671 = vmatpush1.bf16.msra.mxu0 0
  %2672 = vmatprep.mubr.bf16.mxu0 0
  %2673 = vmatmul.mubr.bf16.gmra.mrb[0].mxu0 %v2585
  %v2674 = vpop.f32.mrb[0].mxu0
  %v2675 = vadd.f32 0.0, %v2674
  %v2676 = vpop.f32.mrb[0].mxu0
  %v2677 = vadd.f32 0.0, %v2676
  %v2678 = vpop.f32.mrb[0].mxu0
  %v2679 = vpop.f32.mrb[0].mxu0
  %2680 = vdwg.mxu0
  %v2681 = vadd.f32 %v2525, %v2634
  %v2682 = vadd.f32 %v2526, %v2636
  %v2683 = vadd.f32 %v2527, %v2675
  %v2684 = vadd.f32 %v2528, %v2677
  %v2685 = vld [vmem:[%s1 + $0x2] sm:$0xff]
  %v2686 = vld [vmem:[%s1 + $0xa] sm:$0x3f]
  %v2689 = vunpack.c.l.s4 1983009808
  %v2690 = vunpack.c.0.s8 %v2689
  %v2691 = vlaneseq
  %v2692 = vshrl.u32 %v2691, 7
  %v2693 = vsub.s32 %v2690, %v2692
  %v2694 = vrot.slane %v2530, %v2693
  %2695 = vrot.lane.b32.xlu0 %v2694, 124
  %v2696 = vpop.permute.xlu0 %2695
  %v2699 = vcombine.high %v2685, %v2685
  %v2701 = vunpack.c.l.s4 1983009808
  %v2702 = vunpack.c.0.s8 %v2701
  %v2703 = vlaneseq
  %v2704 = vshrl.u32 %v2703, 7
  %v2705 = vsub.s32 %v2702, %v2704
  %v2706 = vrot.slane %v2685, %v2705
  %v2708 = vunpack.c.l.s4 1983009808
  %v2709 = vunpack.c.0.s8 %v2708
  %v2710 = vlaneseq
  %v2711 = vshrl.u32 %v2710, 7
  %v2712 = vsub.s32 %v2709, %v2711
  %v2713 = vrot.slane %v2699, %v2712
  %v2714 = vcombine.high %v2706, %v2706
  %v2715 = vcombine.high %v2686, %v2686
  %v2717 = vunpack.c.l.s4 1983009808
  %v2718 = vunpack.c.0.s8 %v2717
  %v2719 = vlaneseq
  %v2720 = vshrl.u32 %v2719, 7
  %v2721 = vsub.s32 %v2718, %v2720
  %v2722 = vrot.slane %v2686, %v2721
  %v2724 = vunpack.c.l.s4 1983009808
  %v2725 = vunpack.c.0.s8 %v2724
  %v2726 = vlaneseq
  %v2727 = vshrl.u32 %v2726, 7
  %v2728 = vsub.s32 %v2725, %v2727
  %v2729 = vrot.slane %v2715, %v2728
  %v2730 = vcombine.high %v2722, %v2722
  %2731 = vrot.lane.b32.xlu0 %v2706, 112
  %v2732 = vpop.permute.xlu0 %2731
  %2733 = vrot.lane.b32.xlu0 %v2714, 112
  %v2734 = vpop.permute.xlu0 %2733
  %2735 = vrot.lane.b32.xlu0 %v2713, 112
  %v2736 = vpop.permute.xlu0 %2735
  %2737 = vrot.lane.b32.xlu0 %v2722, 112
  %v2738 = vpop.permute.xlu0 %2737
  %2739 = vrot.lane.b32.xlu0 %v2730, 112
  %v2740 = vpop.permute.xlu0 %2739
  %2741 = vrot.lane.b32.xlu0 %v2729, 112
  %v2742 = vpop.permute.xlu0 %2741
  %v2743 = vsel %vm2579, %v2732, %v2734
  %v2744 = vsel %vm2579, %v2734, %v2736
  %v2745 = vsel %vm2579, %v2738, %v2740
  %v2746 = vsel %vm2579, %v2740, %v2742
  %v2748 = vsel %vm343, %v2696, 0
  %v2751 = vsel %vm347, %v2743, 0
  %v2754 = vsel %vm347, %v2744, 0
  %v2757 = vsel %vm347, %v2745, 0
  %v2760 = vsel %vm347, %v2746, 0
  %2762 = vmatprep.subr.bf16.mxu0 %v2754
  %2763 = vmatpush1.bf16.msra.mxu0 %v2751
  %2764 = vmatprep.subr.bf16.mxu0 0
  %2765 = vmatpush1.bf16.msra.mxu0 0
  %2766 = vmatprep.subr.bf16.mxu0 0
  %2767 = vmatpush1.bf16.msra.mxu0 0
  %2768 = vmatprep.subr.bf16.mxu0 0
  %2769 = vmatpush1.bf16.msra.mxu0 0
  %2770 = vmatprep.subr.bf16.mxu0 0
  %2771 = vmatpush1.bf16.msra.mxu0 0
  %2772 = vmatprep.subr.bf16.mxu0 0
  %2773 = vmatpush1.bf16.msra.mxu0 0
  %2774 = vmatprep.subr.bf16.mxu0 0
  %2775 = vmatpush1.bf16.msra.mxu0 0
  %2776 = vmatprep.subr.bf16.mxu0 0
  %2777 = vmatpush1.bf16.msra.mxu0 0
  %2778 = vmatprep.subr.bf16.mxu0 0
  %2779 = vmatpush1.bf16.msra.mxu0 0
  %2780 = vmatprep.subr.bf16.mxu0 0
  %2781 = vmatpush1.bf16.msra.mxu0 0
  %2782 = vmatprep.subr.bf16.mxu0 0
  %2783 = vmatpush1.bf16.msra.mxu0 0
  %2784 = vmatprep.subr.bf16.mxu0 0
  %2785 = vmatpush1.bf16.msra.mxu0 0
  %2786 = vmatprep.subr.bf16.mxu0 0
  %2787 = vmatpush1.bf16.msra.mxu0 0
  %2788 = vmatprep.subr.bf16.mxu0 0
  %2789 = vmatpush1.bf16.msra.mxu0 0
  %2790 = vmatprep.subr.bf16.mxu0 0
  %2791 = vmatpush1.bf16.msra.mxu0 0
  %2792 = vmatprep.subr.bf16.mxu0 0
  %2793 = vmatpush1.bf16.msra.mxu0 0
  %2794 = vmatprep.mubr.bf16.mxu0 0
  %2795 = vmatmul.mubr.bf16.gmra.mrb[0].mxu0 %v2748
  %v2796 = vpop.f32.mrb[0].mxu0
  %v2797 = vadd.f32 0.0, %v2796
  %v2798 = vpop.f32.mrb[0].mxu0
  %v2799 = vadd.f32 0.0, %v2798
  %v2800 = vpop.f32.mrb[0].mxu0
  %v2801 = vpop.f32.mrb[0].mxu0
  %2802 = vdwg.mxu0
  %2803 = vmatprep.subr.bf16.mxu0 %v2760
  %2804 = vmatpush1.bf16.msra.mxu0 %v2757
  %2805 = vmatprep.subr.bf16.mxu0 0
  %2806 = vmatpush1.bf16.msra.mxu0 0
  %2807 = vmatprep.subr.bf16.mxu0 0
  %2808 = vmatpush1.bf16.msra.mxu0 0
  %2809 = vmatprep.subr.bf16.mxu0 0
  %2810 = vmatpush1.bf16.msra.mxu0 0
  %2811 = vmatprep.subr.bf16.mxu0 0
  %2812 = vmatpush1.bf16.msra.mxu0 0
  %2813 = vmatprep.subr.bf16.mxu0 0
  %2814 = vmatpush1.bf16.msra.mxu0 0
  %2815 = vmatprep.subr.bf16.mxu0 0
  %2816 = vmatpush1.bf16.msra.mxu0 0
  %2817 = vmatprep.subr.bf16.mxu0 0
  %2818 = vmatpush1.bf16.msra.mxu0 0
  %2819 = vmatprep.subr.bf16.mxu0 0
  %2820 = vmatpush1.bf16.msra.mxu0 0
  %2821 = vmatprep.subr.bf16.mxu0 0
  %2822 = vmatpush1.bf16.msra.mxu0 0
  %2823 = vmatprep.subr.bf16.mxu0 0
  %2824 = vmatpush1.bf16.msra.mxu0 0
  %2825 = vmatprep.subr.bf16.mxu0 0
  %2826 = vmatpush1.bf16.msra.mxu0 0
  %2827 = vmatprep.subr.bf16.mxu0 0
  %2828 = vmatpush1.bf16.msra.mxu0 0
  %2829 = vmatprep.subr.bf16.mxu0 0
  %2830 = vmatpush1.bf16.msra.mxu0 0
  %2831 = vmatprep.subr.bf16.mxu0 0
  %2832 = vmatpush1.bf16.msra.mxu0 0
  %2833 = vmatprep.subr.bf16.mxu0 0
  %2834 = vmatpush1.bf16.msra.mxu0 0
  %2835 = vmatprep.mubr.bf16.mxu0 0
  %2836 = vmatmul.mubr.bf16.gmra.mrb[0].mxu0 %v2748
  %v2837 = vpop.f32.mrb[0].mxu0
  %v2838 = vadd.f32 0.0, %v2837
  %v2839 = vpop.f32.mrb[0].mxu0
  %v2840 = vadd.f32 0.0, %v2839
  %v2841 = vpop.f32.mrb[0].mxu0
  %v2842 = vpop.f32.mrb[0].mxu0
  %2843 = vdwg.mxu0
  %v2844 = vadd.f32 %v2681, %v2797
  %v2845 = vadd.f32 %v2682, %v2799
  %v2846 = vadd.f32 %v2683, %v2838
  %v2847 = vadd.f32 %v2684, %v2840
  %s2848 = scalar_lea.vmem %s2, 16
  %v2849 = vld [vmem:[%s2848] sm:$0x3]
  %v2850 = vld [vmem:[%s0 + $0x2] sm:$0xff]
  %v2851 = vld [vmem:[%s0 + $0xa] sm:$0x3f]
  %2852 = vrot.lane.b32.xlu0 %v934, 17
  %v2853 = vpop.permute.xlu0 %2852
  %2854 = vrot.lane.b32.xlu0 %v942, 17
  %v2855 = vpop.permute.xlu0 %2854
  %v2856 = vrot.slane %v2853, 6
  %v2857 = vrot.slane %v2855, 6
  %v2858 = vsel %vm338, %v2856, %v2853
  %v2859 = vsel %vm271, %v2856, %v2857
  %v2860 = vsel %vm338, %v2859, %v2855
  %v2863 = vmul.bf16 %v2850, %v2858
  %v2864 = vmul.bf16 %v2851, %v2860
  %v2867 = vcombine.high %v2863, %v2863
  %v2869 = vunpack.c.l.s4 1983009808
  %v2870 = vunpack.c.0.s8 %v2869
  %v2871 = vlaneseq
  %v2872 = vshrl.u32 %v2871, 7
  %v2873 = vsub.s32 %v2870, %v2872
  %v2874 = vrot.slane %v2863, %v2873
  %v2876 = vunpack.c.l.s4 1983009808
  %v2877 = vunpack.c.0.s8 %v2876
  %v2878 = vlaneseq
  %v2879 = vshrl.u32 %v2878, 7
  %v2880 = vsub.s32 %v2877, %v2879
  %v2881 = vrot.slane %v2867, %v2880
  %v2882 = vcombine.high %v2874, %v2874
  %v2883 = vcombine.high %v2864, %v2864
  %v2885 = vunpack.c.l.s4 1983009808
  %v2886 = vunpack.c.0.s8 %v2885
  %v2887 = vlaneseq
  %v2888 = vshrl.u32 %v2887, 7
  %v2889 = vsub.s32 %v2886, %v2888
  %v2890 = vrot.slane %v2864, %v2889
  %v2892 = vunpack.c.l.s4 1983009808
  %v2893 = vunpack.c.0.s8 %v2892
  %v2894 = vlaneseq
  %v2895 = vshrl.u32 %v2894, 7
  %v2896 = vsub.s32 %v2893, %v2895
  %v2897 = vrot.slane %v2883, %v2896
  %v2898 = vcombine.high %v2890, %v2890
  %2899 = vrot.lane.b32.xlu0 %v2874, 111
  %v2900 = vpop.permute.xlu0 %2899
  %2901 = vrot.lane.b32.xlu0 %v2882, 111
  %v2902 = vpop.permute.xlu0 %2901
  %2903 = vrot.lane.b32.xlu0 %v2881, 111
  %v2904 = vpop.permute.xlu0 %2903
  %2905 = vrot.lane.b32.xlu0 %v2890, 111
  %v2906 = vpop.permute.xlu0 %2905
  %2907 = vrot.lane.b32.xlu0 %v2898, 111
  %v2908 = vpop.permute.xlu0 %2907
  %2909 = vrot.lane.b32.xlu0 %v2897, 111
  %v2910 = vpop.permute.xlu0 %2909
  %v2911 = vsel %vm269, %v2900, %v2902
  %v2912 = vsel %vm269, %v2902, %v2904
  %v2913 = vsel %vm269, %v2906, %v2908
  %v2914 = vsel %vm269, %v2908, %v2910
  %v2916 = vsel %vm343, %v2849, 0
  %v2919 = vsel %vm347, %v2911, 0
  %v2922 = vsel %vm347, %v2912, 0
  %v2925 = vsel %vm347, %v2913, 0
  %v2928 = vsel %vm347, %v2914, 0
  %2930 = vmatprep.subr.bf16.mxu0 %v2922
  %2931 = vmatpush1.bf16.msra.mxu0 %v2919
  %2932 = vmatprep.subr.bf16.mxu0 0
  %2933 = vmatpush1.bf16.msra.mxu0 0
  %2934 = vmatprep.subr.bf16.mxu0 0
  %2935 = vmatpush1.bf16.msra.mxu0 0
  %2936 = vmatprep.subr.bf16.mxu0 0
  %2937 = vmatpush1.bf16.msra.mxu0 0
  %2938 = vmatprep.subr.bf16.mxu0 0
  %2939 = vmatpush1.bf16.msra.mxu0 0
  %2940 = vmatprep.subr.bf16.mxu0 0
  %2941 = vmatpush1.bf16.msra.mxu0 0
  %2942 = vmatprep.subr.bf16.mxu0 0
  %2943 = vmatpush1.bf16.msra.mxu0 0
  %2944 = vmatprep.subr.bf16.mxu0 0
  %2945 = vmatpush1.bf16.msra.mxu0 0
  %2946 = vmatprep.subr.bf16.mxu0 0
  %2947 = vmatpush1.bf16.msra.mxu0 0
  %2948 = vmatprep.subr.bf16.mxu0 0
  %2949 = vmatpush1.bf16.msra.mxu0 0
  %2950 = vmatprep.subr.bf16.mxu0 0
  %2951 = vmatpush1.bf16.msra.mxu0 0
  %2952 = vmatprep.subr.bf16.mxu0 0
  %2953 = vmatpush1.bf16.msra.mxu0 0
  %2954 = vmatprep.subr.bf16.mxu0 0
  %2955 = vmatpush1.bf16.msra.mxu0 0
  %2956 = vmatprep.subr.bf16.mxu0 0
  %2957 = vmatpush1.bf16.msra.mxu0 0
  %2958 = vmatprep.subr.bf16.mxu0 0
  %2959 = vmatpush1.bf16.msra.mxu0 0
  %2960 = vmatprep.subr.bf16.mxu0 0
  %2961 = vmatpush1.bf16.msra.mxu0 0
  %2962 = vmatprep.mubr.bf16.mxu0 0
  %2963 = vmatmul.mubr.bf16.gmra.mrb[0].mxu0 %v2916
  %v2964 = vpop.f32.mrb[0].mxu0
  %v2965 = vadd.f32 0.0, %v2964
  %v2966 = vpop.f32.mrb[0].mxu0
  %v2967 = vadd.f32 0.0, %v2966
  %v2968 = vpop.f32.mrb[0].mxu0
  %v2969 = vpop.f32.mrb[0].mxu0
  %2970 = vdwg.mxu0
  %2971 = vmatprep.subr.bf16.mxu0 %v2928
  %2972 = vmatpush1.bf16.msra.mxu0 %v2925
  %2973 = vmatprep.subr.bf16.mxu0 0
  %2974 = vmatpush1.bf16.msra.mxu0 0
  %2975 = vmatprep.subr.bf16.mxu0 0
  %2976 = vmatpush1.bf16.msra.mxu0 0
  %2977 = vmatprep.subr.bf16.mxu0 0
  %2978 = vmatpush1.bf16.msra.mxu0 0
  %2979 = vmatprep.subr.bf16.mxu0 0
  %2980 = vmatpush1.bf16.msra.mxu0 0
  %2981 = vmatprep.subr.bf16.mxu0 0
  %2982 = vmatpush1.bf16.msra.mxu0 0
  %2983 = vmatprep.subr.bf16.mxu0 0
  %2984 = vmatpush1.bf16.msra.mxu0 0
  %2985 = vmatprep.subr.bf16.mxu0 0
  %2986 = vmatpush1.bf16.msra.mxu0 0
  %2987 = vmatprep.subr.bf16.mxu0 0
  %2988 = vmatpush1.bf16.msra.mxu0 0
  %2989 = vmatprep.subr.bf16.mxu0 0
  %2990 = vmatpush1.bf16.msra.mxu0 0
  %2991 = vmatprep.subr.bf16.mxu0 0
  %2992 = vmatpush1.bf16.msra.mxu0 0
  %2993 = vmatprep.subr.bf16.mxu0 0
  %2994 = vmatpush1.bf16.msra.mxu0 0
  %2995 = vmatprep.subr.bf16.mxu0 0
  %2996 = vmatpush1.bf16.msra.mxu0 0
  %2997 = vmatprep.subr.bf16.mxu0 0
  %2998 = vmatpush1.bf16.msra.mxu0 0
  %2999 = vmatprep.subr.bf16.mxu0 0
  %3000 = vmatpush1.bf16.msra.mxu0 0
  %3001 = vmatprep.subr.bf16.mxu0 0
  %3002 = vmatpush1.bf16.msra.mxu0 0
  %3003 = vmatprep.mubr.bf16.mxu0 0
  %3004 = vmatmul.mubr.bf16.gmra.mrb[0].mxu0 %v2916
  %v3005 = vpop.f32.mrb[0].mxu0
  %v3006 = vadd.f32 0.0, %v3005
  %v3007 = vpop.f32.mrb[0].mxu0
  %v3008 = vadd.f32 0.0, %v3007
  %v3009 = vpop.f32.mrb[0].mxu0
  %v3010 = vpop.f32.mrb[0].mxu0
  %3011 = vdwg.mxu0
  %v3012 = vadd.f32 %v2844, %v2965
  %v3013 = vadd.f32 %v2845, %v2967
  %v3014 = vadd.f32 %v2846, %v3006
  %v3015 = vadd.f32 %v2847, %v3008
  %v3016 = vld [vmem:[%s1 + $0x2] sm:$0xff]
  %v3017 = vld [vmem:[%s1 + $0xa] sm:$0x3f]
  %v3018 = vmul.bf16 %v3016, %v2858
  %v3019 = vmul.bf16 %v3017, %v2860
  %v3022 = vunpack.c.l.s4 1983009808
  %v3023 = vunpack.c.0.s8 %v3022
  %v3024 = vlaneseq
  %v3025 = vshrl.u32 %v3024, 7
  %v3026 = vsub.s32 %v3023, %v3025
  %v3027 = vrot.slane %v2849, %v3026
  %3028 = vrot.lane.b32.xlu0 %v3027, 124
  %v3029 = vpop.permute.xlu0 %3028
  %v3032 = vcombine.high %v3018, %v3018
  %v3034 = vunpack.c.l.s4 1983009808
  %v3035 = vunpack.c.0.s8 %v3034
  %v3036 = vlaneseq
  %v3037 = vshrl.u32 %v3036, 7
  %v3038 = vsub.s32 %v3035, %v3037
  %v3039 = vrot.slane %v3018, %v3038
  %v3041 = vunpack.c.l.s4 1983009808
  %v3042 = vunpack.c.0.s8 %v3041
  %v3043 = vlaneseq
  %v3044 = vshrl.u32 %v3043, 7
  %v3045 = vsub.s32 %v3042, %v3044
  %v3046 = vrot.slane %v3032, %v3045
  %v3047 = vcombine.high %v3039, %v3039
  %v3048 = vcombine.high %v3019, %v3019
  %v3050 = vunpack.c.l.s4 1983009808
  %v3051 = vunpack.c.0.s8 %v3050
  %v3052 = vlaneseq
  %v3053 = vshrl.u32 %v3052, 7
  %v3054 = vsub.s32 %v3051, %v3053
  %v3055 = vrot.slane %v3019, %v3054
  %v3057 = vunpack.c.l.s4 1983009808
  %v3058 = vunpack.c.0.s8 %v3057
  %v3059 = vlaneseq
  %v3060 = vshrl.u32 %v3059, 7
  %v3061 = vsub.s32 %v3058, %v3060
  %v3062 = vrot.slane %v3048, %v3061
  %v3063 = vcombine.high %v3055, %v3055
  %3064 = vrot.lane.b32.xlu0 %v3039, 111
  %v3065 = vpop.permute.xlu0 %3064
  %3066 = vrot.lane.b32.xlu0 %v3047, 111
  %v3067 = vpop.permute.xlu0 %3066
  %3068 = vrot.lane.b32.xlu0 %v3046, 111
  %v3069 = vpop.permute.xlu0 %3068
  %3070 = vrot.lane.b32.xlu0 %v3055, 111
  %v3071 = vpop.permute.xlu0 %3070
  %3072 = vrot.lane.b32.xlu0 %v3063, 111
  %v3073 = vpop.permute.xlu0 %3072
  %3074 = vrot.lane.b32.xlu0 %v3062, 111
  %v3075 = vpop.permute.xlu0 %3074
  %v3076 = vsel %vm269, %v3065, %v3067
  %v3077 = vsel %vm269, %v3067, %v3069
  %v3078 = vsel %vm269, %v3071, %v3073
  %v3079 = vsel %vm269, %v3073, %v3075
  %v3081 = vsel %vm343, %v3029, 0
  %v3084 = vsel %vm347, %v3076, 0
  %v3087 = vsel %vm347, %v3077, 0
  %v3090 = vsel %vm347, %v3078, 0
  %v3093 = vsel %vm347, %v3079, 0
  %3095 = vmatprep.subr.bf16.mxu0 %v3087
  %3096 = vmatpush1.bf16.msra.mxu0 %v3084
  %3097 = vmatprep.subr.bf16.mxu0 0
  %3098 = vmatpush1.bf16.msra.mxu0 0
  %3099 = vmatprep.subr.bf16.mxu0 0
  %3100 = vmatpush1.bf16.msra.mxu0 0
  %3101 = vmatprep.subr.bf16.mxu0 0
  %3102 = vmatpush1.bf16.msra.mxu0 0
  %3103 = vmatprep.subr.bf16.mxu0 0
  %3104 = vmatpush1.bf16.msra.mxu0 0
  %3105 = vmatprep.subr.bf16.mxu0 0
  %3106 = vmatpush1.bf16.msra.mxu0 0
  %3107 = vmatprep.subr.bf16.mxu0 0
  %3108 = vmatpush1.bf16.msra.mxu0 0
  %3109 = vmatprep.subr.bf16.mxu0 0
  %3110 = vmatpush1.bf16.msra.mxu0 0
  %3111 = vmatprep.subr.bf16.mxu0 0
  %3112 = vmatpush1.bf16.msra.mxu0 0
  %3113 = vmatprep.subr.bf16.mxu0 0
  %3114 = vmatpush1.bf16.msra.mxu0 0
  %3115 = vmatprep.subr.bf16.mxu0 0
  %3116 = vmatpush1.bf16.msra.mxu0 0
  %3117 = vmatprep.subr.bf16.mxu0 0
  %3118 = vmatpush1.bf16.msra.mxu0 0
  %3119 = vmatprep.subr.bf16.mxu0 0
  %3120 = vmatpush1.bf16.msra.mxu0 0
  %3121 = vmatprep.subr.bf16.mxu0 0
  %3122 = vmatpush1.bf16.msra.mxu0 0
  %3123 = vmatprep.subr.bf16.mxu0 0
  %3124 = vmatpush1.bf16.msra.mxu0 0
  %3125 = vmatprep.subr.bf16.mxu0 0
  %3126 = vmatpush1.bf16.msra.mxu0 0
  %3127 = vmatprep.mubr.bf16.mxu0 0
  %3128 = vmatmul.mubr.bf16.gmra.mrb[0].mxu0 %v3081
  %v3129 = vpop.f32.mrb[0].mxu0
  %v3130 = vadd.f32 0.0, %v3129
  %v3131 = vpop.f32.mrb[0].mxu0
  %v3132 = vadd.f32 0.0, %v3131
  %v3133 = vpop.f32.mrb[0].mxu0
  %v3134 = vpop.f32.mrb[0].mxu0
  %3135 = vdwg.mxu0
  %3136 = vmatprep.subr.bf16.mxu0 %v3093
  %3137 = vmatpush1.bf16.msra.mxu0 %v3090
  %3138 = vmatprep.subr.bf16.mxu0 0
  %3139 = vmatpush1.bf16.msra.mxu0 0
  %3140 = vmatprep.subr.bf16.mxu0 0
  %3141 = vmatpush1.bf16.msra.mxu0 0
  %3142 = vmatprep.subr.bf16.mxu0 0
  %3143 = vmatpush1.bf16.msra.mxu0 0
  %3144 = vmatprep.subr.bf16.mxu0 0
  %3145 = vmatpush1.bf16.msra.mxu0 0
  %3146 = vmatprep.subr.bf16.mxu0 0
  %3147 = vmatpush1.bf16.msra.mxu0 0
  %3148 = vmatprep.subr.bf16.mxu0 0
  %3149 = vmatpush1.bf16.msra.mxu0 0
  %3150 = vmatprep.subr.bf16.mxu0 0
  %3151 = vmatpush1.bf16.msra.mxu0 0
  %3152 = vmatprep.subr.bf16.mxu0 0
  %3153 = vmatpush1.bf16.msra.mxu0 0
  %3154 = vmatprep.subr.bf16.mxu0 0
  %3155 = vmatpush1.bf16.msra.mxu0 0
  %3156 = vmatprep.subr.bf16.mxu0 0
  %3157 = vmatpush1.bf16.msra.mxu0 0
  %3158 = vmatprep.subr.bf16.mxu0 0
  %3159 = vmatpush1.bf16.msra.mxu0 0
  %3160 = vmatprep.subr.bf16.mxu0 0
  %3161 = vmatpush1.bf16.msra.mxu0 0
  %3162 = vmatprep.subr.bf16.mxu0 0
  %3163 = vmatpush1.bf16.msra.mxu0 0
  %3164 = vmatprep.subr.bf16.mxu0 0
  %3165 = vmatpush1.bf16.msra.mxu0 0
  %3166 = vmatprep.subr.bf16.mxu0 0
  %3167 = vmatpush1.bf16.msra.mxu0 0
  %3168 = vmatprep.mubr.bf16.mxu0 0
  %3169 = vmatmul.mubr.bf16.gmra.mrb[0].mxu0 %v3081
  %v3170 = vpop.f32.mrb[0].mxu0
  %v3171 = vadd.f32 0.0, %v3170
  %v3172 = vpop.f32.mrb[0].mxu0
  %v3173 = vadd.f32 0.0, %v3172
  %v3174 = vpop.f32.mrb[0].mxu0
  %v3175 = vpop.f32.mrb[0].mxu0
  %3176 = vdwg.mxu0
  %v3177 = vadd.f32 %v3012, %v3130
  %v3178 = vadd.f32 %v3013, %v3132
  %v3179 = vadd.f32 %v3014, %v3171
  %v3180 = vadd.f32 %v3015, %v3173
  %v3181 = vld [vmem:[%s3] sm:$0xf]
  %3183 = vset.pattern.permute.xlu0 0
  %3184 = vperm.xlu0 %3183, %v3181
  %v3185 = vpop.permute.xlu0 %3184
  %v3187 = vmul.f32 %v3177, %v3185
  %v3188 = vmul.f32 %v3178, %v3185
  %v3189 = vmul.f32 %v3179, %v3185
  %v3190 = vmul.f32 %v3180, %v3185
  %v3191 = vld [vmem:[%s4] sm:$0xf]
  %3193 = vset.pattern.permute.xlu0 0
  %3194 = vperm.xlu0 %3193, %v3191
  %v3195 = vpop.permute.xlu0 %3194
  %v3197 = vadd.f32 %v3187, %v3195
  %v3198 = vadd.f32 %v3188, %v3195
  %v3199 = vadd.f32 %v3189, %v3195
  %v3200 = vadd.f32 %v3190, %v3195
  %v3201 = vmax.f32 %v3197, 0.0
  %v3202 = vmax.f32 %v3198, 0.0
  %v3203 = vmax.f32 %v3199, 0.0
  %v3204 = vmax.f32 %v3200, 0.0
  %v3205 = vpack.c.bf16 %v3201, %v3201
  %v3206 = vpack.c.bf16 %v3202, %v3202
  %v3207 = vpack.c.bf16 %v3203, %v3203
  %v3208 = vpack.c.bf16 %v3204, %v3204
  %3209 = vst [vmem:[#allocation2] sm:$0x3] 0
  %3210 = vst [vmem:[#allocation2 + $0x6] sm:$0xf] 0
  %v3213 = vcombine.low %v3205, %v3206
  %v3215 = vunpack.c.l.s4 1983009808
  %v3216 = vunpack.c.0.s8 %v3215
  %v3217 = vlaneseq
  %v3218 = vshrl.u32 %v3217, 7
  %v3219 = vsub.s32 %v3216, %v3218
  %v3220 = vrot.slane %v3213, %v3219
  %3222 = vst [vmem:[#allocation2 + $0x2] sm:$0xf] %v3220
  %3223 = vst [vmem:[#allocation2 + $0xe] sm:$0x3] 0
  %v3226 = vcombine.low %v3207, %v3208
  %v3228 = vunpack.c.l.s4 1983009808
  %v3229 = vunpack.c.0.s8 %v3228
  %v3230 = vlaneseq
  %v3231 = vshrl.u32 %v3230, 7
  %v3232 = vsub.s32 %v3229, %v3231
  %v3233 = vrot.slane %v3226, %v3232
  %3235 = vst [vmem:[#allocation2 + $0xa] sm:$0xf] %v3233
  %v3236 = vld [vmem:[%s5] sm:$0xf]
  %v3237 = vld [vmem:[#allocation2] sm:$0xff]
  %v3238 = vld [vmem:[#allocation2 + $0x8] sm:$0x3f]
  %v3239 = vmul.bf16 %v3237, %v270
  %v3240 = vmul.bf16 %v3238, %v273
  %s3241 = scalar_lea.vmem %s5, 4
  %v3242 = vld [vmem:[%s3241] sm:$0xf]
  %v3245 = vcombine.high %v3237, %v3237
  %v3247 = vunpack.c.l.s4 1983009808
  %v3248 = vunpack.c.0.s8 %v3247
  %v3249 = vlaneseq
  %v3250 = vshrl.u32 %v3249, 7
  %v3251 = vsub.s32 %v3248, %v3250
  %v3252 = vrot.slane %v3237, %v3251
  %v3254 = vunpack.c.l.s4 1983009808
  %v3255 = vunpack.c.0.s8 %v3254
  %v3256 = vlaneseq
  %v3257 = vshrl.u32 %v3256, 7
  %v3258 = vsub.s32 %v3255, %v3257
  %v3259 = vrot.slane %v3245, %v3258
  %v3260 = vcombine.high %v3252, %v3252
  %v3261 = vcombine.high %v3238, %v3238
  %v3263 = vunpack.c.l.s4 1983009808
  %v3264 = vunpack.c.0.s8 %v3263
  %v3265 = vlaneseq
  %v3266 = vshrl.u32 %v3265, 7
  %v3267 = vsub.s32 %v3264, %v3266
  %v3268 = vrot.slane %v3238, %v3267
  %v3270 = vunpack.c.l.s4 1983009808
  %v3271 = vunpack.c.0.s8 %v3270
  %v3272 = vlaneseq
  %v3273 = vshrl.u32 %v3272, 7
  %v3274 = vsub.s32 %v3271, %v3273
  %v3275 = vrot.slane %v3261, %v3274
  %v3276 = vcombine.high %v3268, %v3268
  %3277 = vrot.lane.b32.xlu0 %v3252, 16
  %v3278 = vpop.permute.xlu0 %3277
  %3279 = vrot.lane.b32.xlu0 %v3260, 16
  %v3280 = vpop.permute.xlu0 %3279
  %3281 = vrot.lane.b32.xlu0 %v3259, 16
  %v3282 = vpop.permute.xlu0 %3281
  %3283 = vrot.lane.b32.xlu0 %v3268, 16
  %v3284 = vpop.permute.xlu0 %3283
  %3285 = vrot.lane.b32.xlu0 %v3276, 16
  %v3286 = vpop.permute.xlu0 %3285
  %3287 = vrot.lane.b32.xlu0 %v3275, 16
  %v3288 = vpop.permute.xlu0 %3287
  %v3289 = vsel %vm639, %v3278, %v3280
  %v3290 = vsel %vm639, %v3280, %v3282
  %v3291 = vsel %vm639, %v3284, %v3286
  %v3292 = vsel %vm639, %v3286, %v3288
  %v3294 = vsel %vm343, %v3242, 0
  %v3297 = vsel %vm347, %v3289, 0
  %v3300 = vsel %vm347, %v3290, 0
  %v3303 = vsel %vm347, %v3291, 0
  %v3306 = vsel %vm347, %v3292, 0
  %3308 = vmatprep.subr.bf16.mxu0 %v3300
  %3309 = vmatpush1.bf16.msra.mxu0 %v3297
  %3310 = vmatprep.subr.bf16.mxu0 0
  %3311 = vmatpush1.bf16.msra.mxu0 0
  %3312 = vmatprep.subr.bf16.mxu0 0
  %3313 = vmatpush1.bf16.msra.mxu0 0
  %3314 = vmatprep.subr.bf16.mxu0 0
  %3315 = vmatpush1.bf16.msra.mxu0 0
  %3316 = vmatprep.subr.bf16.mxu0 0
  %3317 = vmatpush1.bf16.msra.mxu0 0
  %3318 = vmatprep.subr.bf16.mxu0 0
  %3319 = vmatpush1.bf16.msra.mxu0 0
  %3320 = vmatprep.subr.bf16.mxu0 0
  %3321 = vmatpush1.bf16.msra.mxu0 0
  %3322 = vmatprep.subr.bf16.mxu0 0
  %3323 = vmatpush1.bf16.msra.mxu0 0
  %3324 = vmatprep.subr.bf16.mxu0 0
  %3325 = vmatpush1.bf16.msra.mxu0 0
  %3326 = vmatprep.subr.bf16.mxu0 0
  %3327 = vmatpush1.bf16.msra.mxu0 0
  %3328 = vmatprep.subr.bf16.mxu0 0
  %3329 = vmatpush1.bf16.msra.mxu0 0
  %3330 = vmatprep.subr.bf16.mxu0 0
  %3331 = vmatpush1.bf16.msra.mxu0 0
  %3332 = vmatprep.subr.bf16.mxu0 0
  %3333 = vmatpush1.bf16.msra.mxu0 0
  %3334 = vmatprep.subr.bf16.mxu0 0
  %3335 = vmatpush1.bf16.msra.mxu0 0
  %3336 = vmatprep.subr.bf16.mxu0 0
  %3337 = vmatpush1.bf16.msra.mxu0 0
  %3338 = vmatprep.subr.bf16.mxu0 0
  %3339 = vmatpush1.bf16.msra.mxu0 0
  %3340 = vmatprep.mubr.bf16.mxu0 0
  %3341 = vmatmul.mubr.bf16.gmra.mrb[0].mxu0 %v3294
  %v3342 = vpop.f32.mrb[0].mxu0
  %v3343 = vadd.f32 0.0, %v3342
  %v3344 = vpop.f32.mrb[0].mxu0
  %v3345 = vadd.f32 0.0, %v3344
  %v3346 = vpop.f32.mrb[0].mxu0
  %v3347 = vpop.f32.mrb[0].mxu0
  %3348 = vdwg.mxu0
  %3349 = vmatprep.subr.bf16.mxu0 %v3306
  %3350 = vmatpush1.bf16.msra.mxu0 %v3303
  %3351 = vmatprep.subr.bf16.mxu0 0
  %3352 = vmatpush1.bf16.msra.mxu0 0
  %3353 = vmatprep.subr.bf16.mxu0 0
  %3354 = vmatpush1.bf16.msra.mxu0 0
  %3355 = vmatprep.subr.bf16.mxu0 0
  %3356 = vmatpush1.bf16.msra.mxu0 0
  %3357 = vmatprep.subr.bf16.mxu0 0
  %3358 = vmatpush1.bf16.msra.mxu0 0
  %3359 = vmatprep.subr.bf16.mxu0 0
  %3360 = vmatpush1.bf16.msra.mxu0 0
  %3361 = vmatprep.subr.bf16.mxu0 0
  %3362 = vmatpush1.bf16.msra.mxu0 0
  %3363 = vmatprep.subr.bf16.mxu0 0
  %3364 = vmatpush1.bf16.msra.mxu0 0
  %3365 = vmatprep.subr.bf16.mxu0 0
  %3366 = vmatpush1.bf16.msra.mxu0 0
  %3367 = vmatprep.subr.bf16.mxu0 0
  %3368 = vmatpush1.bf16.msra.mxu0 0
  %3369 = vmatprep.subr.bf16.mxu0 0
  %3370 = vmatpush1.bf16.msra.mxu0 0
  %3371 = vmatprep.subr.bf16.mxu0 0
  %3372 = vmatpush1.bf16.msra.mxu0 0
  %3373 = vmatprep.subr.bf16.mxu0 0
  %3374 = vmatpush1.bf16.msra.mxu0 0
  %3375 = vmatprep.subr.bf16.mxu0 0
  %3376 = vmatpush1.bf16.msra.mxu0 0
  %3377 = vmatprep.subr.bf16.mxu0 0
  %3378 = vmatpush1.bf16.msra.mxu0 0
  %3379 = vmatprep.subr.bf16.mxu0 0
  %3380 = vmatpush1.bf16.msra.mxu0 0
  %3381 = vmatprep.mubr.bf16.mxu0 0
  %3382 = vmatmul.mubr.bf16.gmra.mrb[0].mxu0 %v3294
  %v3383 = vpop.f32.mrb[0].mxu0
  %v3384 = vadd.f32 0.0, %v3383
  %v3385 = vpop.f32.mrb[0].mxu0
  %v3386 = vadd.f32 0.0, %v3385
  %v3387 = vpop.f32.mrb[0].mxu0
  %v3388 = vpop.f32.mrb[0].mxu0
  %3389 = vdwg.mxu0
  %v3392 = vcombine.high %v3239, %v3239
  %v3394 = vunpack.c.l.s4 1983009808
  %v3395 = vunpack.c.0.s8 %v3394
  %v3396 = vlaneseq
  %v3397 = vshrl.u32 %v3396, 7
  %v3398 = vsub.s32 %v3395, %v3397
  %v3399 = vrot.slane %v3239, %v3398
  %v3401 = vunpack.c.l.s4 1983009808
  %v3402 = vunpack.c.0.s8 %v3401
  %v3403 = vlaneseq
  %v3404 = vshrl.u32 %v3403, 7
  %v3405 = vsub.s32 %v3402, %v3404
  %v3406 = vrot.slane %v3392, %v3405
  %v3407 = vcombine.high %v3399, %v3399
  %v3408 = vcombine.high %v3240, %v3240
  %v3410 = vunpack.c.l.s4 1983009808
  %v3411 = vunpack.c.0.s8 %v3410
  %v3412 = vlaneseq
  %v3413 = vshrl.u32 %v3412, 7
  %v3414 = vsub.s32 %v3411, %v3413
  %v3415 = vrot.slane %v3240, %v3414
  %v3417 = vunpack.c.l.s4 1983009808
  %v3418 = vunpack.c.0.s8 %v3417
  %v3419 = vlaneseq
  %v3420 = vshrl.u32 %v3419, 7
  %v3421 = vsub.s32 %v3418, %v3420
  %v3422 = vrot.slane %v3408, %v3421
  %v3423 = vcombine.high %v3415, %v3415
  %3424 = vrot.lane.b32.xlu0 %v3399, 17
  %v3425 = vpop.permute.xlu0 %3424
  %3426 = vrot.lane.b32.xlu0 %v3407, 17
  %v3427 = vpop.permute.xlu0 %3426
  %3428 = vrot.lane.b32.xlu0 %v3406, 17
  %v3429 = vpop.permute.xlu0 %3428
  %3430 = vrot.lane.b32.xlu0 %v3415, 17
  %v3431 = vpop.permute.xlu0 %3430
  %3432 = vrot.lane.b32.xlu0 %v3423, 17
  %v3433 = vpop.permute.xlu0 %3432
  %3434 = vrot.lane.b32.xlu0 %v3422, 17
  %v3435 = vpop.permute.xlu0 %3434
  %v3436 = vsel %vm338, %v3425, %v3427
  %v3437 = vsel %vm338, %v3427, %v3429
  %v3438 = vsel %vm338, %v3431, %v3433
  %v3439 = vsel %vm338, %v3433, %v3435
  %v3441 = vsel %vm343, %v3236, 0
  %v3444 = vsel %vm347, %v3436, 0
  %v3447 = vsel %vm347, %v3437, 0
  %v3450 = vsel %vm347, %v3438, 0
  %v3453 = vsel %vm347, %v3439, 0
  %3455 = vmatprep.subr.bf16.mxu0 %v3447
  %3456 = vmatpush1.bf16.msra.mxu0 %v3444
  %3457 = vmatprep.subr.bf16.mxu0 0
  %3458 = vmatpush1.bf16.msra.mxu0 0
  %3459 = vmatprep.subr.bf16.mxu0 0
  %3460 = vmatpush1.bf16.msra.mxu0 0
  %3461 = vmatprep.subr.bf16.mxu0 0
  %3462 = vmatpush1.bf16.msra.mxu0 0
  %3463 = vmatprep.subr.bf16.mxu0 0
  %3464 = vmatpush1.bf16.msra.mxu0 0
  %3465 = vmatprep.subr.bf16.mxu0 0
  %3466 = vmatpush1.bf16.msra.mxu0 0
  %3467 = vmatprep.subr.bf16.mxu0 0
  %3468 = vmatpush1.bf16.msra.mxu0 0
  %3469 = vmatprep.subr.bf16.mxu0 0
  %3470 = vmatpush1.bf16.msra.mxu0 0
  %3471 = vmatprep.subr.bf16.mxu0 0
  %3472 = vmatpush1.bf16.msra.mxu0 0
  %3473 = vmatprep.subr.bf16.mxu0 0
  %3474 = vmatpush1.bf16.msra.mxu0 0
  %3475 = vmatprep.subr.bf16.mxu0 0
  %3476 = vmatpush1.bf16.msra.mxu0 0
  %3477 = vmatprep.subr.bf16.mxu0 0
  %3478 = vmatpush1.bf16.msra.mxu0 0
  %3479 = vmatprep.subr.bf16.mxu0 0
  %3480 = vmatpush1.bf16.msra.mxu0 0
  %3481 = vmatprep.subr.bf16.mxu0 0
  %3482 = vmatpush1.bf16.msra.mxu0 0
  %3483 = vmatprep.subr.bf16.mxu0 0
  %3484 = vmatpush1.bf16.msra.mxu0 0
  %3485 = vmatprep.subr.bf16.mxu0 0
  %3486 = vmatpush1.bf16.msra.mxu0 0
  %3487 = vmatprep.mubr.bf16.mxu0 0
  %3488 = vmatmul.mubr.bf16.gmra.mrb[0].mxu0 %v3441
  %v3489 = vpop.f32.mrb[0].mxu0
  %v3490 = vadd.f32 %v3343, %v3489
  %v3491 = vpop.f32.mrb[0].mxu0
  %v3492 = vadd.f32 %v3345, %v3491
  %v3493 = vpop.f32.mrb[0].mxu0
  %v3494 = vpop.f32.mrb[0].mxu0
  %3495 = vdwg.mxu0
  %3496 = vmatprep.subr.bf16.mxu0 %v3453
  %3497 = vmatpush1.bf16.msra.mxu0 %v3450
  %3498 = vmatprep.subr.bf16.mxu0 0
  %3499 = vmatpush1.bf16.msra.mxu0 0
  %3500 = vmatprep.subr.bf16.mxu0 0
  %3501 = vmatpush1.bf16.msra.mxu0 0
  %3502 = vmatprep.subr.bf16.mxu0 0
  %3503 = vmatpush1.bf16.msra.mxu0 0
  %3504 = vmatprep.subr.bf16.mxu0 0
  %3505 = vmatpush1.bf16.msra.mxu0 0
  %3506 = vmatprep.subr.bf16.mxu0 0
  %3507 = vmatpush1.bf16.msra.mxu0 0
  %3508 = vmatprep.subr.bf16.mxu0 0
  %3509 = vmatpush1.bf16.msra.mxu0 0
  %3510 = vmatprep.subr.bf16.mxu0 0
  %3511 = vmatpush1.bf16.msra.mxu0 0
  %3512 = vmatprep.subr.bf16.mxu0 0
  %3513 = vmatpush1.bf16.msra.mxu0 0
  %3514 = vmatprep.subr.bf16.mxu0 0
  %3515 = vmatpush1.bf16.msra.mxu0 0
  %3516 = vmatprep.subr.bf16.mxu0 0
  %3517 = vmatpush1.bf16.msra.mxu0 0
  %3518 = vmatprep.subr.bf16.mxu0 0
  %3519 = vmatpush1.bf16.msra.mxu0 0
  %3520 = vmatprep.subr.bf16.mxu0 0
  %3521 = vmatpush1.bf16.msra.mxu0 0
  %3522 = vmatprep.subr.bf16.mxu0 0
  %3523 = vmatpush1.bf16.msra.mxu0 0
  %3524 = vmatprep.subr.bf16.mxu0 0
  %3525 = vmatpush1.bf16.msra.mxu0 0
  %3526 = vmatprep.subr.bf16.mxu0 0
  %3527 = vmatpush1.bf16.msra.mxu0 0
  %3528 = vmatprep.mubr.bf16.mxu0 0
  %3529 = vmatmul.mubr.bf16.gmra.mrb[0].mxu0 %v3441
  %v3530 = vpop.f32.mrb[0].mxu0
  %v3531 = vadd.f32 %v3384, %v3530
  %v3532 = vpop.f32.mrb[0].mxu0
  %v3533 = vadd.f32 %v3386, %v3532
  %v3534 = vpop.f32.mrb[0].mxu0
  %v3535 = vpop.f32.mrb[0].mxu0
  %3536 = vdwg.mxu0
  %s3537 = scalar_lea.vmem %s5, 8
  %v3538 = vld [vmem:[%s3537] sm:$0xf]
  %v3539 = vld [vmem:[#allocation2] sm:$0xff]
  %v3540 = vld [vmem:[#allocation2 + $0x8] sm:$0x3f]
  %v3541 = vmul.bf16 %v3539, %v950
  %v3542 = vmul.bf16 %v3540, %v952
  %v3545 = vcombine.high %v3541, %v3541
  %v3547 = vunpack.c.l.s4 1983009808
  %v3548 = vunpack.c.0.s8 %v3547
  %v3549 = vlaneseq
  %v3550 = vshrl.u32 %v3549, 7
  %v3551 = vsub.s32 %v3548, %v3550
  %v3552 = vrot.slane %v3541, %v3551
  %v3554 = vunpack.c.l.s4 1983009808
  %v3555 = vunpack.c.0.s8 %v3554
  %v3556 = vlaneseq
  %v3557 = vshrl.u32 %v3556, 7
  %v3558 = vsub.s32 %v3555, %v3557
  %v3559 = vrot.slane %v3545, %v3558
  %v3560 = vcombine.high %v3552, %v3552
  %v3561 = vcombine.high %v3542, %v3542
  %v3563 = vunpack.c.l.s4 1983009808
  %v3564 = vunpack.c.0.s8 %v3563
  %v3565 = vlaneseq
  %v3566 = vshrl.u32 %v3565, 7
  %v3567 = vsub.s32 %v3564, %v3566
  %v3568 = vrot.slane %v3542, %v3567
  %v3570 = vunpack.c.l.s4 1983009808
  %v3571 = vunpack.c.0.s8 %v3570
  %v3572 = vlaneseq
  %v3573 = vshrl.u32 %v3572, 7
  %v3574 = vsub.s32 %v3571, %v3573
  %v3575 = vrot.slane %v3561, %v3574
  %v3576 = vcombine.high %v3568, %v3568
  %3577 = vrot.lane.b32.xlu0 %v3552, 15
  %v3578 = vpop.permute.xlu0 %3577
  %3579 = vrot.lane.b32.xlu0 %v3560, 15
  %v3580 = vpop.permute.xlu0 %3579
  %3581 = vrot.lane.b32.xlu0 %v3559, 15
  %v3582 = vpop.permute.xlu0 %3581
  %3583 = vrot.lane.b32.xlu0 %v3568, 15
  %v3584 = vpop.permute.xlu0 %3583
  %3585 = vrot.lane.b32.xlu0 %v3576, 15
  %v3586 = vpop.permute.xlu0 %3585
  %3587 = vrot.lane.b32.xlu0 %v3575, 15
  %v3588 = vpop.permute.xlu0 %3587
  %v3589 = vsel %vm1003, %v3578, %v3580
  %v3590 = vsel %vm1003, %v3580, %v3582
  %v3591 = vsel %vm1003, %v3584, %v3586
  %v3592 = vsel %vm1003, %v3586, %v3588
  %v3594 = vsel %vm343, %v3538, 0
  %v3597 = vsel %vm347, %v3589, 0
  %v3600 = vsel %vm347, %v3590, 0
  %v3603 = vsel %vm347, %v3591, 0
  %v3606 = vsel %vm347, %v3592, 0
  %3608 = vmatprep.subr.bf16.mxu0 %v3600
  %3609 = vmatpush1.bf16.msra.mxu0 %v3597
  %3610 = vmatprep.subr.bf16.mxu0 0
  %3611 = vmatpush1.bf16.msra.mxu0 0
  %3612 = vmatprep.subr.bf16.mxu0 0
  %3613 = vmatpush1.bf16.msra.mxu0 0
  %3614 = vmatprep.subr.bf16.mxu0 0
  %3615 = vmatpush1.bf16.msra.mxu0 0
  %3616 = vmatprep.subr.bf16.mxu0 0
  %3617 = vmatpush1.bf16.msra.mxu0 0
  %3618 = vmatprep.subr.bf16.mxu0 0
  %3619 = vmatpush1.bf16.msra.mxu0 0
  %3620 = vmatprep.subr.bf16.mxu0 0
  %3621 = vmatpush1.bf16.msra.mxu0 0
  %3622 = vmatprep.subr.bf16.mxu0 0
  %3623 = vmatpush1.bf16.msra.mxu0 0
  %3624 = vmatprep.subr.bf16.mxu0 0
  %3625 = vmatpush1.bf16.msra.mxu0 0
  %3626 = vmatprep.subr.bf16.mxu0 0
  %3627 = vmatpush1.bf16.msra.mxu0 0
  %3628 = vmatprep.subr.bf16.mxu0 0
  %3629 = vmatpush1.bf16.msra.mxu0 0
  %3630 = vmatprep.subr.bf16.mxu0 0
  %3631 = vmatpush1.bf16.msra.mxu0 0
  %3632 = vmatprep.subr.bf16.mxu0 0
  %3633 = vmatpush1.bf16.msra.mxu0 0
  %3634 = vmatprep.subr.bf16.mxu0 0
  %3635 = vmatpush1.bf16.msra.mxu0 0
  %3636 = vmatprep.subr.bf16.mxu0 0
  %3637 = vmatpush1.bf16.msra.mxu0 0
  %3638 = vmatprep.subr.bf16.mxu0 0
  %3639 = vmatpush1.bf16.msra.mxu0 0
  %3640 = vmatprep.mubr.bf16.mxu0 0
  %3641 = vmatmul.mubr.bf16.gmra.mrb[0].mxu0 %v3594
  %v3642 = vpop.f32.mrb[0].mxu0
  %v3643 = vadd.f32 0.0, %v3642
  %v3644 = vpop.f32.mrb[0].mxu0
  %v3645 = vadd.f32 0.0, %v3644
  %v3646 = vpop.f32.mrb[0].mxu0
  %v3647 = vpop.f32.mrb[0].mxu0
  %3648 = vdwg.mxu0
  %3649 = vmatprep.subr.bf16.mxu0 %v3606
  %3650 = vmatpush1.bf16.msra.mxu0 %v3603
  %3651 = vmatprep.subr.bf16.mxu0 0
  %3652 = vmatpush1.bf16.msra.mxu0 0
  %3653 = vmatprep.subr.bf16.mxu0 0
  %3654 = vmatpush1.bf16.msra.mxu0 0
  %3655 = vmatprep.subr.bf16.mxu0 0
  %3656 = vmatpush1.bf16.msra.mxu0 0
  %3657 = vmatprep.subr.bf16.mxu0 0
  %3658 = vmatpush1.bf16.msra.mxu0 0
  %3659 = vmatprep.subr.bf16.mxu0 0
  %3660 = vmatpush1.bf16.msra.mxu0 0
  %3661 = vmatprep.subr.bf16.mxu0 0
  %3662 = vmatpush1.bf16.msra.mxu0 0
  %3663 = vmatprep.subr.bf16.mxu0 0
  %3664 = vmatpush1.bf16.msra.mxu0 0
  %3665 = vmatprep.subr.bf16.mxu0 0
  %3666 = vmatpush1.bf16.msra.mxu0 0
  %3667 = vmatprep.subr.bf16.mxu0 0
  %3668 = vmatpush1.bf16.msra.mxu0 0
  %3669 = vmatprep.subr.bf16.mxu0 0
  %3670 = vmatpush1.bf16.msra.mxu0 0
  %3671 = vmatprep.subr.bf16.mxu0 0
  %3672 = vmatpush1.bf16.msra.mxu0 0
  %3673 = vmatprep.subr.bf16.mxu0 0
  %3674 = vmatpush1.bf16.msra.mxu0 0
  %3675 = vmatprep.subr.bf16.mxu0 0
  %3676 = vmatpush1.bf16.msra.mxu0 0
  %3677 = vmatprep.subr.bf16.mxu0 0
  %3678 = vmatpush1.bf16.msra.mxu0 0
  %3679 = vmatprep.subr.bf16.mxu0 0
  %3680 = vmatpush1.bf16.msra.mxu0 0
  %3681 = vmatprep.mubr.bf16.mxu0 0
  %3682 = vmatmul.mubr.bf16.gmra.mrb[0].mxu0 %v3594
  %v3683 = vpop.f32.mrb[0].mxu0
  %v3684 = vadd.f32 0.0, %v3683
  %v3685 = vpop.f32.mrb[0].mxu0
  %v3686 = vadd.f32 0.0, %v3685
  %v3687 = vpop.f32.mrb[0].mxu0
  %v3688 = vpop.f32.mrb[0].mxu0
  %3689 = vdwg.mxu0
  %v3690 = vadd.f32 %v3490, %v3643
  %v3691 = vadd.f32 %v3492, %v3645
  %v3692 = vadd.f32 %v3531, %v3684
  %v3693 = vadd.f32 %v3533, %v3686
  %s3694 = scalar_lea.vmem %s5, 12
  %v3695 = vld [vmem:[%s3694] sm:$0xf]
  %v3696 = vld [vmem:[#allocation2] sm:$0xff]
  %v3697 = vld [vmem:[#allocation2 + $0x8] sm:$0x3f]
  %v3698 = vmul.bf16 %v3696, %v1285
  %v3699 = vmul.bf16 %v3697, %v1287
  %v3702 = vcombine.high %v3698, %v3698
  %v3704 = vunpack.c.l.s4 1983009808
  %v3705 = vunpack.c.0.s8 %v3704
  %v3706 = vlaneseq
  %v3707 = vshrl.u32 %v3706, 7
  %v3708 = vsub.s32 %v3705, %v3707
  %v3709 = vrot.slane %v3698, %v3708
  %v3711 = vunpack.c.l.s4 1983009808
  %v3712 = vunpack.c.0.s8 %v3711
  %v3713 = vlaneseq
  %v3714 = vshrl.u32 %v3713, 7
  %v3715 = vsub.s32 %v3712, %v3714
  %v3716 = vrot.slane %v3702, %v3715
  %v3717 = vcombine.high %v3709, %v3709
  %v3718 = vcombine.high %v3699, %v3699
  %v3720 = vunpack.c.l.s4 1983009808
  %v3721 = vunpack.c.0.s8 %v3720
  %v3722 = vlaneseq
  %v3723 = vshrl.u32 %v3722, 7
  %v3724 = vsub.s32 %v3721, %v3723
  %v3725 = vrot.slane %v3699, %v3724
  %v3727 = vunpack.c.l.s4 1983009808
  %v3728 = vunpack.c.0.s8 %v3727
  %v3729 = vlaneseq
  %v3730 = vshrl.u32 %v3729, 7
  %v3731 = vsub.s32 %v3728, %v3730
  %v3732 = vrot.slane %v3718, %v3731
  %v3733 = vcombine.high %v3725, %v3725
  %3734 = vrot.lane.b32.xlu0 %v3709, 1
  %v3735 = vpop.permute.xlu0 %3734
  %3736 = vrot.lane.b32.xlu0 %v3717, 1
  %v3737 = vpop.permute.xlu0 %3736
  %3738 = vrot.lane.b32.xlu0 %v3716, 1
  %v3739 = vpop.permute.xlu0 %3738
  %3740 = vrot.lane.b32.xlu0 %v3725, 1
  %v3741 = vpop.permute.xlu0 %3740
  %3742 = vrot.lane.b32.xlu0 %v3733, 1
  %v3743 = vpop.permute.xlu0 %3742
  %3744 = vrot.lane.b32.xlu0 %v3732, 1
  %v3745 = vpop.permute.xlu0 %3744
  %v3746 = vsel %vm1338, %v3735, %v3737
  %v3747 = vsel %vm1338, %v3737, %v3739
  %v3748 = vsel %vm1338, %v3741, %v3743
  %v3749 = vsel %vm1338, %v3743, %v3745
  %v3751 = vsel %vm343, %v3695, 0
  %v3754 = vsel %vm347, %v3746, 0
  %v3757 = vsel %vm347, %v3747, 0
  %v3760 = vsel %vm347, %v3748, 0
  %v3763 = vsel %vm347, %v3749, 0
  %3765 = vmatprep.subr.bf16.mxu0 %v3757
  %3766 = vmatpush1.bf16.msra.mxu0 %v3754
  %3767 = vmatprep.subr.bf16.mxu0 0
  %3768 = vmatpush1.bf16.msra.mxu0 0
  %3769 = vmatprep.subr.bf16.mxu0 0
  %3770 = vmatpush1.bf16.msra.mxu0 0
  %3771 = vmatprep.subr.bf16.mxu0 0
  %3772 = vmatpush1.bf16.msra.mxu0 0
  %3773 = vmatprep.subr.bf16.mxu0 0
  %3774 = vmatpush1.bf16.msra.mxu0 0
  %3775 = vmatprep.subr.bf16.mxu0 0
  %3776 = vmatpush1.bf16.msra.mxu0 0
  %3777 = vmatprep.subr.bf16.mxu0 0
  %3778 = vmatpush1.bf16.msra.mxu0 0
  %3779 = vmatprep.subr.bf16.mxu0 0
  %3780 = vmatpush1.bf16.msra.mxu0 0
  %3781 = vmatprep.subr.bf16.mxu0 0
  %3782 = vmatpush1.bf16.msra.mxu0 0
  %3783 = vmatprep.subr.bf16.mxu0 0
  %3784 = vmatpush1.bf16.msra.mxu0 0
  %3785 = vmatprep.subr.bf16.mxu0 0
  %3786 = vmatpush1.bf16.msra.mxu0 0
  %3787 = vmatprep.subr.bf16.mxu0 0
  %3788 = vmatpush1.bf16.msra.mxu0 0
  %3789 = vmatprep.subr.bf16.mxu0 0
  %3790 = vmatpush1.bf16.msra.mxu0 0
  %3791 = vmatprep.subr.bf16.mxu0 0
  %3792 = vmatpush1.bf16.msra.mxu0 0
  %3793 = vmatprep.subr.bf16.mxu0 0
  %3794 = vmatpush1.bf16.msra.mxu0 0
  %3795 = vmatprep.subr.bf16.mxu0 0
  %3796 = vmatpush1.bf16.msra.mxu0 0
  %3797 = vmatprep.mubr.bf16.mxu0 0
  %3798 = vmatmul.mubr.bf16.gmra.mrb[0].mxu0 %v3751
  %v3799 = vpop.f32.mrb[0].mxu0
  %v3800 = vadd.f32 0.0, %v3799
  %v3801 = vpop.f32.mrb[0].mxu0
  %v3802 = vadd.f32 0.0, %v3801
  %v3803 = vpop.f32.mrb[0].mxu0
  %v3804 = vpop.f32.mrb[0].mxu0
  %3805 = vdwg.mxu0
  %3806 = vmatprep.subr.bf16.mxu0 %v3763
  %3807 = vmatpush1.bf16.msra.mxu0 %v3760
  %3808 = vmatprep.subr.bf16.mxu0 0
  %3809 = vmatpush1.bf16.msra.mxu0 0
  %3810 = vmatprep.subr.bf16.mxu0 0
  %3811 = vmatpush1.bf16.msra.mxu0 0
  %3812 = vmatprep.subr.bf16.mxu0 0
  %3813 = vmatpush1.bf16.msra.mxu0 0
  %3814 = vmatprep.subr.bf16.mxu0 0
  %3815 = vmatpush1.bf16.msra.mxu0 0
  %3816 = vmatprep.subr.bf16.mxu0 0
  %3817 = vmatpush1.bf16.msra.mxu0 0
  %3818 = vmatprep.subr.bf16.mxu0 0
  %3819 = vmatpush1.bf16.msra.mxu0 0
  %3820 = vmatprep.subr.bf16.mxu0 0
  %3821 = vmatpush1.bf16.msra.mxu0 0
  %3822 = vmatprep.subr.bf16.mxu0 0
  %3823 = vmatpush1.bf16.msra.mxu0 0
  %3824 = vmatprep.subr.bf16.mxu0 0
  %3825 = vmatpush1.bf16.msra.mxu0 0
  %3826 = vmatprep.subr.bf16.mxu0 0
  %3827 = vmatpush1.bf16.msra.mxu0 0
  %3828 = vmatprep.subr.bf16.mxu0 0
  %3829 = vmatpush1.bf16.msra.mxu0 0
  %3830 = vmatprep.subr.bf16.mxu0 0
  %3831 = vmatpush1.bf16.msra.mxu0 0
  %3832 = vmatprep.subr.bf16.mxu0 0
  %3833 = vmatpush1.bf16.msra.mxu0 0
  %3834 = vmatprep.subr.bf16.mxu0 0
  %3835 = vmatpush1.bf16.msra.mxu0 0
  %3836 = vmatprep.subr.bf16.mxu0 0
  %3837 = vmatpush1.bf16.msra.mxu0 0
  %3838 = vmatprep.mubr.bf16.mxu0 0
  %3839 = vmatmul.mubr.bf16.gmra.mrb[0].mxu0 %v3751
  %v3840 = vpop.f32.mrb[0].mxu0
  %v3841 = vadd.f32 0.0, %v3840
  %v3842 = vpop.f32.mrb[0].mxu0
  %v3843 = vadd.f32 0.0, %v3842
  %v3844 = vpop.f32.mrb[0].mxu0
  %v3845 = vpop.f32.mrb[0].mxu0
  %3846 = vdwg.mxu0
  %v3847 = vadd.f32 %v3690, %v3800
  %v3848 = vadd.f32 %v3691, %v3802
  %v3849 = vadd.f32 %v3692, %v3841
  %v3850 = vadd.f32 %v3693, %v3843
  %s3851 = scalar_lea.vmem %s5, 16
  %v3852 = vld [vmem:[%s3851] sm:$0xf]
  %v3853 = vld [vmem:[#allocation2 + $0x2] sm:$0xff]
  %v3854 = vld [vmem:[#allocation2 + $0xa] sm:$0xf]
  %v3858 = vunpack.c.l.s4 1983009808
  %v3859 = vunpack.c.0.s8 %v3858
  %v3860 = vlaneseq
  %v3861 = vshrl.u32 %v3860, 7
  %v3862 = vsub.s32 %v3859, %v3861
  %v3863 = vrot.slane %v3853, %v3862
  %v3864 = vcombine.high %v3863, %v3863
  %v3866 = vunpack.c.l.s4 1983009808
  %v3867 = vunpack.c.0.s8 %v3866
  %v3868 = vlaneseq
  %v3869 = vshrl.u32 %v3868, 7
  %v3870 = vsub.s32 %v3867, %v3869
  %v3871 = vrot.slane %v3854, %v3870
  %v3872 = vcombine.high %v3871, %v3871
  %v3874 = vsel %vm343, %v3852, 0
  %v3877 = vsel %vm347, %v3863, 0
  %v3880 = vsel %vm347, %v3864, 0
  %v3883 = vsel %vm347, %v3871, 0
  %v3886 = vsel %vm347, %v3872, 0
  %3888 = vmatprep.subr.bf16.mxu0 %v3880
  %3889 = vmatpush1.bf16.msra.mxu0 %v3877
  %3890 = vmatprep.subr.bf16.mxu0 0
  %3891 = vmatpush1.bf16.msra.mxu0 0
  %3892 = vmatprep.subr.bf16.mxu0 0
  %3893 = vmatpush1.bf16.msra.mxu0 0
  %3894 = vmatprep.subr.bf16.mxu0 0
  %3895 = vmatpush1.bf16.msra.mxu0 0
  %3896 = vmatprep.subr.bf16.mxu0 0
  %3897 = vmatpush1.bf16.msra.mxu0 0
  %3898 = vmatprep.subr.bf16.mxu0 0
  %3899 = vmatpush1.bf16.msra.mxu0 0
  %3900 = vmatprep.subr.bf16.mxu0 0
  %3901 = vmatpush1.bf16.msra.mxu0 0
  %3902 = vmatprep.subr.bf16.mxu0 0
  %3903 = vmatpush1.bf16.msra.mxu0 0
  %3904 = vmatprep.subr.bf16.mxu0 0
  %3905 = vmatpush1.bf16.msra.mxu0 0
  %3906 = vmatprep.subr.bf16.mxu0 0
  %3907 = vmatpush1.bf16.msra.mxu0 0
  %3908 = vmatprep.subr.bf16.mxu0 0
  %3909 = vmatpush1.bf16.msra.mxu0 0
  %3910 = vmatprep.subr.bf16.mxu0 0
  %3911 = vmatpush1.bf16.msra.mxu0 0
  %3912 = vmatprep.subr.bf16.mxu0 0
  %3913 = vmatpush1.bf16.msra.mxu0 0
  %3914 = vmatprep.subr.bf16.mxu0 0
  %3915 = vmatpush1.bf16.msra.mxu0 0
  %3916 = vmatprep.subr.bf16.mxu0 0
  %3917 = vmatpush1.bf16.msra.mxu0 0
  %3918 = vmatprep.subr.bf16.mxu0 0
  %3919 = vmatpush1.bf16.msra.mxu0 0
  %3920 = vmatprep.mubr.bf16.mxu0 0
  %3921 = vmatmul.mubr.bf16.gmra.mrb[0].mxu0 %v3874
  %v3922 = vpop.f32.mrb[0].mxu0
  %v3923 = vadd.f32 0.0, %v3922
  %v3924 = vpop.f32.mrb[0].mxu0
  %v3925 = vadd.f32 0.0, %v3924
  %v3926 = vpop.f32.mrb[0].mxu0
  %v3927 = vpop.f32.mrb[0].mxu0
  %3928 = vdwg.mxu0
  %3929 = vmatprep.subr.bf16.mxu0 %v3886
  %3930 = vmatpush1.bf16.msra.mxu0 %v3883
  %3931 = vmatprep.subr.bf16.mxu0 0
  %3932 = vmatpush1.bf16.msra.mxu0 0
  %3933 = vmatprep.subr.bf16.mxu0 0
  %3934 = vmatpush1.bf16.msra.mxu0 0
  %3935 = vmatprep.subr.bf16.mxu0 0
  %3936 = vmatpush1.bf16.msra.mxu0 0
  %3937 = vmatprep.subr.bf16.mxu0 0
  %3938 = vmatpush1.bf16.msra.mxu0 0
  %3939 = vmatprep.subr.bf16.mxu0 0
  %3940 = vmatpush1.bf16.msra.mxu0 0
  %3941 = vmatprep.subr.bf16.mxu0 0
  %3942 = vmatpush1.bf16.msra.mxu0 0
  %3943 = vmatprep.subr.bf16.mxu0 0
  %3944 = vmatpush1.bf16.msra.mxu0 0
  %3945 = vmatprep.subr.bf16.mxu0 0
  %3946 = vmatpush1.bf16.msra.mxu0 0
  %3947 = vmatprep.subr.bf16.mxu0 0
  %3948 = vmatpush1.bf16.msra.mxu0 0
  %3949 = vmatprep.subr.bf16.mxu0 0
  %3950 = vmatpush1.bf16.msra.mxu0 0
  %3951 = vmatprep.subr.bf16.mxu0 0
  %3952 = vmatpush1.bf16.msra.mxu0 0
  %3953 = vmatprep.subr.bf16.mxu0 0
  %3954 = vmatpush1.bf16.msra.mxu0 0
  %3955 = vmatprep.subr.bf16.mxu0 0
  %3956 = vmatpush1.bf16.msra.mxu0 0
  %3957 = vmatprep.subr.bf16.mxu0 0
  %3958 = vmatpush1.bf16.msra.mxu0 0
  %3959 = vmatprep.subr.bf16.mxu0 0
  %3960 = vmatpush1.bf16.msra.mxu0 0
  %3961 = vmatprep.mubr.bf16.mxu0 0
  %3962 = vmatmul.mubr.bf16.gmra.mrb[0].mxu0 %v3874
  %v3963 = vpop.f32.mrb[0].mxu0
  %v3964 = vadd.f32 0.0, %v3963
  %v3965 = vpop.f32.mrb[0].mxu0
  %v3966 = vadd.f32 0.0, %v3965
  %v3967 = vpop.f32.mrb[0].mxu0
  %v3968 = vpop.f32.mrb[0].mxu0
  %3969 = vdwg.mxu0
  %v3970 = vadd.f32 %v3847, %v3923
  %v3971 = vadd.f32 %v3848, %v3925
  %v3972 = vadd.f32 %v3849, %v3964
  %v3973 = vadd.f32 %v3850, %v3966
  %s3974 = scalar_lea.vmem %s5, 20
  %v3975 = vld [vmem:[%s3974] sm:$0xf]
  %v3976 = vld [vmem:[#allocation2 + $0x2] sm:$0xff]
  %v3977 = vld [vmem:[#allocation2 + $0xa] sm:$0x3f]
  %v3978 = vmul.bf16 %v3976, %v1873
  %v3979 = vmul.bf16 %v3977, %v1875
  %v3982 = vcombine.high %v3978, %v3978
  %v3984 = vunpack.c.l.s4 1983009808
  %v3985 = vunpack.c.0.s8 %v3984
  %v3986 = vlaneseq
  %v3987 = vshrl.u32 %v3986, 7
  %v3988 = vsub.s32 %v3985, %v3987
  %v3989 = vrot.slane %v3978, %v3988
  %v3991 = vunpack.c.l.s4 1983009808
  %v3992 = vunpack.c.0.s8 %v3991
  %v3993 = vlaneseq
  %v3994 = vshrl.u32 %v3993, 7
  %v3995 = vsub.s32 %v3992, %v3994
  %v3996 = vrot.slane %v3982, %v3995
  %v3997 = vcombine.high %v3989, %v3989
  %v3998 = vcombine.high %v3979, %v3979
  %v4000 = vunpack.c.l.s4 1983009808
  %v4001 = vunpack.c.0.s8 %v4000
  %v4002 = vlaneseq
  %v4003 = vshrl.u32 %v4002, 7
  %v4004 = vsub.s32 %v4001, %v4003
  %v4005 = vrot.slane %v3979, %v4004
  %v4007 = vunpack.c.l.s4 1983009808
  %v4008 = vunpack.c.0.s8 %v4007
  %v4009 = vlaneseq
  %v4010 = vshrl.u32 %v4009, 7
  %v4011 = vsub.s32 %v4008, %v4010
  %v4012 = vrot.slane %v3998, %v4011
  %v4013 = vcombine.high %v4005, %v4005
  %4014 = vrot.lane.b32.xlu0 %v3989, 127
  %v4015 = vpop.permute.xlu0 %4014
  %4016 = vrot.lane.b32.xlu0 %v3997, 127
  %v4017 = vpop.permute.xlu0 %4016
  %4018 = vrot.lane.b32.xlu0 %v3996, 127
  %v4019 = vpop.permute.xlu0 %4018
  %4020 = vrot.lane.b32.xlu0 %v4005, 127
  %v4021 = vpop.permute.xlu0 %4020
  %4022 = vrot.lane.b32.xlu0 %v4013, 127
  %v4023 = vpop.permute.xlu0 %4022
  %4024 = vrot.lane.b32.xlu0 %v4012, 127
  %v4025 = vpop.permute.xlu0 %4024
  %v4026 = vsel %vm1284, %v4015, %v4017
  %v4027 = vsel %vm1284, %v4017, %v4019
  %v4028 = vsel %vm1284, %v4021, %v4023
  %v4029 = vsel %vm1284, %v4023, %v4025
  %v4031 = vsel %vm343, %v3975, 0
  %v4034 = vsel %vm347, %v4026, 0
  %v4037 = vsel %vm347, %v4027, 0
  %v4040 = vsel %vm347, %v4028, 0
  %v4043 = vsel %vm347, %v4029, 0
  %4045 = vmatprep.subr.bf16.mxu0 %v4037
  %4046 = vmatpush1.bf16.msra.mxu0 %v4034
  %4047 = vmatprep.subr.bf16.mxu0 0
  %4048 = vmatpush1.bf16.msra.mxu0 0
  %4049 = vmatprep.subr.bf16.mxu0 0
  %4050 = vmatpush1.bf16.msra.mxu0 0
  %4051 = vmatprep.subr.bf16.mxu0 0
  %4052 = vmatpush1.bf16.msra.mxu0 0
  %4053 = vmatprep.subr.bf16.mxu0 0
  %4054 = vmatpush1.bf16.msra.mxu0 0
  %4055 = vmatprep.subr.bf16.mxu0 0
  %4056 = vmatpush1.bf16.msra.mxu0 0
  %4057 = vmatprep.subr.bf16.mxu0 0
  %4058 = vmatpush1.bf16.msra.mxu0 0
  %4059 = vmatprep.subr.bf16.mxu0 0
  %4060 = vmatpush1.bf16.msra.mxu0 0
  %4061 = vmatprep.subr.bf16.mxu0 0
  %4062 = vmatpush1.bf16.msra.mxu0 0
  %4063 = vmatprep.subr.bf16.mxu0 0
  %4064 = vmatpush1.bf16.msra.mxu0 0
  %4065 = vmatprep.subr.bf16.mxu0 0
  %4066 = vmatpush1.bf16.msra.mxu0 0
  %4067 = vmatprep.subr.bf16.mxu0 0
  %4068 = vmatpush1.bf16.msra.mxu0 0
  %4069 = vmatprep.subr.bf16.mxu0 0
  %4070 = vmatpush1.bf16.msra.mxu0 0
  %4071 = vmatprep.subr.bf16.mxu0 0
  %4072 = vmatpush1.bf16.msra.mxu0 0
  %4073 = vmatprep.subr.bf16.mxu0 0
  %4074 = vmatpush1.bf16.msra.mxu0 0
  %4075 = vmatprep.subr.bf16.mxu0 0
  %4076 = vmatpush1.bf16.msra.mxu0 0
  %4077 = vmatprep.mubr.bf16.mxu0 0
  %4078 = vmatmul.mubr.bf16.gmra.mrb[0].mxu0 %v4031
  %v4079 = vpop.f32.mrb[0].mxu0
  %v4080 = vadd.f32 0.0, %v4079
  %v4081 = vpop.f32.mrb[0].mxu0
  %v4082 = vadd.f32 0.0, %v4081
  %v4083 = vpop.f32.mrb[0].mxu0
  %v4084 = vpop.f32.mrb[0].mxu0
  %4085 = vdwg.mxu0
  %4086 = vmatprep.subr.bf16.mxu0 %v4043
  %4087 = vmatpush1.bf16.msra.mxu0 %v4040
  %4088 = vmatprep.subr.bf16.mxu0 0
  %4089 = vmatpush1.bf16.msra.mxu0 0
  %4090 = vmatprep.subr.bf16.mxu0 0
  %4091 = vmatpush1.bf16.msra.mxu0 0
  %4092 = vmatprep.subr.bf16.mxu0 0
  %4093 = vmatpush1.bf16.msra.mxu0 0
  %4094 = vmatprep.subr.bf16.mxu0 0
  %4095 = vmatpush1.bf16.msra.mxu0 0
  %4096 = vmatprep.subr.bf16.mxu0 0
  %4097 = vmatpush1.bf16.msra.mxu0 0
  %4098 = vmatprep.subr.bf16.mxu0 0
  %4099 = vmatpush1.bf16.msra.mxu0 0
  %4100 = vmatprep.subr.bf16.mxu0 0
  %4101 = vmatpush1.bf16.msra.mxu0 0
  %4102 = vmatprep.subr.bf16.mxu0 0
  %4103 = vmatpush1.bf16.msra.mxu0 0
  %4104 = vmatprep.subr.bf16.mxu0 0
  %4105 = vmatpush1.bf16.msra.mxu0 0
  %4106 = vmatprep.subr.bf16.mxu0 0
  %4107 = vmatpush1.bf16.msra.mxu0 0
  %4108 = vmatprep.subr.bf16.mxu0 0
  %4109 = vmatpush1.bf16.msra.mxu0 0
  %4110 = vmatprep.subr.bf16.mxu0 0
  %4111 = vmatpush1.bf16.msra.mxu0 0
  %4112 = vmatprep.subr.bf16.mxu0 0
  %4113 = vmatpush1.bf16.msra.mxu0 0
  %4114 = vmatprep.subr.bf16.mxu0 0
  %4115 = vmatpush1.bf16.msra.mxu0 0
  %4116 = vmatprep.subr.bf16.mxu0 0
  %4117 = vmatpush1.bf16.msra.mxu0 0
  %4118 = vmatprep.mubr.bf16.mxu0 0
  %4119 = vmatmul.mubr.bf16.gmra.mrb[0].mxu0 %v4031
  %v4120 = vpop.f32.mrb[0].mxu0
  %v4121 = vadd.f32 0.0, %v4120
  %v4122 = vpop.f32.mrb[0].mxu0
  %v4123 = vadd.f32 0.0, %v4122
  %v4124 = vpop.f32.mrb[0].mxu0
  %v4125 = vpop.f32.mrb[0].mxu0
  %4126 = vdwg.mxu0
  %v4127 = vadd.f32 %v3970, %v4080
  %v4128 = vadd.f32 %v3971, %v4082
  %v4129 = vadd.f32 %v3972, %v4121
  %v4130 = vadd.f32 %v3973, %v4123
  %s4131 = scalar_lea.vmem %s5, 24
  %v4132 = vld [vmem:[%s4131] sm:$0xf]
  %v4133 = vld [vmem:[#allocation2 + $0x2] sm:$0xff]
  %v4134 = vld [vmem:[#allocation2 + $0xa] sm:$0x3f]
  %v4135 = vmul.bf16 %v4133, %v2206
  %v4136 = vmul.bf16 %v4134, %v2208
  %v4139 = vcombine.high %v4135, %v4135
  %v4141 = vunpack.c.l.s4 1983009808
  %v4142 = vunpack.c.0.s8 %v4141
  %v4143 = vlaneseq
  %v4144 = vshrl.u32 %v4143, 7
  %v4145 = vsub.s32 %v4142, %v4144
  %v4146 = vrot.slane %v4135, %v4145
  %v4148 = vunpack.c.l.s4 1983009808
  %v4149 = vunpack.c.0.s8 %v4148
  %v4150 = vlaneseq
  %v4151 = vshrl.u32 %v4150, 7
  %v4152 = vsub.s32 %v4149, %v4151
  %v4153 = vrot.slane %v4139, %v4152
  %v4154 = vcombine.high %v4146, %v4146
  %v4155 = vcombine.high %v4136, %v4136
  %v4157 = vunpack.c.l.s4 1983009808
  %v4158 = vunpack.c.0.s8 %v4157
  %v4159 = vlaneseq
  %v4160 = vshrl.u32 %v4159, 7
  %v4161 = vsub.s32 %v4158, %v4160
  %v4162 = vrot.slane %v4136, %v4161
  %v4164 = vunpack.c.l.s4 1983009808
  %v4165 = vunpack.c.0.s8 %v4164
  %v4166 = vlaneseq
  %v4167 = vshrl.u32 %v4166, 7
  %v4168 = vsub.s32 %v4165, %v4167
  %v4169 = vrot.slane %v4155, %v4168
  %v4170 = vcombine.high %v4162, %v4162
  %4171 = vrot.lane.b32.xlu0 %v4146, 113
  %v4172 = vpop.permute.xlu0 %4171
  %4173 = vrot.lane.b32.xlu0 %v4154, 113
  %v4174 = vpop.permute.xlu0 %4173
  %4175 = vrot.lane.b32.xlu0 %v4153, 113
  %v4176 = vpop.permute.xlu0 %4175
  %4177 = vrot.lane.b32.xlu0 %v4162, 113
  %v4178 = vpop.permute.xlu0 %4177
  %4179 = vrot.lane.b32.xlu0 %v4170, 113
  %v4180 = vpop.permute.xlu0 %4179
  %4181 = vrot.lane.b32.xlu0 %v4169, 113
  %v4182 = vpop.permute.xlu0 %4181
  %v4183 = vsel %vm949, %v4172, %v4174
  %v4184 = vsel %vm949, %v4174, %v4176
  %v4185 = vsel %vm949, %v4178, %v4180
  %v4186 = vsel %vm949, %v4180, %v4182
  %v4188 = vsel %vm343, %v4132, 0
  %v4191 = vsel %vm347, %v4183, 0
  %v4194 = vsel %vm347, %v4184, 0
  %v4197 = vsel %vm347, %v4185, 0
  %v4200 = vsel %vm347, %v4186, 0
  %4202 = vmatprep.subr.bf16.mxu0 %v4194
  %4203 = vmatpush1.bf16.msra.mxu0 %v4191
  %4204 = vmatprep.subr.bf16.mxu0 0
  %4205 = vmatpush1.bf16.msra.mxu0 0
  %4206 = vmatprep.subr.bf16.mxu0 0
  %4207 = vmatpush1.bf16.msra.mxu0 0
  %4208 = vmatprep.subr.bf16.mxu0 0
  %4209 = vmatpush1.bf16.msra.mxu0 0
  %4210 = vmatprep.subr.bf16.mxu0 0
  %4211 = vmatpush1.bf16.msra.mxu0 0
  %4212 = vmatprep.subr.bf16.mxu0 0
  %4213 = vmatpush1.bf16.msra.mxu0 0
  %4214 = vmatprep.subr.bf16.mxu0 0
  %4215 = vmatpush1.bf16.msra.mxu0 0
  %4216 = vmatprep.subr.bf16.mxu0 0
  %4217 = vmatpush1.bf16.msra.mxu0 0
  %4218 = vmatprep.subr.bf16.mxu0 0
  %4219 = vmatpush1.bf16.msra.mxu0 0
  %4220 = vmatprep.subr.bf16.mxu0 0
  %4221 = vmatpush1.bf16.msra.mxu0 0
  %4222 = vmatprep.subr.bf16.mxu0 0
  %4223 = vmatpush1.bf16.msra.mxu0 0
  %4224 = vmatprep.subr.bf16.mxu0 0
  %4225 = vmatpush1.bf16.msra.mxu0 0
  %4226 = vmatprep.subr.bf16.mxu0 0
  %4227 = vmatpush1.bf16.msra.mxu0 0
  %4228 = vmatprep.subr.bf16.mxu0 0
  %4229 = vmatpush1.bf16.msra.mxu0 0
  %4230 = vmatprep.subr.bf16.mxu0 0
  %4231 = vmatpush1.bf16.msra.mxu0 0
  %4232 = vmatprep.subr.bf16.mxu0 0
  %4233 = vmatpush1.bf16.msra.mxu0 0
  %4234 = vmatprep.mubr.bf16.mxu0 0
  %4235 = vmatmul.mubr.bf16.gmra.mrb[0].mxu0 %v4188
  %v4236 = vpop.f32.mrb[0].mxu0
  %v4237 = vadd.f32 0.0, %v4236
  %v4238 = vpop.f32.mrb[0].mxu0
  %v4239 = vadd.f32 0.0, %v4238
  %v4240 = vpop.f32.mrb[0].mxu0
  %v4241 = vpop.f32.mrb[0].mxu0
  %4242 = vdwg.mxu0
  %4243 = vmatprep.subr.bf16.mxu0 %v4200
  %4244 = vmatpush1.bf16.msra.mxu0 %v4197
  %4245 = vmatprep.subr.bf16.mxu0 0
  %4246 = vmatpush1.bf16.msra.mxu0 0
  %4247 = vmatprep.subr.bf16.mxu0 0
  %4248 = vmatpush1.bf16.msra.mxu0 0
  %4249 = vmatprep.subr.bf16.mxu0 0
  %4250 = vmatpush1.bf16.msra.mxu0 0
  %4251 = vmatprep.subr.bf16.mxu0 0
  %4252 = vmatpush1.bf16.msra.mxu0 0
  %4253 = vmatprep.subr.bf16.mxu0 0
  %4254 = vmatpush1.bf16.msra.mxu0 0
  %4255 = vmatprep.subr.bf16.mxu0 0
  %4256 = vmatpush1.bf16.msra.mxu0 0
  %4257 = vmatprep.subr.bf16.mxu0 0
  %4258 = vmatpush1.bf16.msra.mxu0 0
  %4259 = vmatprep.subr.bf16.mxu0 0
  %4260 = vmatpush1.bf16.msra.mxu0 0
  %4261 = vmatprep.subr.bf16.mxu0 0
  %4262 = vmatpush1.bf16.msra.mxu0 0
  %4263 = vmatprep.subr.bf16.mxu0 0
  %4264 = vmatpush1.bf16.msra.mxu0 0
  %4265 = vmatprep.subr.bf16.mxu0 0
  %4266 = vmatpush1.bf16.msra.mxu0 0
  %4267 = vmatprep.subr.bf16.mxu0 0
  %4268 = vmatpush1.bf16.msra.mxu0 0
  %4269 = vmatprep.subr.bf16.mxu0 0
  %4270 = vmatpush1.bf16.msra.mxu0 0
  %4271 = vmatprep.subr.bf16.mxu0 0
  %4272 = vmatpush1.bf16.msra.mxu0 0
  %4273 = vmatprep.subr.bf16.mxu0 0
  %4274 = vmatpush1.bf16.msra.mxu0 0
  %4275 = vmatprep.mubr.bf16.mxu0 0
  %4276 = vmatmul.mubr.bf16.gmra.mrb[0].mxu0 %v4188
  %v4277 = vpop.f32.mrb[0].mxu0
  %v4278 = vadd.f32 0.0, %v4277
  %v4279 = vpop.f32.mrb[0].mxu0
  %v4280 = vadd.f32 0.0, %v4279
  %v4281 = vpop.f32.mrb[0].mxu0
  %v4282 = vpop.f32.mrb[0].mxu0
  %4283 = vdwg.mxu0
  %v4284 = vadd.f32 %v4127, %v4237
  %v4285 = vadd.f32 %v4128, %v4239
  %v4286 = vadd.f32 %v4129, %v4278
  %v4287 = vadd.f32 %v4130, %v4280
  %s4288 = scalar_lea.vmem %s5, 28
  %v4289 = vld [vmem:[%s4288] sm:$0xf]
  %v4290 = vld [vmem:[#allocation2 + $0x2] sm:$0xff]
  %v4291 = vld [vmem:[#allocation2 + $0xa] sm:$0x3f]
  %v4294 = vcombine.high %v4290, %v4290
  %v4296 = vunpack.c.l.s4 1983009808
  %v4297 = vunpack.c.0.s8 %v4296
  %v4298 = vlaneseq
  %v4299 = vshrl.u32 %v4298, 7
  %v4300 = vsub.s32 %v4297, %v4299
  %v4301 = vrot.slane %v4290, %v4300
  %v4303 = vunpack.c.l.s4 1983009808
  %v4304 = vunpack.c.0.s8 %v4303
  %v4305 = vlaneseq
  %v4306 = vshrl.u32 %v4305, 7
  %v4307 = vsub.s32 %v4304, %v4306
  %v4308 = vrot.slane %v4294, %v4307
  %v4309 = vcombine.high %v4301, %v4301
  %v4310 = vcombine.high %v4291, %v4291
  %v4312 = vunpack.c.l.s4 1983009808
  %v4313 = vunpack.c.0.s8 %v4312
  %v4314 = vlaneseq
  %v4315 = vshrl.u32 %v4314, 7
  %v4316 = vsub.s32 %v4313, %v4315
  %v4317 = vrot.slane %v4291, %v4316
  %v4319 = vunpack.c.l.s4 1983009808
  %v4320 = vunpack.c.0.s8 %v4319
  %v4321 = vlaneseq
  %v4322 = vshrl.u32 %v4321, 7
  %v4323 = vsub.s32 %v4320, %v4322
  %v4324 = vrot.slane %v4310, %v4323
  %v4325 = vcombine.high %v4317, %v4317
  %4326 = vrot.lane.b32.xlu0 %v4301, 112
  %v4327 = vpop.permute.xlu0 %4326
  %4328 = vrot.lane.b32.xlu0 %v4309, 112
  %v4329 = vpop.permute.xlu0 %4328
  %4330 = vrot.lane.b32.xlu0 %v4308, 112
  %v4331 = vpop.permute.xlu0 %4330
  %4332 = vrot.lane.b32.xlu0 %v4317, 112
  %v4333 = vpop.permute.xlu0 %4332
  %4334 = vrot.lane.b32.xlu0 %v4325, 112
  %v4335 = vpop.permute.xlu0 %4334
  %4336 = vrot.lane.b32.xlu0 %v4324, 112
  %v4337 = vpop.permute.xlu0 %4336
  %v4338 = vsel %vm2579, %v4327, %v4329
  %v4339 = vsel %vm2579, %v4329, %v4331
  %v4340 = vsel %vm2579, %v4333, %v4335
  %v4341 = vsel %vm2579, %v4335, %v4337
  %v4343 = vsel %vm343, %v4289, 0
  %v4346 = vsel %vm347, %v4338, 0
  %v4349 = vsel %vm347, %v4339, 0
  %v4352 = vsel %vm347, %v4340, 0
  %v4355 = vsel %vm347, %v4341, 0
  %4357 = vmatprep.subr.bf16.mxu0 %v4349
  %4358 = vmatpush1.bf16.msra.mxu0 %v4346
  %4359 = vmatprep.subr.bf16.mxu0 0
  %4360 = vmatpush1.bf16.msra.mxu0 0
  %4361 = vmatprep.subr.bf16.mxu0 0
  %4362 = vmatpush1.bf16.msra.mxu0 0
  %4363 = vmatprep.subr.bf16.mxu0 0
  %4364 = vmatpush1.bf16.msra.mxu0 0
  %4365 = vmatprep.subr.bf16.mxu0 0
  %4366 = vmatpush1.bf16.msra.mxu0 0
  %4367 = vmatprep.subr.bf16.mxu0 0
  %4368 = vmatpush1.bf16.msra.mxu0 0
  %4369 = vmatprep.subr.bf16.mxu0 0
  %4370 = vmatpush1.bf16.msra.mxu0 0
  %4371 = vmatprep.subr.bf16.mxu0 0
  %4372 = vmatpush1.bf16.msra.mxu0 0
  %4373 = vmatprep.subr.bf16.mxu0 0
  %4374 = vmatpush1.bf16.msra.mxu0 0
  %4375 = vmatprep.subr.bf16.mxu0 0
  %4376 = vmatpush1.bf16.msra.mxu0 0
  %4377 = vmatprep.subr.bf16.mxu0 0
  %4378 = vmatpush1.bf16.msra.mxu0 0
  %4379 = vmatprep.subr.bf16.mxu0 0
  %4380 = vmatpush1.bf16.msra.mxu0 0
  %4381 = vmatprep.subr.bf16.mxu0 0
  %4382 = vmatpush1.bf16.msra.mxu0 0
  %4383 = vmatprep.subr.bf16.mxu0 0
  %4384 = vmatpush1.bf16.msra.mxu0 0
  %4385 = vmatprep.subr.bf16.mxu0 0
  %4386 = vmatpush1.bf16.msra.mxu0 0
  %4387 = vmatprep.subr.bf16.mxu0 0
  %4388 = vmatpush1.bf16.msra.mxu0 0
  %4389 = vmatprep.mubr.bf16.mxu0 0
  %4390 = vmatmul.mubr.bf16.gmra.mrb[0].mxu0 %v4343
  %v4391 = vpop.f32.mrb[0].mxu0
  %v4392 = vadd.f32 0.0, %v4391
  %v4393 = vpop.f32.mrb[0].mxu0
  %v4394 = vadd.f32 0.0, %v4393
  %v4395 = vpop.f32.mrb[0].mxu0
  %v4396 = vpop.f32.mrb[0].mxu0
  %4397 = vdwg.mxu0
  %4398 = vmatprep.subr.bf16.mxu0 %v4355
  %4399 = vmatpush1.bf16.msra.mxu0 %v4352
  %4400 = vmatprep.subr.bf16.mxu0 0
  %4401 = vmatpush1.bf16.msra.mxu0 0
  %4402 = vmatprep.subr.bf16.mxu0 0
  %4403 = vmatpush1.bf16.msra.mxu0 0
  %4404 = vmatprep.subr.bf16.mxu0 0
  %4405 = vmatpush1.bf16.msra.mxu0 0
  %4406 = vmatprep.subr.bf16.mxu0 0
  %4407 = vmatpush1.bf16.msra.mxu0 0
  %4408 = vmatprep.subr.bf16.mxu0 0
  %4409 = vmatpush1.bf16.msra.mxu0 0
  %4410 = vmatprep.subr.bf16.mxu0 0
  %4411 = vmatpush1.bf16.msra.mxu0 0
  %4412 = vmatprep.subr.bf16.mxu0 0
  %4413 = vmatpush1.bf16.msra.mxu0 0
  %4414 = vmatprep.subr.bf16.mxu0 0
  %4415 = vmatpush1.bf16.msra.mxu0 0
  %4416 = vmatprep.subr.bf16.mxu0 0
  %4417 = vmatpush1.bf16.msra.mxu0 0
  %4418 = vmatprep.subr.bf16.mxu0 0
  %4419 = vmatpush1.bf16.msra.mxu0 0
  %4420 = vmatprep.subr.bf16.mxu0 0
  %4421 = vmatpush1.bf16.msra.mxu0 0
  %4422 = vmatprep.subr.bf16.mxu0 0
  %4423 = vmatpush1.bf16.msra.mxu0 0
  %4424 = vmatprep.subr.bf16.mxu0 0
  %4425 = vmatpush1.bf16.msra.mxu0 0
  %4426 = vmatprep.subr.bf16.mxu0 0
  %4427 = vmatpush1.bf16.msra.mxu0 0
  %4428 = vmatprep.subr.bf16.mxu0 0
  %4429 = vmatpush1.bf16.msra.mxu0 0
  %4430 = vmatprep.mubr.bf16.mxu0 0
  %4431 = vmatmul.mubr.bf16.gmra.mrb[0].mxu0 %v4343
  %v4432 = vpop.f32.mrb[0].mxu0
  %v4433 = vadd.f32 0.0, %v4432
  %v4434 = vpop.f32.mrb[0].mxu0
  %v4435 = vadd.f32 0.0, %v4434
  %v4436 = vpop.f32.mrb[0].mxu0
  %v4437 = vpop.f32.mrb[0].mxu0
  %4438 = vdwg.mxu0
  %v4439 = vadd.f32 %v4284, %v4392
  %v4440 = vadd.f32 %v4285, %v4394
  %v4441 = vadd.f32 %v4286, %v4433
  %v4442 = vadd.f32 %v4287, %v4435
  %s4443 = scalar_lea.vmem %s5, 32
  %v4444 = vld [vmem:[%s4443] sm:$0xf]
  %v4445 = vld [vmem:[#allocation2 + $0x2] sm:$0xff]
  %v4446 = vld [vmem:[#allocation2 + $0xa] sm:$0x3f]
  %v4447 = vmul.bf16 %v4445, %v2858
  %v4448 = vmul.bf16 %v4446, %v2860
  %v4451 = vcombine.high %v4447, %v4447
  %v4453 = vunpack.c.l.s4 1983009808
  %v4454 = vunpack.c.0.s8 %v4453
  %v4455 = vlaneseq
  %v4456 = vshrl.u32 %v4455, 7
  %v4457 = vsub.s32 %v4454, %v4456
  %v4458 = vrot.slane %v4447, %v4457
  %v4460 = vunpack.c.l.s4 1983009808
  %v4461 = vunpack.c.0.s8 %v4460
  %v4462 = vlaneseq
  %v4463 = vshrl.u32 %v4462, 7
  %v4464 = vsub.s32 %v4461, %v4463
  %v4465 = vrot.slane %v4451, %v4464
  %v4466 = vcombine.high %v4458, %v4458
  %v4467 = vcombine.high %v4448, %v4448
  %v4469 = vunpack.c.l.s4 1983009808
  %v4470 = vunpack.c.0.s8 %v4469
  %v4471 = vlaneseq
  %v4472 = vshrl.u32 %v4471, 7
  %v4473 = vsub.s32 %v4470, %v4472
  %v4474 = vrot.slane %v4448, %v4473
  %v4476 = vunpack.c.l.s4 1983009808
  %v4477 = vunpack.c.0.s8 %v4476
  %v4478 = vlaneseq
  %v4479 = vshrl.u32 %v4478, 7
  %v4480 = vsub.s32 %v4477, %v4479
  %v4481 = vrot.slane %v4467, %v4480
  %v4482 = vcombine.high %v4474, %v4474
  %4483 = vrot.lane.b32.xlu0 %v4458, 111
  %v4484 = vpop.permute.xlu0 %4483
  %4485 = vrot.lane.b32.xlu0 %v4466, 111
  %v4486 = vpop.permute.xlu0 %4485
  %4487 = vrot.lane.b32.xlu0 %v4465, 111
  %v4488 = vpop.permute.xlu0 %4487
  %4489 = vrot.lane.b32.xlu0 %v4474, 111
  %v4490 = vpop.permute.xlu0 %4489
  %4491 = vrot.lane.b32.xlu0 %v4482, 111
  %v4492 = vpop.permute.xlu0 %4491
  %4493 = vrot.lane.b32.xlu0 %v4481, 111
  %v4494 = vpop.permute.xlu0 %4493
  %v4495 = vsel %vm269, %v4484, %v4486
  %v4496 = vsel %vm269, %v4486, %v4488
  %v4497 = vsel %vm269, %v4490, %v4492
  %v4498 = vsel %vm269, %v4492, %v4494
  %v4500 = vsel %vm343, %v4444, 0
  %v4503 = vsel %vm347, %v4495, 0
  %v4506 = vsel %vm347, %v4496, 0
  %v4509 = vsel %vm347, %v4497, 0
  %v4512 = vsel %vm347, %v4498, 0
  %4514 = vmatprep.subr.bf16.mxu0 %v4506
  %4515 = vmatpush1.bf16.msra.mxu0 %v4503
  %4516 = vmatprep.subr.bf16.mxu0 0
  %4517 = vmatpush1.bf16.msra.mxu0 0
  %4518 = vmatprep.subr.bf16.mxu0 0
  %4519 = vmatpush1.bf16.msra.mxu0 0
  %4520 = vmatprep.subr.bf16.mxu0 0
  %4521 = vmatpush1.bf16.msra.mxu0 0
  %4522 = vmatprep.subr.bf16.mxu0 0
  %4523 = vmatpush1.bf16.msra.mxu0 0
  %4524 = vmatprep.subr.bf16.mxu0 0
  %4525 = vmatpush1.bf16.msra.mxu0 0
  %4526 = vmatprep.subr.bf16.mxu0 0
  %4527 = vmatpush1.bf16.msra.mxu0 0
  %4528 = vmatprep.subr.bf16.mxu0 0
  %4529 = vmatpush1.bf16.msra.mxu0 0
  %4530 = vmatprep.subr.bf16.mxu0 0
  %4531 = vmatpush1.bf16.msra.mxu0 0
  %4532 = vmatprep.subr.bf16.mxu0 0
  %4533 = vmatpush1.bf16.msra.mxu0 0
  %4534 = vmatprep.subr.bf16.mxu0 0
  %4535 = vmatpush1.bf16.msra.mxu0 0
  %4536 = vmatprep.subr.bf16.mxu0 0
  %4537 = vmatpush1.bf16.msra.mxu0 0
  %4538 = vmatprep.subr.bf16.mxu0 0
  %4539 = vmatpush1.bf16.msra.mxu0 0
  %4540 = vmatprep.subr.bf16.mxu0 0
  %4541 = vmatpush1.bf16.msra.mxu0 0
  %4542 = vmatprep.subr.bf16.mxu0 0
  %4543 = vmatpush1.bf16.msra.mxu0 0
  %4544 = vmatprep.subr.bf16.mxu0 0
  %4545 = vmatpush1.bf16.msra.mxu0 0
  %4546 = vmatprep.mubr.bf16.mxu0 0
  %4547 = vmatmul.mubr.bf16.gmra.mrb[0].mxu0 %v4500
  %v4548 = vpop.f32.mrb[0].mxu0
  %v4549 = vadd.f32 0.0, %v4548
  %v4550 = vpop.f32.mrb[0].mxu0
  %v4551 = vadd.f32 0.0, %v4550
  %v4552 = vpop.f32.mrb[0].mxu0
  %v4553 = vpop.f32.mrb[0].mxu0
  %4554 = vdwg.mxu0
  %4555 = vmatprep.subr.bf16.mxu0 %v4512
  %4556 = vmatpush1.bf16.msra.mxu0 %v4509
  %4557 = vmatprep.subr.bf16.mxu0 0
  %4558 = vmatpush1.bf16.msra.mxu0 0
  %4559 = vmatprep.subr.bf16.mxu0 0
  %4560 = vmatpush1.bf16.msra.mxu0 0
  %4561 = vmatprep.subr.bf16.mxu0 0
  %4562 = vmatpush1.bf16.msra.mxu0 0
  %4563 = vmatprep.subr.bf16.mxu0 0
  %4564 = vmatpush1.bf16.msra.mxu0 0
  %4565 = vmatprep.subr.bf16.mxu0 0
  %4566 = vmatpush1.bf16.msra.mxu0 0
  %4567 = vmatprep.subr.bf16.mxu0 0
  %4568 = vmatpush1.bf16.msra.mxu0 0
  %4569 = vmatprep.subr.bf16.mxu0 0
  %4570 = vmatpush1.bf16.msra.mxu0 0
  %4571 = vmatprep.subr.bf16.mxu0 0
  %4572 = vmatpush1.bf16.msra.mxu0 0
  %4573 = vmatprep.subr.bf16.mxu0 0
  %4574 = vmatpush1.bf16.msra.mxu0 0
  %4575 = vmatprep.subr.bf16.mxu0 0
  %4576 = vmatpush1.bf16.msra.mxu0 0
  %4577 = vmatprep.subr.bf16.mxu0 0
  %4578 = vmatpush1.bf16.msra.mxu0 0
  %4579 = vmatprep.subr.bf16.mxu0 0
  %4580 = vmatpush1.bf16.msra.mxu0 0
  %4581 = vmatprep.subr.bf16.mxu0 0
  %4582 = vmatpush1.bf16.msra.mxu0 0
  %4583 = vmatprep.subr.bf16.mxu0 0
  %4584 = vmatpush1.bf16.msra.mxu0 0
  %4585 = vmatprep.subr.bf16.mxu0 0
  %4586 = vmatpush1.bf16.msra.mxu0 0
  %4587 = vmatprep.mubr.bf16.mxu0 0
  %4588 = vmatmul.mubr.bf16.gmra.mrb[0].mxu0 %v4500
  %v4589 = vpop.f32.mrb[0].mxu0
  %v4590 = vadd.f32 0.0, %v4589
  %v4591 = vpop.f32.mrb[0].mxu0
  %v4592 = vadd.f32 0.0, %v4591
  %v4593 = vpop.f32.mrb[0].mxu0
  %v4594 = vpop.f32.mrb[0].mxu0
  %4595 = vdwg.mxu0
  %v4596 = vadd.f32 %v4439, %v4549
  %v4597 = vadd.f32 %v4440, %v4551
  %v4598 = vadd.f32 %v4441, %v4590
  %v4599 = vadd.f32 %v4442, %v4592
  %v4600 = vld [vmem:[%s6] sm:$0xff]
  %4602 = vset.pattern.permute.xlu0 0
  %4603 = vperm.xlu0 %4602, %v4600
  %v4604 = vpop.permute.xlu0 %4603
  %v4606 = vmul.f32 %v4596, %v4604
  %v4607 = vmul.f32 %v4597, %v4604
  %v4608 = vmul.f32 %v4598, %v4604
  %v4609 = vmul.f32 %v4599, %v4604
  %v4610 = vld [vmem:[%s7] sm:$0xff]
  %4612 = vset.pattern.permute.xlu0 0
  %4613 = vperm.xlu0 %4612, %v4610
  %v4614 = vpop.permute.xlu0 %4613
  %v4616 = vadd.f32 %v4606, %v4614
  %v4617 = vadd.f32 %v4607, %v4614
  %v4618 = vadd.f32 %v4608, %v4614
  %v4619 = vadd.f32 %v4609, %v4614
  %v4620 = vmax.f32 %v4616, 0.0
  %v4621 = vmax.f32 %v4617, 0.0
  %v4622 = vmax.f32 %v4618, 0.0
  %v4623 = vmax.f32 %v4619, 0.0
  %v4624 = vpack.c.bf16 %v4620, %v4620
  %v4625 = vpack.c.bf16 %v4621, %v4621
  %v4628 = vunpack.c.l.b16 %v4624
  %v4629 = vunpack.c.l.b16 %v4625
  %v4630 = vpack.c.b16 %v4629, %v4628
  %4632 = vst [vmem:[%s8] sm:$0xff] %v4630
  %v4633 = vpack.c.bf16 %v4622, %v4622
  %v4634 = vpack.c.bf16 %v4623, %v4623
  %v4637 = vunpack.c.l.b16 %v4633
  %v4638 = vunpack.c.l.b16 %v4634
  %v4639 = vpack.c.b16 %v4638, %v4637
  %s4641 = scalar_lea.vmem %s8, 8
  %4642 = vst [vmem:[%s4641] sm:$0xff] %v4639
  // Predicated region
  $region34: #{up_forward.1} parent=0 // pred_check
    _
  $region35: #{up_forward.1} parent=0 // pred_check_branch
    %4644 = sbr.rel (0) target = $region37
  $region36: #{up_forward.1} parent=0 // pred_region
    _
  $region37: #{up_forward.1} parent=0 // pred_fallthru
    _
  // Predicated region
  $region38: #{up_forward.1} parent=0 // pred_check
    _
  $region39: #{up_forward.1} parent=0 // pred_check_branch
    %4646 = sbr.rel (0) target = $region41
  $region40: #{up_forward.1} parent=0 // pred_region
    _
  $region41: #{up_forward.1} parent=0 // pred_fallthru
    _

</llo_original>
